<compile_context>
chip_gen: v7x
topology: tpu7x:2x2x1
jax: 0.10.0
libtpu: 0.0.40
codegen_flags: <defaults>
</compile_context>

<pallas_src>
import math
import jax
import jax.numpy as jnp
from jax.experimental import pallas as pl
from jax.experimental.pallas import tpu as pltpu

D_MODEL = 32
N_HEADS = 8
D_K = D_MODEL // N_HEADS
D_FF = 2048
EPS = 1e-6  # LayerNorm eps (added to std, per the custom PyTorch LayerNorm)


def _layer_norm(x, gamma, beta):
    # Matches the reference module's custom LayerNorm:
    #   torch.std is unbiased (divide by N-1), and eps is added to std (not variance).
    d = x.shape[-1]
    mean = jnp.mean(x, axis=-1, keepdims=True)
    var = jnp.sum((x - mean) ** 2, axis=-1, keepdims=True) * (1.0 / (d - 1))
    std = jnp.sqrt(var)
    inv = pl.reciprocal(std + EPS, approx=True)  # EUP slot, ~free
    return gamma * (x - mean) * inv + beta


def encoder_layer_kernel(x_ref,
                         g1_ref, be1_ref,
                         wqkv_ref, bqkv_ref,
                         wo_ref,
                         g2_ref, be2_ref,
                         w1_ref, b1_ref, w2_ref, b2_ref,
                         o_ref):
    x = x_ref[0]          # (S, D) — one batch element per grid step
    S = x.shape[0]

    # ---- sublayer 1: x + MHA(LN(x)) ----
    y = _layer_norm(x, g1_ref[...], be1_ref[...])

    # Fused Q/K/V projection: one (S,32) @ (32,96) matmul + one bias add.
    qkv = jnp.dot(y, wqkv_ref[...], preferred_element_type=jnp.float32) + bqkv_ref[...]

    def to_heads(t):      # (S, D) -> (H, S, d_k), same as .view(S, H, d_k).transpose(0, 1)
        return jnp.transpose(t.reshape(S, N_HEADS, D_K), (1, 0, 2))

    q = to_heads(qkv[:, 0 * D_MODEL:1 * D_MODEL])
    k = to_heads(qkv[:, 1 * D_MODEL:2 * D_MODEL])
    v = to_heads(qkv[:, 2 * D_MODEL:3 * D_MODEL])

    scale = 1.0 / math.sqrt(D_K)
    # Batched-head attention: heads stay on a leading batch axis (no per-head lane slices).
    s = jnp.einsum('hqd,hkd->hqk', q, k, preferred_element_type=jnp.float32) * scale  # (H,S,S)
    s = s - jnp.max(s, axis=-1, keepdims=True)
    p = jnp.exp(s)
    p = p * pl.reciprocal(jnp.sum(p, axis=-1, keepdims=True), approx=True)
    ctx = jnp.einsum('hqk,hkd->hqd', p, v, preferred_element_type=jnp.float32)        # (H,S,d_k)

    attn = jnp.transpose(ctx, (1, 0, 2)).reshape(S, D_MODEL)                          # (S, D)
    # final_linear in the reference has bias=False.
    attn = jnp.dot(attn, wo_ref[...], preferred_element_type=jnp.float32)
    x1 = x + attn  # dropout = identity at inference

    # ---- sublayer 2: x1 + FFN(LN(x1)) ----
    y2 = _layer_norm(x1, g2_ref[...], be2_ref[...])
    h1 = jnp.dot(y2.astype(w1_ref.dtype), w1_ref[...],
                 preferred_element_type=jnp.float32) + b1_ref[...]
    h1 = jnp.maximum(h1, 0.0)
    ff = jnp.dot(h1.astype(w2_ref.dtype), w2_ref[...],
                 preferred_element_type=jnp.float32) + b2_ref[...]

    o_ref[0] = (x1 + ff).astype(o_ref.dtype)


def encoder_layer(x, params, *, ffn_dtype=jnp.bfloat16):
    B, S, D = x.shape
    assert D == D_MODEL

    # Wrapper-side fusion / casts (layout plumbing, not compute):
    wqkv = jnp.concatenate([params["wq"], params["wk"], params["wv"]], axis=1)  # (32, 96)
    bqkv = jnp.concatenate([params["bq"], params["bk"], params["bv"]], axis=1)  # (1, 96)
    w1 = params["w1"].astype(ffn_dtype)   # bf16 weights, f32 accumulation in-kernel
    w2 = params["w2"].astype(ffn_dtype)

    param_list = [
        params["gamma1"], params["beta1"],
        wqkv, bqkv,
        params["wo"],
        params["gamma2"], params["beta2"],
        w1, params["b1"], w2, params["b2"],
    ]

    def _const_spec(p):
        nd = p.ndim
        # Constant block index across the grid -> fetched once, not re-DMA'd per step.
        return pl.BlockSpec(p.shape, lambda i, _nd=nd: (0,) * _nd)

    in_specs = [pl.BlockSpec((1, S, D), lambda i: (i, 0, 0))]
    in_specs += [_const_spec(p) for p in param_list]

    return pl.pallas_call(
        encoder_layer_kernel,
        out_shape=jax.ShapeDtypeStruct((B, S, D), x.dtype),
        grid=(B,),
        in_specs=in_specs,
        out_specs=pl.BlockSpec((1, S, D), lambda i: (i, 0, 0)),
        compiler_params=pltpu.CompilerParams(
            dimension_semantics=("parallel",)),  # B=2 feeds both v7x TensorCores
    )(x, *param_list)


def init_params(key):
    ks = jax.random.split(key, 8)
    p = {
        # LayerNorm 1 / 2 (torch init: gamma=1, beta=0)
        "gamma1": jnp.ones((1, D_MODEL), jnp.float32),
        "beta1": jnp.zeros((1, D_MODEL), jnp.float32),
        "gamma2": jnp.ones((1, D_MODEL), jnp.float32),
        "beta2": jnp.zeros((1, D_MODEL), jnp.float32),
        # MHA projection weights, stored pre-transposed as (in, out)
        "wq": 0.05 * jax.random.normal(ks[0], (D_MODEL, D_MODEL), jnp.float32),
        "bq": 0.01 * jax.random.normal(ks[1], (1, D_MODEL), jnp.float32),
        "wk": 0.05 * jax.random.normal(ks[2], (D_MODEL, D_MODEL), jnp.float32),
        "bk": 0.01 * jax.random.normal(ks[3], (1, D_MODEL), jnp.float32),
        "wv": 0.05 * jax.random.normal(ks[4], (D_MODEL, D_MODEL), jnp.float32),
        "bv": 0.01 * jax.random.normal(ks[5], (1, D_MODEL), jnp.float32),
        "wo": 0.05 * jax.random.normal(ks[6], (D_MODEL, D_MODEL), jnp.float32),
        # FeedForward: Linear(32 -> 2048), Linear(2048 -> 32), pre-transposed
        "w1": 0.05 * jax.random.normal(ks[7], (D_MODEL, D_FF), jnp.float32),
        "b1": jnp.zeros((1, D_FF), jnp.float32),
        "w2": 0.05 * jax.random.normal(jax.random.fold_in(key, 99),
                                       (D_FF, D_MODEL), jnp.float32),
        "b2": jnp.zeros((1, D_MODEL), jnp.float32),
    }
    return p


if __name__ == "__main__":
    key = jax.random.PRNGKey(0)
    kx, kp = jax.random.split(key)

    B, S = 2, 8
    x = jax.random.normal(kx, (B, S, D_MODEL), jnp.float32)
    params = init_params(kp)

    # NOTE: `mask` is accepted by the PyTorch module but never used inside
    # Attention.forward, so it is intentionally omitted here; dropout is identity (inference).
    out = encoder_layer(x, params)
    jax.block_until_ready(out)
    assert out.shape == (B, S, D_MODEL)
    print("KERNEL_OK")
</pallas_src>

<mosaic_0001>
module attributes {stable_mosaic.version = 11 : i64} {
  func.func @encoder_layer_kernel(%arg0: i32, %arg1: memref<1x8x32xf32, #tpu.memory_space<vmem>>, %arg2: memref<1x32xf32, #tpu.memory_space<vmem>>, %arg3: memref<1x32xf32, #tpu.memory_space<vmem>>, %arg4: memref<32x96xf32, #tpu.memory_space<vmem>>, %arg5: memref<1x96xf32, #tpu.memory_space<vmem>>, %arg6: memref<32x32xf32, #tpu.memory_space<vmem>>, %arg7: memref<1x32xf32, #tpu.memory_space<vmem>>, %arg8: memref<1x32xf32, #tpu.memory_space<vmem>>, %arg9: memref<32x2048xbf16, #tpu.memory_space<vmem>>, %arg10: memref<1x2048xf32, #tpu.memory_space<vmem>>, %arg11: memref<2048x32xbf16, #tpu.memory_space<vmem>>, %arg12: memref<1x32xf32, #tpu.memory_space<vmem>>, %arg13: memref<1x8x32xf32, #tpu.memory_space<vmem>>) attributes {dimension_semantics = [#tpu.dimension_semantics<parallel>], iteration_bounds = array<i64: 2>, scalar_prefetch = 0 : i64, scratch_operands = 0 : i64, tpu.core_type = #tpu.core_type<tc>, window_params = [{transform_indices = @transform_0, window_bounds = array<i64: 1, 8, 32>}, {pipeline_mode = #tpu.pipeline_mode<synchronous>, transform_indices = @transform_1, window_bounds = array<i64: 1, 32>}, {pipeline_mode = #tpu.pipeline_mode<synchronous>, transform_indices = @transform_2, window_bounds = array<i64: 1, 32>}, {pipeline_mode = #tpu.pipeline_mode<synchronous>, transform_indices = @transform_3, window_bounds = array<i64: 32, 96>}, {pipeline_mode = #tpu.pipeline_mode<synchronous>, transform_indices = @transform_4, window_bounds = array<i64: 1, 96>}, {pipeline_mode = #tpu.pipeline_mode<synchronous>, transform_indices = @transform_5, window_bounds = array<i64: 32, 32>}, {pipeline_mode = #tpu.pipeline_mode<synchronous>, transform_indices = @transform_6, window_bounds = array<i64: 1, 32>}, {pipeline_mode = #tpu.pipeline_mode<synchronous>, transform_indices = @transform_7, window_bounds = array<i64: 1, 32>}, {pipeline_mode = #tpu.pipeline_mode<synchronous>, transform_indices = @transform_8, window_bounds = array<i64: 32, 2048>}, {pipeline_mode = #tpu.pipeline_mode<synchronous>, transform_indices = @transform_9, window_bounds = array<i64: 1, 2048>}, {pipeline_mode = #tpu.pipeline_mode<synchronous>, transform_indices = @transform_10, window_bounds = array<i64: 2048, 32>}, {pipeline_mode = #tpu.pipeline_mode<synchronous>, transform_indices = @transform_11, window_bounds = array<i64: 1, 32>}, {transform_indices = @transform_12, window_bounds = array<i64: 1, 8, 32>}]} {
    %c0 = arith.constant 0 : index
    %c0_0 = arith.constant 0 : index
    %c0_1 = arith.constant 0 : index
    %0 = vector.load %arg1[%c0, %c0_0, %c0_1] : memref<1x8x32xf32, #tpu.memory_space<vmem>>, vector<1x8x32xf32>
    %1 = vector.shape_cast %0 : vector<1x8x32xf32> to vector<8x32xf32>
    %c0_2 = arith.constant 0 : index
    %c0_3 = arith.constant 0 : index
    %2 = vector.load %arg2[%c0_2, %c0_3] : memref<1x32xf32, #tpu.memory_space<vmem>>, vector<1x32xf32>
    %c0_4 = arith.constant 0 : index
    %c0_5 = arith.constant 0 : index
    %3 = vector.load %arg3[%c0_4, %c0_5] : memref<1x32xf32, #tpu.memory_space<vmem>>, vector<1x32xf32>
    %cst = arith.constant dense<0.000000e+00> : vector<8xf32>
    %4 = vector.multi_reduction <add>, %1, %cst [1] : vector<8x32xf32> to vector<8xf32>
    %5 = vector.shape_cast %4 : vector<8xf32> to vector<8x1xf32>
    %cst_6 = arith.constant 3.200000e+01 : f32
    %6 = vector.broadcast %cst_6 : f32 to vector<8x1xf32>
    %7 = arith.divf %5, %6 : vector<8x1xf32>
    %8 = vector.broadcast %7 : vector<8x1xf32> to vector<8x32xf32>
    %9 = arith.subf %1, %8 : vector<8x32xf32>
    %10 = arith.mulf %9, %9 : vector<8x32xf32>
    %cst_7 = arith.constant dense<0.000000e+00> : vector<8xf32>
    %11 = vector.multi_reduction <add>, %10, %cst_7 [1] : vector<8x32xf32> to vector<8xf32>
    %12 = vector.shape_cast %11 : vector<8xf32> to vector<8x1xf32>
    %cst_8 = arith.constant 0.0322580636 : f32
    %13 = vector.broadcast %cst_8 : f32 to vector<8x1xf32>
    %14 = arith.mulf %12, %13 : vector<8x1xf32>
    %15 = math.sqrt %14 : vector<8x1xf32>
    %cst_9 = arith.constant 9.99999997E-7 : f32
    %16 = vector.broadcast %cst_9 : f32 to vector<8x1xf32>
    %17 = arith.addf %15, %16 : vector<8x1xf32>
    %18 = tpu.reciprocal %17 {approx = true} : vector<8x1xf32> -> vector<8x1xf32>
    %19 = vector.broadcast %7 : vector<8x1xf32> to vector<8x32xf32>
    %20 = arith.subf %1, %19 : vector<8x32xf32>
    %21 = vector.broadcast %2 : vector<1x32xf32> to vector<8x32xf32>
    %22 = arith.mulf %21, %20 : vector<8x32xf32>
    %23 = vector.broadcast %18 : vector<8x1xf32> to vector<8x32xf32>
    %24 = arith.mulf %22, %23 : vector<8x32xf32>
    %25 = vector.broadcast %3 : vector<1x32xf32> to vector<8x32xf32>
    %26 = arith.addf %24, %25 : vector<8x32xf32>
    %c0_10 = arith.constant 0 : index
    %c0_11 = arith.constant 0 : index
    %27 = vector.load %arg4[%c0_10, %c0_11] : memref<32x96xf32, #tpu.memory_space<vmem>>, vector<32x96xf32>
    %cst_12 = arith.constant dense<0.000000e+00> : vector<8x96xf32>
    %28 = tpu.matmul %26, %27, %cst_12 {dimension_numbers = #tpu.dot_dimension_numbers<[1], [0], [0], [1], [0, 0, 1, 1], [], []>} : vector<8x32xf32>, vector<32x96xf32>, vector<8x96xf32> -> vector<8x96xf32>
    %c0_13 = arith.constant 0 : index
    %c0_14 = arith.constant 0 : index
    %29 = vector.load %arg5[%c0_13, %c0_14] : memref<1x96xf32, #tpu.memory_space<vmem>>, vector<1x96xf32>
    %30 = vector.broadcast %29 : vector<1x96xf32> to vector<8x96xf32>
    %31 = arith.addf %28, %30 : vector<8x96xf32>
    %32 = vector.extract_strided_slice %31 {offsets = [0, 0], sizes = [8, 32], strides = [1, 1]} : vector<8x96xf32> to vector<8x32xf32>
    %33 = vector.shape_cast %32 : vector<8x32xf32> to vector<8x8x4xf32>
    %34 = tpu.transpose %33, [1, 0, 2] : vector<8x8x4xf32> -> vector<8x8x4xf32>
    %35 = vector.extract_strided_slice %31 {offsets = [0, 32], sizes = [8, 32], strides = [1, 1]} : vector<8x96xf32> to vector<8x32xf32>
    %36 = vector.shape_cast %35 : vector<8x32xf32> to vector<8x8x4xf32>
    %37 = tpu.transpose %36, [1, 0, 2] : vector<8x8x4xf32> -> vector<8x8x4xf32>
    %38 = vector.extract_strided_slice %31 {offsets = [0, 64], sizes = [8, 32], strides = [1, 1]} : vector<8x96xf32> to vector<8x32xf32>
    %39 = vector.shape_cast %38 : vector<8x32xf32> to vector<8x8x4xf32>
    %40 = tpu.transpose %39, [1, 0, 2] : vector<8x8x4xf32> -> vector<8x8x4xf32>
    "tpu.trace_start"() <{level = 10 : i32, message = "hqd,hkd->hqk"}> : () -> ()
    %cst_15 = arith.constant dense<0.000000e+00> : vector<8x8x8xf32>
    %41 = tpu.matmul %34, %37, %cst_15 {dimension_numbers = #tpu.dot_dimension_numbers<[2], [2], [1], [1], [0, 0, 0, 1, 1, 1], [0], [0]>} : vector<8x8x4xf32>, vector<8x8x4xf32>, vector<8x8x8xf32> -> vector<8x8x8xf32>
    "tpu.trace_stop"() : () -> ()
    %cst_16 = arith.constant 5.000000e-01 : f32
    %42 = vector.broadcast %cst_16 : f32 to vector<8x8x8xf32>
    %43 = arith.mulf %41, %42 : vector<8x8x8xf32>
    %cst_17 = arith.constant dense<0xFF800000> : vector<8x8xf32>
    %44 = vector.multi_reduction <maximumf>, %43, %cst_17 [2] : vector<8x8x8xf32> to vector<8x8xf32>
    %45 = vector.shape_cast %44 : vector<8x8xf32> to vector<8x8x1xf32>
    %46 = vector.broadcast %45 : vector<8x8x1xf32> to vector<8x8x8xf32>
    %47 = arith.subf %43, %46 : vector<8x8x8xf32>
    %48 = math.exp %47 : vector<8x8x8xf32>
    %cst_18 = arith.constant dense<0.000000e+00> : vector<8x8xf32>
    %49 = vector.multi_reduction <add>, %48, %cst_18 [2] : vector<8x8x8xf32> to vector<8x8xf32>
    %50 = vector.shape_cast %49 : vector<8x8xf32> to vector<8x8x1xf32>
    %51 = tpu.reciprocal %50 {approx = true} : vector<8x8x1xf32> -> vector<8x8x1xf32>
    %52 = vector.broadcast %51 : vector<8x8x1xf32> to vector<8x8x8xf32>
    %53 = arith.mulf %48, %52 : vector<8x8x8xf32>
    "tpu.trace_start"() <{level = 10 : i32, message = "hqk,hkd->hqd"}> : () -> ()
    %cst_19 = arith.constant dense<0.000000e+00> : vector<8x8x4xf32>
    %54 = tpu.matmul %53, %40, %cst_19 {dimension_numbers = #tpu.dot_dimension_numbers<[2], [1], [1], [2], [0, 0, 0, 1, 1, 2], [0], [0]>} : vector<8x8x8xf32>, vector<8x8x4xf32>, vector<8x8x4xf32> -> vector<8x8x4xf32>
    "tpu.trace_stop"() : () -> ()
    %55 = tpu.transpose %54, [1, 0, 2] : vector<8x8x4xf32> -> vector<8x8x4xf32>
    %56 = vector.shape_cast %55 : vector<8x8x4xf32> to vector<8x32xf32>
    %c0_20 = arith.constant 0 : index
    %c0_21 = arith.constant 0 : index
    %57 = vector.load %arg6[%c0_20, %c0_21] : memref<32x32xf32, #tpu.memory_space<vmem>>, vector<32x32xf32>
    %cst_22 = arith.constant dense<0.000000e+00> : vector<8x32xf32>
    %58 = tpu.matmul %56, %57, %cst_22 {dimension_numbers = #tpu.dot_dimension_numbers<[1], [0], [0], [1], [0, 0, 1, 1], [], []>} : vector<8x32xf32>, vector<32x32xf32>, vector<8x32xf32> -> vector<8x32xf32>
    %59 = arith.addf %1, %58 : vector<8x32xf32>
    %c0_23 = arith.constant 0 : index
    %c0_24 = arith.constant 0 : index
    %60 = vector.load %arg7[%c0_23, %c0_24] : memref<1x32xf32, #tpu.memory_space<vmem>>, vector<1x32xf32>
    %c0_25 = arith.constant 0 : index
    %c0_26 = arith.constant 0 : index
    %61 = vector.load %arg8[%c0_25, %c0_26] : memref<1x32xf32, #tpu.memory_space<vmem>>, vector<1x32xf32>
    %cst_27 = arith.constant dense<0.000000e+00> : vector<8xf32>
    %62 = vector.multi_reduction <add>, %59, %cst_27 [1] : vector<8x32xf32> to vector<8xf32>
    %63 = vector.shape_cast %62 : vector<8xf32> to vector<8x1xf32>
    %cst_28 = arith.constant 3.200000e+01 : f32
    %64 = vector.broadcast %cst_28 : f32 to vector<8x1xf32>
    %65 = arith.divf %63, %64 : vector<8x1xf32>
    %66 = vector.broadcast %65 : vector<8x1xf32> to vector<8x32xf32>
    %67 = arith.subf %59, %66 : vector<8x32xf32>
    %68 = arith.mulf %67, %67 : vector<8x32xf32>
    %cst_29 = arith.constant dense<0.000000e+00> : vector<8xf32>
    %69 = vector.multi_reduction <add>, %68, %cst_29 [1] : vector<8x32xf32> to vector<8xf32>
    %70 = vector.shape_cast %69 : vector<8xf32> to vector<8x1xf32>
    %cst_30 = arith.constant 0.0322580636 : f32
    %71 = vector.broadcast %cst_30 : f32 to vector<8x1xf32>
    %72 = arith.mulf %70, %71 : vector<8x1xf32>
    %73 = math.sqrt %72 : vector<8x1xf32>
    %cst_31 = arith.constant 9.99999997E-7 : f32
    %74 = vector.broadcast %cst_31 : f32 to vector<8x1xf32>
    %75 = arith.addf %73, %74 : vector<8x1xf32>
    %76 = tpu.reciprocal %75 {approx = true} : vector<8x1xf32> -> vector<8x1xf32>
    %77 = vector.broadcast %65 : vector<8x1xf32> to vector<8x32xf32>
    %78 = arith.subf %59, %77 : vector<8x32xf32>
    %79 = vector.broadcast %60 : vector<1x32xf32> to vector<8x32xf32>
    %80 = arith.mulf %79, %78 : vector<8x32xf32>
    %81 = vector.broadcast %76 : vector<8x1xf32> to vector<8x32xf32>
    %82 = arith.mulf %80, %81 : vector<8x32xf32>
    %83 = vector.broadcast %61 : vector<1x32xf32> to vector<8x32xf32>
    %84 = arith.addf %82, %83 : vector<8x32xf32>
    %85 = arith.truncf %84 : vector<8x32xf32> to vector<8x32xbf16>
    %c0_32 = arith.constant 0 : index
    %c0_33 = arith.constant 0 : index
    %86 = vector.load %arg9[%c0_32, %c0_33] : memref<32x2048xbf16, #tpu.memory_space<vmem>>, vector<32x2048xbf16>
    %cst_34 = arith.constant dense<0.000000e+00> : vector<8x2048xf32>
    %87 = tpu.matmul %85, %86, %cst_34 {dimension_numbers = #tpu.dot_dimension_numbers<[1], [0], [0], [1], [0, 0, 1, 1], [], []>} : vector<8x32xbf16>, vector<32x2048xbf16>, vector<8x2048xf32> -> vector<8x2048xf32>
    %c0_35 = arith.constant 0 : index
    %c0_36 = arith.constant 0 : index
    %88 = vector.load %arg10[%c0_35, %c0_36] : memref<1x2048xf32, #tpu.memory_space<vmem>>, vector<1x2048xf32>
    %89 = vector.broadcast %88 : vector<1x2048xf32> to vector<8x2048xf32>
    %90 = arith.addf %87, %89 : vector<8x2048xf32>
    %cst_37 = arith.constant 0.000000e+00 : f32
    %91 = vector.broadcast %cst_37 : f32 to vector<8x2048xf32>
    %92 = arith.maximumf %90, %91 : vector<8x2048xf32>
    %93 = arith.truncf %92 : vector<8x2048xf32> to vector<8x2048xbf16>
    %c0_38 = arith.constant 0 : index
    %c0_39 = arith.constant 0 : index
    %94 = vector.load %arg11[%c0_38, %c0_39] : memref<2048x32xbf16, #tpu.memory_space<vmem>>, vector<2048x32xbf16>
    %cst_40 = arith.constant dense<0.000000e+00> : vector<8x32xf32>
    %95 = tpu.matmul %93, %94, %cst_40 {dimension_numbers = #tpu.dot_dimension_numbers<[1], [0], [0], [1], [0, 0, 1, 1], [], []>} : vector<8x2048xbf16>, vector<2048x32xbf16>, vector<8x32xf32> -> vector<8x32xf32>
    %c0_41 = arith.constant 0 : index
    %c0_42 = arith.constant 0 : index
    %96 = vector.load %arg12[%c0_41, %c0_42] : memref<1x32xf32, #tpu.memory_space<vmem>>, vector<1x32xf32>
    %97 = vector.broadcast %96 : vector<1x32xf32> to vector<8x32xf32>
    %98 = arith.addf %95, %97 : vector<8x32xf32>
    %99 = arith.addf %59, %98 : vector<8x32xf32>
    %c0_43 = arith.constant 0 : index
    %c0_44 = arith.constant 0 : index
    %c0_45 = arith.constant 0 : index
    %100 = vector.load %arg13[%c0_43, %c0_44, %c0_45] : memref<1x8x32xf32, #tpu.memory_space<vmem>>, vector<1x8x32xf32>
    %101 = vector.shape_cast %100 : vector<1x8x32xf32> to vector<8x32xf32>
    %102 = vector.shape_cast %99 : vector<8x32xf32> to vector<1x8x32xf32>
    tpu.vector_store %arg13[%c0_43, %c0_44, %c0_45], %102 {strides = array<i32>} : memref<1x8x32xf32, #tpu.memory_space<vmem>>, vector<1x8x32xf32>,
    return
  }
  func.func @transform_0(%arg0: i32) -> (i32, i32, i32) {
    %c0_i32 = arith.constant 0 : i32
    %c0_i32_0 = arith.constant 0 : i32
    %c0_i32_1 = arith.constant 0 : i32
    return %arg0, %c0_i32, %c0_i32_0 : i32, i32, i32
  }
  func.func @transform_1(%arg0: i32) -> (i32, i32) {
    %c0_i32 = arith.constant 0 : i32
    %c0_i32_0 = arith.constant 0 : i32
    %c0_i32_1 = arith.constant 0 : i32
    return %c0_i32, %c0_i32_0 : i32, i32
  }
  func.func @transform_2(%arg0: i32) -> (i32, i32) {
    %c0_i32 = arith.constant 0 : i32
    %c0_i32_0 = arith.constant 0 : i32
    %c0_i32_1 = arith.constant 0 : i32
    return %c0_i32, %c0_i32_0 : i32, i32
  }
  func.func @transform_3(%arg0: i32) -> (i32, i32) {
    %c0_i32 = arith.constant 0 : i32
    %c0_i32_0 = arith.constant 0 : i32
    %c0_i32_1 = arith.constant 0 : i32
    return %c0_i32, %c0_i32_0 : i32, i32
  }
  func.func @transform_4(%arg0: i32) -> (i32, i32) {
    %c0_i32 = arith.constant 0 : i32
    %c0_i32_0 = arith.constant 0 : i32
    %c0_i32_1 = arith.constant 0 : i32
    return %c0_i32, %c0_i32_0 : i32, i32
  }
  func.func @transform_5(%arg0: i32) -> (i32, i32) {
    %c0_i32 = arith.constant 0 : i32
    %c0_i32_0 = arith.constant 0 : i32
    %c0_i32_1 = arith.constant 0 : i32
    return %c0_i32, %c0_i32_0 : i32, i32
  }
  func.func @transform_6(%arg0: i32) -> (i32, i32) {
    %c0_i32 = arith.constant 0 : i32
    %c0_i32_0 = arith.constant 0 : i32
    %c0_i32_1 = arith.constant 0 : i32
    return %c0_i32, %c0_i32_0 : i32, i32
  }
  func.func @transform_7(%arg0: i32) -> (i32, i32) {
    %c0_i32 = arith.constant 0 : i32
    %c0_i32_0 = arith.constant 0 : i32
    %c0_i32_1 = arith.constant 0 : i32
    return %c0_i32, %c0_i32_0 : i32, i32
  }
  func.func @transform_8(%arg0: i32) -> (i32, i32) {
    %c0_i32 = arith.constant 0 : i32
    %c0_i32_0 = arith.constant 0 : i32
    %c0_i32_1 = arith.constant 0 : i32
    return %c0_i32, %c0_i32_0 : i32, i32
  }
  func.func @transform_9(%arg0: i32) -> (i32, i32) {
    %c0_i32 = arith.constant 0 : i32
    %c0_i32_0 = arith.constant 0 : i32
    %c0_i32_1 = arith.constant 0 : i32
    return %c0_i32, %c0_i32_0 : i32, i32
  }
  func.func @transform_10(%arg0: i32) -> (i32, i32) {
    %c0_i32 = arith.constant 0 : i32
    %c0_i32_0 = arith.constant 0 : i32
    %c0_i32_1 = arith.constant 0 : i32
    return %c0_i32, %c0_i32_0 : i32, i32
  }
  func.func @transform_11(%arg0: i32) -> (i32, i32) {
    %c0_i32 = arith.constant 0 : i32
    %c0_i32_0 = arith.constant 0 : i32
    %c0_i32_1 = arith.constant 0 : i32
    return %c0_i32, %c0_i32_0 : i32, i32
  }
  func.func @transform_12(%arg0: i32) -> (i32, i32, i32) {
    %c0_i32 = arith.constant 0 : i32
    %c0_i32_0 = arith.constant 0 : i32
    %c0_i32_1 = arith.constant 0 : i32
    return %arg0, %c0_i32, %c0_i32_0 : i32, i32, i32
  }
}

</mosaic_0001>

<llo_original>
// kernel: tpu_custom_call.1
$region0: #{tpu_custom_call.1}
  #allocation0 [shape = 'u32[]', space=smem, size = 0x4, offset = 0x4, fixed_abs, tag = 'smem constant byte address 0x4 - core index']
  #allocation1 [shape = 'u32[144,128]{1,0:T(1,128)}', space=vmem, size = 0x12000, scoped, tag = 'internal scratch']
  %s0 = inlined_call_operand.vmem [shape: f32[2,8,32], index: 0, kind: input, shape index: {}]
  %s1 = inlined_call_operand.vmem [shape: f32[1,32], index: 1, kind: input, shape index: {}]
  %s2 = inlined_call_operand.vmem [shape: f32[1,32], index: 2, kind: input, shape index: {}]
  %s3 = inlined_call_operand.vmem [shape: f32[32,96], index: 3, kind: input, shape index: {}]
  %s4 = inlined_call_operand.vmem [shape: f32[1,96], index: 4, kind: input, shape index: {}]
  %s5 = inlined_call_operand.vmem [shape: f32[32,32], index: 5, kind: input, shape index: {}]
  %s6 = inlined_call_operand.vmem [shape: f32[1,32], index: 6, kind: input, shape index: {}]
  %s7 = inlined_call_operand.vmem [shape: f32[1,32], index: 7, kind: input, shape index: {}]
  %s8 = inlined_call_operand.vmem [shape: bf16[32,2048], index: 8, kind: input, shape index: {}]
  %s9 = inlined_call_operand.vmem [shape: f32[1,2048], index: 9, kind: input, shape index: {}]
  %s10 = inlined_call_operand.vmem [shape: bf16[2048,32], index: 10, kind: input, shape index: {}]
  %s11 = inlined_call_operand.vmem [shape: f32[1,32], index: 11, kind: input, shape index: {}]
  %s12 = inlined_call_operand.hbm [shape: f32[2,8,32], index: 12, kind: output, shape index: {}]
  %s13 = sld [smem:[#allocation0]]
  $region81: #{tpu_custom_call.1} parent=0
    _
  %s15 = ssub.s32 1, %s13
  %s16 = scalar_select 0, %s15, %s13
  $region1: #{tpu_custom_call.1} parent=0
    #allocation2 [shape = 'u8[8192]{0}', space=vmem, size = 0x2000, scoped, tag = 'output window, operand 0']
    #allocation3 [shape = 's32[2]{0}', space=sflag, size = 0x8, scoped, tag = 'scoped memory for tpu_custom_call.1']
    %17 = vsyncpa [#allocation3], 0
    %s18 = scalar_lea.sflag [#allocation3], 1
    %19 = vsyncpa %s18, 0
    loop: start=0, step=1, limit=4
    $region2: #{tpu_custom_call.1} parent=1 // loop_pre_header
      _
    $region3: #{tpu_custom_call.1} parent=1 // loop_header
      %s21 = sphi 0, %s25
      %p22 = scmp.ge.s32.totalorder %s21, 4
      %s31 = sphi 0, %s33
      %s34 = sphi 0, %s31
      %s35 = sphi 0, %s34
      %s51 = sphi 0, %s35
      %s55 = sphi 0, %s55
      %s57 = sphi 0, %s55
      %s58 = sphi 0, %s57
      %s72 = sphi 0, %s58
      %s76 = sphi 0, %s76
      %s78 = sphi 0, %s76
      %s79 = sphi 0, %s78
      %s93 = sphi 0, %s79
      %s97 = sphi 0, %s97
      %s99 = sphi 0, %s97
      %s100 = sphi 0, %s99
      %s114 = sphi 0, %s100
      %s118 = sphi 0, %s118
      %s120 = sphi 0, %s118
      %s121 = sphi 0, %s120
      %s135 = sphi 0, %s121
      %s139 = sphi 0, %s139
      %s141 = sphi 0, %s139
      %s142 = sphi 0, %s141
      %s156 = sphi 0, %s142
      %s160 = sphi 0, %s160
      %s162 = sphi 0, %s160
      %s163 = sphi 0, %s162
      %s177 = sphi 0, %s163
      %s181 = sphi 0, %s181
      %s183 = sphi 0, %s181
      %s184 = sphi 0, %s183
      %s198 = sphi 0, %s184
      %s202 = sphi 0, %s202
      %s204 = sphi 0, %s202
      %s205 = sphi 0, %s204
      %s219 = sphi 0, %s205
      %s223 = sphi 0, %s223
      %s225 = sphi 0, %s223
      %s226 = sphi 0, %s225
      %s240 = sphi 0, %s226
      %s244 = sphi 0, %s244
      %s246 = sphi 0, %s244
      %s247 = sphi 0, %s246
      %s261 = sphi 0, %s247
      %s265 = sphi 0, %s265
      %s267 = sphi 0, %s265
      %s268 = sphi 0, %s267
      %s282 = sphi 0, %s268
      %s288 = sphi 0, %s290
      %s291 = sphi 0, %s288
      %s292 = sphi 0, %s291
      %s308 = sphi 0, %s292
    $region4: #{tpu_custom_call.1} parent=1 // loop_header_branch
      %24 = sbr.rel (%p22) target = $region8
    $region5: #{tpu_custom_call.1} parent=1 // loop_body
      %s26 = ssub.s32 %s21, 1
      %s27 = ssub.s32 %s21, 2
      %s28 = sadd.s32 %s21, 1
      %s29 = ssub.s32 %s21, %s28
      %p30 = scmp.eq.s32.totalorder %s29, 0
      %s32 = sadd.s32 %s31, 1
      %s33 = scalar_select %p30, %s31, %s32
      %p36 = pneg %p30
      %p37 = scmp.eq.s32.totalorder %s21, 1
      %p38 = por %p36, %p37
      %p39 = scmp.ne.s32.totalorder %s31, %s34
      %p40 = scmp.eq.s32.totalorder %s21, 0
      %p41 = por %p39, %p40
      %p42 = scmp.ne.s32.totalorder %s31, %s34
      %p43 = scmp.eq.s32.totalorder %s26, 1
      %p44 = por %p42, %p43
      %p45 = scmp.ne.s32.totalorder %s34, %s35
      %p46 = scmp.eq.s32.totalorder %s26, 0
      %p47 = por %p45, %p46
      %p48 = scmp.ne.s32.totalorder %s34, %s35
      %p49 = scmp.eq.s32.totalorder %s27, 1
      %p50 = por %p48, %p49
      %p52 = scmp.ne.s32.totalorder %s35, %s51
      %p53 = scmp.eq.s32.totalorder %s27, 0
      %p54 = por %p52, %p53
      %s56 = sadd.s32 %s55, 1
      %p59 = scmp.eq.s32.totalorder %s21, 1
      %p60 = scmp.ne.s32.totalorder %s55, %s57
      %p61 = scmp.eq.s32.totalorder %s21, 0
      %p62 = por %p60, %p61
      %p63 = scmp.ne.s32.totalorder %s55, %s57
      %p64 = scmp.eq.s32.totalorder %s26, 1
      %p65 = por %p63, %p64
      %p66 = scmp.ne.s32.totalorder %s57, %s58
      %p67 = scmp.eq.s32.totalorder %s26, 0
      %p68 = por %p66, %p67
      %p69 = scmp.ne.s32.totalorder %s57, %s58
      %p70 = scmp.eq.s32.totalorder %s27, 1
      %p71 = por %p69, %p70
      %p73 = scmp.ne.s32.totalorder %s58, %s72
      %p74 = scmp.eq.s32.totalorder %s27, 0
      %p75 = por %p73, %p74
      %s77 = sadd.s32 %s76, 1
      %p80 = scmp.eq.s32.totalorder %s21, 1
      %p81 = scmp.ne.s32.totalorder %s76, %s78
      %p82 = scmp.eq.s32.totalorder %s21, 0
      %p83 = por %p81, %p82
      %p84 = scmp.ne.s32.totalorder %s76, %s78
      %p85 = scmp.eq.s32.totalorder %s26, 1
      %p86 = por %p84, %p85
      %p87 = scmp.ne.s32.totalorder %s78, %s79
      %p88 = scmp.eq.s32.totalorder %s26, 0
      %p89 = por %p87, %p88
      %p90 = scmp.ne.s32.totalorder %s78, %s79
      %p91 = scmp.eq.s32.totalorder %s27, 1
      %p92 = por %p90, %p91
      %p94 = scmp.ne.s32.totalorder %s79, %s93
      %p95 = scmp.eq.s32.totalorder %s27, 0
      %p96 = por %p94, %p95
      %s98 = sadd.s32 %s97, 1
      %p101 = scmp.eq.s32.totalorder %s21, 1
      %p102 = scmp.ne.s32.totalorder %s97, %s99
      %p103 = scmp.eq.s32.totalorder %s21, 0
      %p104 = por %p102, %p103
      %p105 = scmp.ne.s32.totalorder %s97, %s99
      %p106 = scmp.eq.s32.totalorder %s26, 1
      %p107 = por %p105, %p106
      %p108 = scmp.ne.s32.totalorder %s99, %s100
      %p109 = scmp.eq.s32.totalorder %s26, 0
      %p110 = por %p108, %p109
      %p111 = scmp.ne.s32.totalorder %s99, %s100
      %p112 = scmp.eq.s32.totalorder %s27, 1
      %p113 = por %p111, %p112
      %p115 = scmp.ne.s32.totalorder %s100, %s114
      %p116 = scmp.eq.s32.totalorder %s27, 0
      %p117 = por %p115, %p116
      %s119 = sadd.s32 %s118, 1
      %p122 = scmp.eq.s32.totalorder %s21, 1
      %p123 = scmp.ne.s32.totalorder %s118, %s120
      %p124 = scmp.eq.s32.totalorder %s21, 0
      %p125 = por %p123, %p124
      %p126 = scmp.ne.s32.totalorder %s118, %s120
      %p127 = scmp.eq.s32.totalorder %s26, 1
      %p128 = por %p126, %p127
      %p129 = scmp.ne.s32.totalorder %s120, %s121
      %p130 = scmp.eq.s32.totalorder %s26, 0
      %p131 = por %p129, %p130
      %p132 = scmp.ne.s32.totalorder %s120, %s121
      %p133 = scmp.eq.s32.totalorder %s27, 1
      %p134 = por %p132, %p133
      %p136 = scmp.ne.s32.totalorder %s121, %s135
      %p137 = scmp.eq.s32.totalorder %s27, 0
      %p138 = por %p136, %p137
      %s140 = sadd.s32 %s139, 1
      %p143 = scmp.eq.s32.totalorder %s21, 1
      %p144 = scmp.ne.s32.totalorder %s139, %s141
      %p145 = scmp.eq.s32.totalorder %s21, 0
      %p146 = por %p144, %p145
      %p147 = scmp.ne.s32.totalorder %s139, %s141
      %p148 = scmp.eq.s32.totalorder %s26, 1
      %p149 = por %p147, %p148
      %p150 = scmp.ne.s32.totalorder %s141, %s142
      %p151 = scmp.eq.s32.totalorder %s26, 0
      %p152 = por %p150, %p151
      %p153 = scmp.ne.s32.totalorder %s141, %s142
      %p154 = scmp.eq.s32.totalorder %s27, 1
      %p155 = por %p153, %p154
      %p157 = scmp.ne.s32.totalorder %s142, %s156
      %p158 = scmp.eq.s32.totalorder %s27, 0
      %p159 = por %p157, %p158
      %s161 = sadd.s32 %s160, 1
      %p164 = scmp.eq.s32.totalorder %s21, 1
      %p165 = scmp.ne.s32.totalorder %s160, %s162
      %p166 = scmp.eq.s32.totalorder %s21, 0
      %p167 = por %p165, %p166
      %p168 = scmp.ne.s32.totalorder %s160, %s162
      %p169 = scmp.eq.s32.totalorder %s26, 1
      %p170 = por %p168, %p169
      %p171 = scmp.ne.s32.totalorder %s162, %s163
      %p172 = scmp.eq.s32.totalorder %s26, 0
      %p173 = por %p171, %p172
      %p174 = scmp.ne.s32.totalorder %s162, %s163
      %p175 = scmp.eq.s32.totalorder %s27, 1
      %p176 = por %p174, %p175
      %p178 = scmp.ne.s32.totalorder %s163, %s177
      %p179 = scmp.eq.s32.totalorder %s27, 0
      %p180 = por %p178, %p179
      %s182 = sadd.s32 %s181, 1
      %p185 = scmp.eq.s32.totalorder %s21, 1
      %p186 = scmp.ne.s32.totalorder %s181, %s183
      %p187 = scmp.eq.s32.totalorder %s21, 0
      %p188 = por %p186, %p187
      %p189 = scmp.ne.s32.totalorder %s181, %s183
      %p190 = scmp.eq.s32.totalorder %s26, 1
      %p191 = por %p189, %p190
      %p192 = scmp.ne.s32.totalorder %s183, %s184
      %p193 = scmp.eq.s32.totalorder %s26, 0
      %p194 = por %p192, %p193
      %p195 = scmp.ne.s32.totalorder %s183, %s184
      %p196 = scmp.eq.s32.totalorder %s27, 1
      %p197 = por %p195, %p196
      %p199 = scmp.ne.s32.totalorder %s184, %s198
      %p200 = scmp.eq.s32.totalorder %s27, 0
      %p201 = por %p199, %p200
      %s203 = sadd.s32 %s202, 1
      %p206 = scmp.eq.s32.totalorder %s21, 1
      %p207 = scmp.ne.s32.totalorder %s202, %s204
      %p208 = scmp.eq.s32.totalorder %s21, 0
      %p209 = por %p207, %p208
      %p210 = scmp.ne.s32.totalorder %s202, %s204
      %p211 = scmp.eq.s32.totalorder %s26, 1
      %p212 = por %p210, %p211
      %p213 = scmp.ne.s32.totalorder %s204, %s205
      %p214 = scmp.eq.s32.totalorder %s26, 0
      %p215 = por %p213, %p214
      %p216 = scmp.ne.s32.totalorder %s204, %s205
      %p217 = scmp.eq.s32.totalorder %s27, 1
      %p218 = por %p216, %p217
      %p220 = scmp.ne.s32.totalorder %s205, %s219
      %p221 = scmp.eq.s32.totalorder %s27, 0
      %p222 = por %p220, %p221
      %s224 = sadd.s32 %s223, 1
      %p227 = scmp.eq.s32.totalorder %s21, 1
      %p228 = scmp.ne.s32.totalorder %s223, %s225
      %p229 = scmp.eq.s32.totalorder %s21, 0
      %p230 = por %p228, %p229
      %p231 = scmp.ne.s32.totalorder %s223, %s225
      %p232 = scmp.eq.s32.totalorder %s26, 1
      %p233 = por %p231, %p232
      %p234 = scmp.ne.s32.totalorder %s225, %s226
      %p235 = scmp.eq.s32.totalorder %s26, 0
      %p236 = por %p234, %p235
      %p237 = scmp.ne.s32.totalorder %s225, %s226
      %p238 = scmp.eq.s32.totalorder %s27, 1
      %p239 = por %p237, %p238
      %p241 = scmp.ne.s32.totalorder %s226, %s240
      %p242 = scmp.eq.s32.totalorder %s27, 0
      %p243 = por %p241, %p242
      %s245 = sadd.s32 %s244, 1
      %p248 = scmp.eq.s32.totalorder %s21, 1
      %p249 = scmp.ne.s32.totalorder %s244, %s246
      %p250 = scmp.eq.s32.totalorder %s21, 0
      %p251 = por %p249, %p250
      %p252 = scmp.ne.s32.totalorder %s244, %s246
      %p253 = scmp.eq.s32.totalorder %s26, 1
      %p254 = por %p252, %p253
      %p255 = scmp.ne.s32.totalorder %s246, %s247
      %p256 = scmp.eq.s32.totalorder %s26, 0
      %p257 = por %p255, %p256
      %p258 = scmp.ne.s32.totalorder %s246, %s247
      %p259 = scmp.eq.s32.totalorder %s27, 1
      %p260 = por %p258, %p259
      %p262 = scmp.ne.s32.totalorder %s247, %s261
      %p263 = scmp.eq.s32.totalorder %s27, 0
      %p264 = por %p262, %p263
      %s266 = sadd.s32 %s265, 1
      %p269 = scmp.eq.s32.totalorder %s21, 1
      %p270 = scmp.ne.s32.totalorder %s265, %s267
      %p271 = scmp.eq.s32.totalorder %s21, 0
      %p272 = por %p270, %p271
      %p273 = scmp.ne.s32.totalorder %s265, %s267
      %p274 = scmp.eq.s32.totalorder %s26, 1
      %p275 = por %p273, %p274
      %p276 = scmp.ne.s32.totalorder %s267, %s268
      %p277 = scmp.eq.s32.totalorder %s26, 0
      %p278 = por %p276, %p277
      %p279 = scmp.ne.s32.totalorder %s267, %s268
      %p280 = scmp.eq.s32.totalorder %s27, 1
      %p281 = por %p279, %p280
      %p283 = scmp.ne.s32.totalorder %s268, %s282
      %p284 = scmp.eq.s32.totalorder %s27, 0
      %p285 = por %p283, %p284
      %s286 = ssub.s32 %s21, %s28
      %p287 = scmp.eq.s32.totalorder %s286, 0
      %s289 = sadd.s32 %s288, 1
      %s290 = scalar_select %p287, %s288, %s289
      %p293 = pneg %p287
      %p294 = scmp.eq.s32.totalorder %s21, 1
      %p295 = por %p293, %p294
      %p296 = scmp.ne.s32.totalorder %s288, %s291
      %p297 = scmp.eq.s32.totalorder %s21, 0
      %p298 = por %p296, %p297
      %p299 = scmp.ne.s32.totalorder %s288, %s291
      %p300 = scmp.eq.s32.totalorder %s26, 1
      %p301 = por %p299, %p300
      %p302 = scmp.ne.s32.totalorder %s291, %s292
      %p303 = scmp.eq.s32.totalorder %s26, 0
      %p304 = por %p302, %p303
      %p305 = scmp.ne.s32.totalorder %s291, %s292
      %p306 = scmp.eq.s32.totalorder %s27, 1
      %p307 = por %p305, %p306
      %p309 = scmp.ne.s32.totalorder %s292, %s308
      %p310 = scmp.eq.s32.totalorder %s27, 0
      %p311 = por %p309, %p310
      %p312 = scmp.le.s32.totalorder 1, %s21
      %p313 = scmp.lt.s32.totalorder %s21, 3
      %p314 = pnand %p312, %p313
      %p315 = pneg %p314
      // Predicated region
      $region9: #{tpu_custom_call.1} parent=5 // pred_check
        _
      $region10: #{tpu_custom_call.1} parent=5 // pred_check_branch
        %317 = sbr.rel (%p314) target = $region12
      $region11: #{tpu_custom_call.1} parent=5 // pred_region
        %s318 = ssub.s32 %s21, 1
        // Predicated region
        $region13: #{tpu_custom_call.1} parent=11 // pred_check
          %p319 = pneg %p68
        $region14: #{tpu_custom_call.1} parent=11 // pred_check_branch
          %321 = sbr.rel (%p319) target = $region16
        $region15: #{tpu_custom_call.1} parent=11 // pred_region
          _
        $region16: #{tpu_custom_call.1} parent=11 // pred_fallthru
          _
        // Predicated region
        $region17: #{tpu_custom_call.1} parent=11 // pred_check
          %p322 = pneg %p89
        $region18: #{tpu_custom_call.1} parent=11 // pred_check_branch
          %324 = sbr.rel (%p322) target = $region20
        $region19: #{tpu_custom_call.1} parent=11 // pred_region
          _
        $region20: #{tpu_custom_call.1} parent=11 // pred_fallthru
          _
        // Predicated region
        $region21: #{tpu_custom_call.1} parent=11 // pred_check
          %p325 = pneg %p110
        $region22: #{tpu_custom_call.1} parent=11 // pred_check_branch
          %327 = sbr.rel (%p325) target = $region24
        $region23: #{tpu_custom_call.1} parent=11 // pred_region
          _
        $region24: #{tpu_custom_call.1} parent=11 // pred_fallthru
          _
        // Predicated region
        $region25: #{tpu_custom_call.1} parent=11 // pred_check
          %p328 = pneg %p131
        $region26: #{tpu_custom_call.1} parent=11 // pred_check_branch
          %330 = sbr.rel (%p328) target = $region28
        $region27: #{tpu_custom_call.1} parent=11 // pred_region
          _
        $region28: #{tpu_custom_call.1} parent=11 // pred_fallthru
          _
        // Predicated region
        $region29: #{tpu_custom_call.1} parent=11 // pred_check
          %p331 = pneg %p152
        $region30: #{tpu_custom_call.1} parent=11 // pred_check_branch
          %333 = sbr.rel (%p331) target = $region32
        $region31: #{tpu_custom_call.1} parent=11 // pred_region
          _
        $region32: #{tpu_custom_call.1} parent=11 // pred_fallthru
          _
        // Predicated region
        $region33: #{tpu_custom_call.1} parent=11 // pred_check
          %p334 = pneg %p173
        $region34: #{tpu_custom_call.1} parent=11 // pred_check_branch
          %336 = sbr.rel (%p334) target = $region36
        $region35: #{tpu_custom_call.1} parent=11 // pred_region
          _
        $region36: #{tpu_custom_call.1} parent=11 // pred_fallthru
          _
        // Predicated region
        $region37: #{tpu_custom_call.1} parent=11 // pred_check
          %p337 = pneg %p194
        $region38: #{tpu_custom_call.1} parent=11 // pred_check_branch
          %339 = sbr.rel (%p337) target = $region40
        $region39: #{tpu_custom_call.1} parent=11 // pred_region
          _
        $region40: #{tpu_custom_call.1} parent=11 // pred_fallthru
          _
        // Predicated region
        $region41: #{tpu_custom_call.1} parent=11 // pred_check
          %p340 = pneg %p215
        $region42: #{tpu_custom_call.1} parent=11 // pred_check_branch
          %342 = sbr.rel (%p340) target = $region44
        $region43: #{tpu_custom_call.1} parent=11 // pred_region
          _
        $region44: #{tpu_custom_call.1} parent=11 // pred_fallthru
          _
        // Predicated region
        $region45: #{tpu_custom_call.1} parent=11 // pred_check
          %p343 = pneg %p236
        $region46: #{tpu_custom_call.1} parent=11 // pred_check_branch
          %345 = sbr.rel (%p343) target = $region48
        $region47: #{tpu_custom_call.1} parent=11 // pred_region
          _
        $region48: #{tpu_custom_call.1} parent=11 // pred_fallthru
          _
        // Predicated region
        $region49: #{tpu_custom_call.1} parent=11 // pred_check
          %p346 = pneg %p257
        $region50: #{tpu_custom_call.1} parent=11 // pred_check_branch
          %348 = sbr.rel (%p346) target = $region52
        $region51: #{tpu_custom_call.1} parent=11 // pred_region
          _
        $region52: #{tpu_custom_call.1} parent=11 // pred_fallthru
          _
        // Predicated region
        $region53: #{tpu_custom_call.1} parent=11 // pred_check
          %p349 = pneg %p278
        $region54: #{tpu_custom_call.1} parent=11 // pred_check_branch
          %351 = sbr.rel (%p349) target = $region56
        $region55: #{tpu_custom_call.1} parent=11 // pred_region
          _
        $region56: #{tpu_custom_call.1} parent=11 // pred_fallthru
          _
      $region12: #{tpu_custom_call.1} parent=5 // pred_fallthru
        _
      %p352 = scmp.lt.s32.totalorder %s21, 2
      // Predicated region
      $region57: #{tpu_custom_call.1} parent=5 // pred_check
        %p353 = pneg %p352
      $region58: #{tpu_custom_call.1} parent=5 // pred_check_branch
        %355 = sbr.rel (%p353) target = $region60
      $region59: #{tpu_custom_call.1} parent=5 // pred_region
        // Predicated region
        $region61: #{tpu_custom_call.1} parent=59 // pred_check
          %p356 = pneg %p41
        $region62: #{tpu_custom_call.1} parent=59 // pred_check_branch
          %358 = sbr.rel (%p356) target = $region64
        $region63: #{tpu_custom_call.1} parent=59 // pred_region
          %p359 = scmp.lt.s32.totalorder %s21, 1
          %s360 = scalar_select %p359, %s21, 1
          %s361 = smul.addr %s360, 8
          %s362 = scalar_lea.vmem %s0, %s361
        $region64: #{tpu_custom_call.1} parent=59 // pred_fallthru
          _
      $region60: #{tpu_custom_call.1} parent=5 // pred_fallthru
        _
      %p363 = scmp.le.s32.totalorder 1, %s21
      %p364 = scmp.lt.s32.totalorder %s21, 3
      %p365 = pnand %p363, %p364
      %p366 = pneg %p365
      // Predicated region
      $region65: #{tpu_custom_call.1} parent=5 // pred_check
        _
      $region66: #{tpu_custom_call.1} parent=5 // pred_check_branch
        %368 = sbr.rel (%p365) target = $region68
      $region67: #{tpu_custom_call.1} parent=5 // pred_region
        %s369 = ssub.s32 %s21, 1
        %p370 = scmp.lt.s32.totalorder %s26, 1
        %s371 = scalar_select %p370, %s26, 1
        %s372 = smul.addr %s371, 8
        %s373 = scalar_lea.vmem %s0, %s372
        %p374 = pneg %p47
        %p375 = pneg %p44
        %p376 = pneg %p68
        %p377 = pneg %p65
        %p378 = pneg %p89
        %p379 = pneg %p86
        %p380 = pneg %p110
        %p381 = pneg %p107
        %p382 = pneg %p131
        %p383 = pneg %p128
        %p384 = pneg %p152
        %p385 = pneg %p149
        %p386 = pneg %p173
        %p387 = pneg %p170
        %p388 = pneg %p194
        %p389 = pneg %p191
        %p390 = pneg %p215
        %p391 = pneg %p212
        %p392 = pneg %p236
        %p393 = pneg %p233
        %p394 = pneg %p257
        %p395 = pneg %p254
        %p396 = pneg %p278
        %p397 = pneg %p275
        %p398 = pneg %p304
        %p399 = pneg %p301
        %s400 = sand.u32 %s291, 1
        %s401 = scalar_lea.sflag [#allocation3], %s400
        %s402 = sand.u32 %s291, 1
        %s403 = smul.addr %s402, 8
        %s404 = scalar_lea.vmem [#allocation2], %s403
        %p405 = scmp.lt.s32.totalorder %s26, 1
        %s406 = scalar_select %p405, %s26, 1
        %s407 = smul.addr %s406, 8
        %s408 = scalar_lea.vmem %s0, %s407
        %v410 = vld [vmem:[%s408] sm:$0xff]
        %v411 = vld [vmem:[%s1] sm:$0x1]
        %v412 = vld [vmem:[%s2] sm:$0x1]
        %vm413 = vcmask 261120
        %v414 = vsel %vm413, %v410, 0.0
        %415 = vadd.xlane.f32.xlu0 %v414
        %v416 = vpop.xlane.xlu0 %415
        %v417 = vrcp.pop 32.0
        %v418 = vmul.f32 %v416, %v417
        %v419 = vsub.f32 %v410, %v418
        %v420 = vmul.f32 %v419, %v419
        %v421 = vsel %vm413, %v420, 0.0
        %422 = vadd.xlane.f32.xlu0 %v421
        %v423 = vpop.xlane.xlu0 %422
        %v424 = vmul.f32 %v423, 0.032258064
        %v425 = vrsqrt.pop %v424
        %v426 = vmul.f32 %v424, %v425
        %vm427 = vcmp.eq.f32.partialorder %v424, inf
        %v428 = vsel %vm427, %v424, %v426
        %vm429 = vcmp.eq.f32.partialorder %v424, 0.0
        %v430 = vand.u32 %v424, 2147483648
        %v431 = vsel %vm429, %v430, %v428
        %v432 = vadd.f32 %v431, 1e-06
        %v433 = vrcp.pop %v432
        %v435 = vlaneseq
        %v436 = vshrl.u32 %v435, 7
        %v437 = vsub.s32 0, %v436
        %v438 = vrot.slane %v411, %v437
        %v440 = vmul.f32 %v438, %v419
        %v441 = vmul.f32 %v440, %v433
        %v443 = vlaneseq
        %v444 = vshrl.u32 %v443, 7
        %v445 = vsub.s32 0, %v444
        %v446 = vrot.slane %v412, %v445
        %v448 = vadd.f32 %v441, %v446
        %v449 = vld [vmem:[%s3] sm:$0xff]
        %v450 = vld [vmem:[%s3 + $0x8] sm:$0xff]
        %v451 = vld [vmem:[%s3 + $0x10] sm:$0xff]
        %v452 = vld [vmem:[%s3 + $0x18] sm:$0xff]
        %v453 = vld [vmem:[%s4] sm:$0x1]
        %v455 = vlaneseq
        %v456 = vshrl.u32 %v455, 7
        %v457 = vsub.s32 0, %v456
        %v458 = vrot.slane %v453, %v457
        %v461 = vsel %vm413, %v448, 0
        %463 = vmatprep.subr.mxu0 0.0
        %464 = vmatpush1.msra.mxu0 %v449
        %465 = vmatprep.subr.mxu0 0.0
        %466 = vmatpush1.msra.mxu0 %v450
        %467 = vmatprep.subr.mxu0 0.0
        %468 = vmatpush1.msra.mxu0 %v451
        %469 = vmatprep.subr.mxu0 0.0
        %470 = vmatpush1.msra.mxu0 %v452
        %471 = vmatprep.subr.mxu0 0.0
        %472 = vmatpush1.msra.mxu0 0.0
        %473 = vmatprep.subr.mxu0 0.0
        %474 = vmatpush1.msra.mxu0 0.0
        %475 = vmatprep.subr.mxu0 0.0
        %476 = vmatpush1.msra.mxu0 0.0
        %477 = vmatprep.subr.mxu0 0.0
        %478 = vmatpush1.msra.mxu0 0.0
        %479 = vmatprep.subr.mxu0 0.0
        %480 = vmatpush1.msra.mxu0 0.0
        %481 = vmatprep.subr.mxu0 0.0
        %482 = vmatpush1.msra.mxu0 0.0
        %483 = vmatprep.subr.mxu0 0.0
        %484 = vmatpush1.msra.mxu0 0.0
        %485 = vmatprep.subr.mxu0 0.0
        %486 = vmatpush1.msra.mxu0 0.0
        %487 = vmatprep.subr.mxu0 0.0
        %488 = vmatpush1.msra.mxu0 0.0
        %489 = vmatprep.subr.mxu0 0.0
        %490 = vmatpush1.msra.mxu0 0.0
        %491 = vmatprep.subr.mxu0 0.0
        %492 = vmatpush1.msra.mxu0 0.0
        %493 = vmatprep.subr.mxu0 0.0
        %494 = vmatpush1.msra.mxu0 0.0
        %495 = vmatprep.subr.mxu0 0.0
        %496 = vmatpush1.msra.mxu0 0.0
        %497 = vmatprep.subr.mxu0 0.0
        %498 = vmatpush1.msra.mxu0 0.0
        %499 = vmatprep.subr.mxu0 0.0
        %500 = vmatpush1.msra.mxu0 0.0
        %501 = vmatprep.subr.mxu0 0.0
        %502 = vmatpush1.msra.mxu0 0.0
        %503 = vmatprep.subr.mxu0 0.0
        %504 = vmatpush1.msra.mxu0 0.0
        %505 = vmatprep.subr.mxu0 0.0
        %506 = vmatpush1.msra.mxu0 0.0
        %507 = vmatprep.subr.mxu0 0.0
        %508 = vmatpush1.msra.mxu0 0.0
        %509 = vmatprep.subr.mxu0 0.0
        %510 = vmatpush1.msra.mxu0 0.0
        %511 = vmatprep.subr.mxu0 0.0
        %512 = vmatpush1.msra.mxu0 0.0
        %513 = vmatprep.subr.mxu0 0.0
        %514 = vmatpush1.msra.mxu0 0.0
        %515 = vmatprep.subr.mxu0 0.0
        %516 = vmatpush1.msra.mxu0 0.0
        %517 = vmatprep.subr.mxu0 0.0
        %518 = vmatpush1.msra.mxu0 0.0
        %519 = vmatprep.subr.mxu0 0.0
        %520 = vmatpush1.msra.mxu0 0.0
        %521 = vmatprep.subr.mxu0 0.0
        %522 = vmatpush1.msra.mxu0 0.0
        %523 = vmatprep.subr.mxu0 0.0
        %524 = vmatpush1.msra.mxu0 0.0
        %525 = vmatprep.subr.mxu0 0.0
        %526 = vmatpush1.msra.mxu0 0.0
        %527 = vmatprep.mubr.f32.mxu0 0.0
        %528 = vmatmul.mubr.f32.gmra.mrb[0].mxu0 %v461
        %v529 = vpop.f32.mrb[0].mxu0
        %v530 = vadd.f32 %v458, %v529
        %v531 = vpop.f32.mrb[0].mxu0
        %532 = vdwg.mxu0
        %534 = vrot.lane.b32.xlu0 %v530, 124
        %v535 = vpop.permute.xlu0 %534
        %537 = vrot.lane.b32.xlu0 %v530, 120
        %v538 = vpop.permute.xlu0 %537
        %540 = vrot.lane.b32.xlu0 %v530, 116
        %v541 = vpop.permute.xlu0 %540
        %543 = vrot.lane.b32.xlu0 %v530, 112
        %v544 = vpop.permute.xlu0 %543
        %546 = vrot.lane.b32.xlu0 %v530, 108
        %v547 = vpop.permute.xlu0 %546
        %549 = vrot.lane.b32.xlu0 %v530, 104
        %v550 = vpop.permute.xlu0 %549
        %552 = vrot.lane.b32.xlu0 %v530, 100
        %v553 = vpop.permute.xlu0 %552
        %v555 = vcombine.low %v530, %v538
        %v556 = vcombine.high %v530, %v538
        %v558 = vunpack.c.l.s4 1983009808
        %v559 = vunpack.c.0.s8 %v558
        %v560 = vlaneseq
        %v561 = vshrl.u32 %v560, 7
        %v562 = vsub.s32 %v559, %v561
        %v563 = vrot.slane %v555, %v562
        %v565 = vunpack.c.l.s4 1983009808
        %v566 = vunpack.c.0.s8 %v565
        %v567 = vlaneseq
        %v568 = vshrl.u32 %v567, 7
        %v569 = vsub.s32 %v566, %v568
        %v570 = vrot.slane %v556, %v569
        %v571 = vcombine.low %v535, %v541
        %v572 = vcombine.high %v535, %v541
        %v574 = vunpack.c.l.s4 1983009808
        %v575 = vunpack.c.0.s8 %v574
        %v576 = vlaneseq
        %v577 = vshrl.u32 %v576, 7
        %v578 = vsub.s32 %v575, %v577
        %v579 = vrot.slane %v571, %v578
        %v581 = vunpack.c.l.s4 1983009808
        %v582 = vunpack.c.0.s8 %v581
        %v583 = vlaneseq
        %v584 = vshrl.u32 %v583, 7
        %v585 = vsub.s32 %v582, %v584
        %v586 = vrot.slane %v572, %v585
        %v587 = vcombine.low %v544, %v550
        %v588 = vcombine.high %v544, %v550
        %v590 = vunpack.c.l.s4 1983009808
        %v591 = vunpack.c.0.s8 %v590
        %v592 = vlaneseq
        %v593 = vshrl.u32 %v592, 7
        %v594 = vsub.s32 %v591, %v593
        %v595 = vrot.slane %v587, %v594
        %v597 = vunpack.c.l.s4 1983009808
        %v598 = vunpack.c.0.s8 %v597
        %v599 = vlaneseq
        %v600 = vshrl.u32 %v599, 7
        %v601 = vsub.s32 %v598, %v600
        %v602 = vrot.slane %v588, %v601
        %v603 = vcombine.low %v547, %v553
        %v604 = vcombine.high %v547, %v553
        %v606 = vunpack.c.l.s4 1983009808
        %v607 = vunpack.c.0.s8 %v606
        %v608 = vlaneseq
        %v609 = vshrl.u32 %v608, 7
        %v610 = vsub.s32 %v607, %v609
        %v611 = vrot.slane %v603, %v610
        %v613 = vunpack.c.l.s4 1983009808
        %v614 = vunpack.c.0.s8 %v613
        %v615 = vlaneseq
        %v616 = vshrl.u32 %v615, 7
        %v617 = vsub.s32 %v614, %v616
        %v618 = vrot.slane %v604, %v617
        %v619 = vcombine.low %v563, %v579
        %v620 = vcombine.high %v563, %v579
        %v622 = vunpack.c.l.s4 1934713408
        %v623 = vunpack.c.0.s8 %v622
        %v624 = vlaneseq
        %v625 = vshrl.u32 %v624, 7
        %v626 = vsub.s32 %v623, %v625
        %v627 = vrot.slane %v619, %v626
        %v629 = vunpack.c.l.s4 1934713408
        %v630 = vunpack.c.0.s8 %v629
        %v631 = vlaneseq
        %v632 = vshrl.u32 %v631, 7
        %v633 = vsub.s32 %v630, %v632
        %v634 = vrot.slane %v620, %v633
        %v635 = vcombine.low %v570, %v586
        %v636 = vcombine.high %v570, %v586
        %v638 = vunpack.c.l.s4 1934713408
        %v639 = vunpack.c.0.s8 %v638
        %v640 = vlaneseq
        %v641 = vshrl.u32 %v640, 7
        %v642 = vsub.s32 %v639, %v641
        %v643 = vrot.slane %v635, %v642
        %v645 = vunpack.c.l.s4 1934713408
        %v646 = vunpack.c.0.s8 %v645
        %v647 = vlaneseq
        %v648 = vshrl.u32 %v647, 7
        %v649 = vsub.s32 %v646, %v648
        %v650 = vrot.slane %v636, %v649
        %v651 = vcombine.low %v595, %v611
        %v652 = vcombine.high %v595, %v611
        %v654 = vunpack.c.l.s4 1934713408
        %v655 = vunpack.c.0.s8 %v654
        %v656 = vlaneseq
        %v657 = vshrl.u32 %v656, 7
        %v658 = vsub.s32 %v655, %v657
        %v659 = vrot.slane %v651, %v658
        %v661 = vunpack.c.l.s4 1934713408
        %v662 = vunpack.c.0.s8 %v661
        %v663 = vlaneseq
        %v664 = vshrl.u32 %v663, 7
        %v665 = vsub.s32 %v662, %v664
        %v666 = vrot.slane %v652, %v665
        %v667 = vcombine.low %v602, %v618
        %v668 = vcombine.high %v602, %v618
        %v670 = vunpack.c.l.s4 1934713408
        %v671 = vunpack.c.0.s8 %v670
        %v672 = vlaneseq
        %v673 = vshrl.u32 %v672, 7
        %v674 = vsub.s32 %v671, %v673
        %v675 = vrot.slane %v667, %v674
        %v677 = vunpack.c.l.s4 1934713408
        %v678 = vunpack.c.0.s8 %v677
        %v679 = vlaneseq
        %v680 = vshrl.u32 %v679, 7
        %v681 = vsub.s32 %v678, %v680
        %v682 = vrot.slane %v668, %v681
        %v683 = vcombine.low %v627, %v659
        %v684 = vcombine.high %v627, %v659
        %v685 = vcombine.low %v634, %v666
        %v686 = vcombine.high %v634, %v666
        %v687 = vcombine.low %v643, %v675
        %v688 = vcombine.high %v643, %v675
        %v689 = vcombine.low %v650, %v682
        %v690 = vcombine.high %v650, %v682
        %v691 = vcombine.low %v683, %v685
        %v692 = vcombine.high %v683, %v685
        %v694 = vunpack.c.l.s4 1983009808
        %v695 = vunpack.c.0.s8 %v694
        %v696 = vlaneseq
        %v697 = vshrl.u32 %v696, 7
        %v698 = vsub.s32 %v695, %v697
        %v699 = vrot.slane %v691, %v698
        %v701 = vunpack.c.l.s4 1983009808
        %v702 = vunpack.c.0.s8 %v701
        %v703 = vlaneseq
        %v704 = vshrl.u32 %v703, 7
        %v705 = vsub.s32 %v702, %v704
        %v706 = vrot.slane %v692, %v705
        %v707 = vcombine.low %v684, %v686
        %v708 = vcombine.high %v684, %v686
        %v710 = vunpack.c.l.s4 1983009808
        %v711 = vunpack.c.0.s8 %v710
        %v712 = vlaneseq
        %v713 = vshrl.u32 %v712, 7
        %v714 = vsub.s32 %v711, %v713
        %v715 = vrot.slane %v707, %v714
        %v717 = vunpack.c.l.s4 1983009808
        %v718 = vunpack.c.0.s8 %v717
        %v719 = vlaneseq
        %v720 = vshrl.u32 %v719, 7
        %v721 = vsub.s32 %v718, %v720
        %v722 = vrot.slane %v708, %v721
        %v723 = vcombine.low %v687, %v689
        %v724 = vcombine.high %v687, %v689
        %v726 = vunpack.c.l.s4 1983009808
        %v727 = vunpack.c.0.s8 %v726
        %v728 = vlaneseq
        %v729 = vshrl.u32 %v728, 7
        %v730 = vsub.s32 %v727, %v729
        %v731 = vrot.slane %v723, %v730
        %v733 = vunpack.c.l.s4 1983009808
        %v734 = vunpack.c.0.s8 %v733
        %v735 = vlaneseq
        %v736 = vshrl.u32 %v735, 7
        %v737 = vsub.s32 %v734, %v736
        %v738 = vrot.slane %v724, %v737
        %v739 = vcombine.low %v688, %v690
        %v740 = vcombine.high %v688, %v690
        %v742 = vunpack.c.l.s4 1983009808
        %v743 = vunpack.c.0.s8 %v742
        %v744 = vlaneseq
        %v745 = vshrl.u32 %v744, 7
        %v746 = vsub.s32 %v743, %v745
        %v747 = vrot.slane %v739, %v746
        %v749 = vunpack.c.l.s4 1983009808
        %v750 = vunpack.c.0.s8 %v749
        %v751 = vlaneseq
        %v752 = vshrl.u32 %v751, 7
        %v753 = vsub.s32 %v750, %v752
        %v754 = vrot.slane %v740, %v753
        %v755 = vcombine.low %v699, %v715
        %v756 = vcombine.high %v699, %v715
        %v758 = vunpack.c.l.s4 1934713408
        %v759 = vunpack.c.0.s8 %v758
        %v760 = vlaneseq
        %v761 = vshrl.u32 %v760, 7
        %v762 = vsub.s32 %v759, %v761
        %v763 = vrot.slane %v755, %v762
        %v765 = vunpack.c.l.s4 1934713408
        %v766 = vunpack.c.0.s8 %v765
        %v767 = vlaneseq
        %v768 = vshrl.u32 %v767, 7
        %v769 = vsub.s32 %v766, %v768
        %v770 = vrot.slane %v756, %v769
        %v771 = vcombine.low %v706, %v722
        %v772 = vcombine.high %v706, %v722
        %v774 = vunpack.c.l.s4 1934713408
        %v775 = vunpack.c.0.s8 %v774
        %v776 = vlaneseq
        %v777 = vshrl.u32 %v776, 7
        %v778 = vsub.s32 %v775, %v777
        %v779 = vrot.slane %v771, %v778
        %v781 = vunpack.c.l.s4 1934713408
        %v782 = vunpack.c.0.s8 %v781
        %v783 = vlaneseq
        %v784 = vshrl.u32 %v783, 7
        %v785 = vsub.s32 %v782, %v784
        %v786 = vrot.slane %v772, %v785
        %v787 = vcombine.low %v731, %v747
        %v788 = vcombine.high %v731, %v747
        %v790 = vunpack.c.l.s4 1934713408
        %v791 = vunpack.c.0.s8 %v790
        %v792 = vlaneseq
        %v793 = vshrl.u32 %v792, 7
        %v794 = vsub.s32 %v791, %v793
        %v795 = vrot.slane %v787, %v794
        %v797 = vunpack.c.l.s4 1934713408
        %v798 = vunpack.c.0.s8 %v797
        %v799 = vlaneseq
        %v800 = vshrl.u32 %v799, 7
        %v801 = vsub.s32 %v798, %v800
        %v802 = vrot.slane %v788, %v801
        %v803 = vcombine.low %v738, %v754
        %v804 = vcombine.high %v738, %v754
        %v806 = vunpack.c.l.s4 1934713408
        %v807 = vunpack.c.0.s8 %v806
        %v808 = vlaneseq
        %v809 = vshrl.u32 %v808, 7
        %v810 = vsub.s32 %v807, %v809
        %v811 = vrot.slane %v803, %v810
        %v813 = vunpack.c.l.s4 1934713408
        %v814 = vunpack.c.0.s8 %v813
        %v815 = vlaneseq
        %v816 = vshrl.u32 %v815, 7
        %v817 = vsub.s32 %v814, %v816
        %v818 = vrot.slane %v804, %v817
        %v819 = vcombine.low %v763, %v795
        %v820 = vcombine.high %v763, %v795
        %v821 = vcombine.low %v770, %v802
        %v822 = vcombine.high %v770, %v802
        %v823 = vcombine.low %v779, %v811
        %v824 = vcombine.high %v779, %v811
        %v825 = vcombine.low %v786, %v818
        %v826 = vcombine.high %v786, %v818
        %827 = vrot.lane.b32.xlu0 %v530, 96
        %v828 = vpop.permute.xlu0 %827
        %829 = vrot.lane.b32.xlu0 %v535, 96
        %v830 = vpop.permute.xlu0 %829
        %831 = vrot.lane.b32.xlu0 %v538, 96
        %v832 = vpop.permute.xlu0 %831
        %833 = vrot.lane.b32.xlu0 %v541, 96
        %v834 = vpop.permute.xlu0 %833
        %835 = vrot.lane.b32.xlu0 %v544, 96
        %v836 = vpop.permute.xlu0 %835
        %837 = vrot.lane.b32.xlu0 %v547, 96
        %v838 = vpop.permute.xlu0 %837
        %839 = vrot.lane.b32.xlu0 %v550, 96
        %v840 = vpop.permute.xlu0 %839
        %841 = vrot.lane.b32.xlu0 %v553, 96
        %v842 = vpop.permute.xlu0 %841
        %v851 = vcombine.low %v828, %v832
        %v852 = vcombine.high %v828, %v832
        %v854 = vunpack.c.l.s4 1983009808
        %v855 = vunpack.c.0.s8 %v854
        %v856 = vlaneseq
        %v857 = vshrl.u32 %v856, 7
        %v858 = vsub.s32 %v855, %v857
        %v859 = vrot.slane %v851, %v858
        %v861 = vunpack.c.l.s4 1983009808
        %v862 = vunpack.c.0.s8 %v861
        %v863 = vlaneseq
        %v864 = vshrl.u32 %v863, 7
        %v865 = vsub.s32 %v862, %v864
        %v866 = vrot.slane %v852, %v865
        %v867 = vcombine.low %v830, %v834
        %v868 = vcombine.high %v830, %v834
        %v870 = vunpack.c.l.s4 1983009808
        %v871 = vunpack.c.0.s8 %v870
        %v872 = vlaneseq
        %v873 = vshrl.u32 %v872, 7
        %v874 = vsub.s32 %v871, %v873
        %v875 = vrot.slane %v867, %v874
        %v877 = vunpack.c.l.s4 1983009808
        %v878 = vunpack.c.0.s8 %v877
        %v879 = vlaneseq
        %v880 = vshrl.u32 %v879, 7
        %v881 = vsub.s32 %v878, %v880
        %v882 = vrot.slane %v868, %v881
        %v883 = vcombine.low %v836, %v840
        %v884 = vcombine.high %v836, %v840
        %v886 = vunpack.c.l.s4 1983009808
        %v887 = vunpack.c.0.s8 %v886
        %v888 = vlaneseq
        %v889 = vshrl.u32 %v888, 7
        %v890 = vsub.s32 %v887, %v889
        %v891 = vrot.slane %v883, %v890
        %v893 = vunpack.c.l.s4 1983009808
        %v894 = vunpack.c.0.s8 %v893
        %v895 = vlaneseq
        %v896 = vshrl.u32 %v895, 7
        %v897 = vsub.s32 %v894, %v896
        %v898 = vrot.slane %v884, %v897
        %v899 = vcombine.low %v838, %v842
        %v900 = vcombine.high %v838, %v842
        %v902 = vunpack.c.l.s4 1983009808
        %v903 = vunpack.c.0.s8 %v902
        %v904 = vlaneseq
        %v905 = vshrl.u32 %v904, 7
        %v906 = vsub.s32 %v903, %v905
        %v907 = vrot.slane %v899, %v906
        %v909 = vunpack.c.l.s4 1983009808
        %v910 = vunpack.c.0.s8 %v909
        %v911 = vlaneseq
        %v912 = vshrl.u32 %v911, 7
        %v913 = vsub.s32 %v910, %v912
        %v914 = vrot.slane %v900, %v913
        %v915 = vcombine.low %v859, %v875
        %v916 = vcombine.high %v859, %v875
        %v918 = vunpack.c.l.s4 1934713408
        %v919 = vunpack.c.0.s8 %v918
        %v920 = vlaneseq
        %v921 = vshrl.u32 %v920, 7
        %v922 = vsub.s32 %v919, %v921
        %v923 = vrot.slane %v915, %v922
        %v925 = vunpack.c.l.s4 1934713408
        %v926 = vunpack.c.0.s8 %v925
        %v927 = vlaneseq
        %v928 = vshrl.u32 %v927, 7
        %v929 = vsub.s32 %v926, %v928
        %v930 = vrot.slane %v916, %v929
        %v931 = vcombine.low %v866, %v882
        %v932 = vcombine.high %v866, %v882
        %v934 = vunpack.c.l.s4 1934713408
        %v935 = vunpack.c.0.s8 %v934
        %v936 = vlaneseq
        %v937 = vshrl.u32 %v936, 7
        %v938 = vsub.s32 %v935, %v937
        %v939 = vrot.slane %v931, %v938
        %v941 = vunpack.c.l.s4 1934713408
        %v942 = vunpack.c.0.s8 %v941
        %v943 = vlaneseq
        %v944 = vshrl.u32 %v943, 7
        %v945 = vsub.s32 %v942, %v944
        %v946 = vrot.slane %v932, %v945
        %v947 = vcombine.low %v891, %v907
        %v948 = vcombine.high %v891, %v907
        %v950 = vunpack.c.l.s4 1934713408
        %v951 = vunpack.c.0.s8 %v950
        %v952 = vlaneseq
        %v953 = vshrl.u32 %v952, 7
        %v954 = vsub.s32 %v951, %v953
        %v955 = vrot.slane %v947, %v954
        %v957 = vunpack.c.l.s4 1934713408
        %v958 = vunpack.c.0.s8 %v957
        %v959 = vlaneseq
        %v960 = vshrl.u32 %v959, 7
        %v961 = vsub.s32 %v958, %v960
        %v962 = vrot.slane %v948, %v961
        %v963 = vcombine.low %v898, %v914
        %v964 = vcombine.high %v898, %v914
        %v966 = vunpack.c.l.s4 1934713408
        %v967 = vunpack.c.0.s8 %v966
        %v968 = vlaneseq
        %v969 = vshrl.u32 %v968, 7
        %v970 = vsub.s32 %v967, %v969
        %v971 = vrot.slane %v963, %v970
        %v973 = vunpack.c.l.s4 1934713408
        %v974 = vunpack.c.0.s8 %v973
        %v975 = vlaneseq
        %v976 = vshrl.u32 %v975, 7
        %v977 = vsub.s32 %v974, %v976
        %v978 = vrot.slane %v964, %v977
        %v979 = vcombine.low %v923, %v955
        %v980 = vcombine.high %v923, %v955
        %v981 = vcombine.low %v930, %v962
        %v982 = vcombine.high %v930, %v962
        %v983 = vcombine.low %v939, %v971
        %v984 = vcombine.high %v939, %v971
        %v985 = vcombine.low %v946, %v978
        %v986 = vcombine.high %v946, %v978
        %v987 = vcombine.low %v979, %v981
        %v988 = vcombine.high %v979, %v981
        %v990 = vunpack.c.l.s4 1983009808
        %v991 = vunpack.c.0.s8 %v990
        %v992 = vlaneseq
        %v993 = vshrl.u32 %v992, 7
        %v994 = vsub.s32 %v991, %v993
        %v995 = vrot.slane %v987, %v994
        %v997 = vunpack.c.l.s4 1983009808
        %v998 = vunpack.c.0.s8 %v997
        %v999 = vlaneseq
        %v1000 = vshrl.u32 %v999, 7
        %v1001 = vsub.s32 %v998, %v1000
        %v1002 = vrot.slane %v988, %v1001
        %v1003 = vcombine.low %v980, %v982
        %v1004 = vcombine.high %v980, %v982
        %v1006 = vunpack.c.l.s4 1983009808
        %v1007 = vunpack.c.0.s8 %v1006
        %v1008 = vlaneseq
        %v1009 = vshrl.u32 %v1008, 7
        %v1010 = vsub.s32 %v1007, %v1009
        %v1011 = vrot.slane %v1003, %v1010
        %v1013 = vunpack.c.l.s4 1983009808
        %v1014 = vunpack.c.0.s8 %v1013
        %v1015 = vlaneseq
        %v1016 = vshrl.u32 %v1015, 7
        %v1017 = vsub.s32 %v1014, %v1016
        %v1018 = vrot.slane %v1004, %v1017
        %v1019 = vcombine.low %v983, %v985
        %v1020 = vcombine.high %v983, %v985
        %v1022 = vunpack.c.l.s4 1983009808
        %v1023 = vunpack.c.0.s8 %v1022
        %v1024 = vlaneseq
        %v1025 = vshrl.u32 %v1024, 7
        %v1026 = vsub.s32 %v1023, %v1025
        %v1027 = vrot.slane %v1019, %v1026
        %v1029 = vunpack.c.l.s4 1983009808
        %v1030 = vunpack.c.0.s8 %v1029
        %v1031 = vlaneseq
        %v1032 = vshrl.u32 %v1031, 7
        %v1033 = vsub.s32 %v1030, %v1032
        %v1034 = vrot.slane %v1020, %v1033
        %v1035 = vcombine.low %v984, %v986
        %v1036 = vcombine.high %v984, %v986
        %v1038 = vunpack.c.l.s4 1983009808
        %v1039 = vunpack.c.0.s8 %v1038
        %v1040 = vlaneseq
        %v1041 = vshrl.u32 %v1040, 7
        %v1042 = vsub.s32 %v1039, %v1041
        %v1043 = vrot.slane %v1035, %v1042
        %v1045 = vunpack.c.l.s4 1983009808
        %v1046 = vunpack.c.0.s8 %v1045
        %v1047 = vlaneseq
        %v1048 = vshrl.u32 %v1047, 7
        %v1049 = vsub.s32 %v1046, %v1048
        %v1050 = vrot.slane %v1036, %v1049
        %v1051 = vcombine.low %v995, %v1011
        %v1052 = vcombine.high %v995, %v1011
        %v1054 = vunpack.c.l.s4 1934713408
        %v1055 = vunpack.c.0.s8 %v1054
        %v1056 = vlaneseq
        %v1057 = vshrl.u32 %v1056, 7
        %v1058 = vsub.s32 %v1055, %v1057
        %v1059 = vrot.slane %v1051, %v1058
        %v1061 = vunpack.c.l.s4 1934713408
        %v1062 = vunpack.c.0.s8 %v1061
        %v1063 = vlaneseq
        %v1064 = vshrl.u32 %v1063, 7
        %v1065 = vsub.s32 %v1062, %v1064
        %v1066 = vrot.slane %v1052, %v1065
        %v1067 = vcombine.low %v1002, %v1018
        %v1068 = vcombine.high %v1002, %v1018
        %v1070 = vunpack.c.l.s4 1934713408
        %v1071 = vunpack.c.0.s8 %v1070
        %v1072 = vlaneseq
        %v1073 = vshrl.u32 %v1072, 7
        %v1074 = vsub.s32 %v1071, %v1073
        %v1075 = vrot.slane %v1067, %v1074
        %v1077 = vunpack.c.l.s4 1934713408
        %v1078 = vunpack.c.0.s8 %v1077
        %v1079 = vlaneseq
        %v1080 = vshrl.u32 %v1079, 7
        %v1081 = vsub.s32 %v1078, %v1080
        %v1082 = vrot.slane %v1068, %v1081
        %v1083 = vcombine.low %v1027, %v1043
        %v1084 = vcombine.high %v1027, %v1043
        %v1086 = vunpack.c.l.s4 1934713408
        %v1087 = vunpack.c.0.s8 %v1086
        %v1088 = vlaneseq
        %v1089 = vshrl.u32 %v1088, 7
        %v1090 = vsub.s32 %v1087, %v1089
        %v1091 = vrot.slane %v1083, %v1090
        %v1093 = vunpack.c.l.s4 1934713408
        %v1094 = vunpack.c.0.s8 %v1093
        %v1095 = vlaneseq
        %v1096 = vshrl.u32 %v1095, 7
        %v1097 = vsub.s32 %v1094, %v1096
        %v1098 = vrot.slane %v1084, %v1097
        %v1099 = vcombine.low %v1034, %v1050
        %v1100 = vcombine.high %v1034, %v1050
        %v1102 = vunpack.c.l.s4 1934713408
        %v1103 = vunpack.c.0.s8 %v1102
        %v1104 = vlaneseq
        %v1105 = vshrl.u32 %v1104, 7
        %v1106 = vsub.s32 %v1103, %v1105
        %v1107 = vrot.slane %v1099, %v1106
        %v1109 = vunpack.c.l.s4 1934713408
        %v1110 = vunpack.c.0.s8 %v1109
        %v1111 = vlaneseq
        %v1112 = vshrl.u32 %v1111, 7
        %v1113 = vsub.s32 %v1110, %v1112
        %v1114 = vrot.slane %v1100, %v1113
        %v1115 = vcombine.low %v1059, %v1091
        %v1116 = vcombine.high %v1059, %v1091
        %v1117 = vcombine.low %v1066, %v1098
        %v1118 = vcombine.high %v1066, %v1098
        %v1119 = vcombine.low %v1075, %v1107
        %v1120 = vcombine.high %v1075, %v1107
        %v1121 = vcombine.low %v1082, %v1114
        %v1122 = vcombine.high %v1082, %v1114
        %1123 = vrot.lane.b32.xlu0 %v530, 64
        %v1124 = vpop.permute.xlu0 %1123
        %1125 = vrot.lane.b32.xlu0 %v535, 64
        %v1126 = vpop.permute.xlu0 %1125
        %1127 = vrot.lane.b32.xlu0 %v538, 64
        %v1128 = vpop.permute.xlu0 %1127
        %1129 = vrot.lane.b32.xlu0 %v541, 64
        %v1130 = vpop.permute.xlu0 %1129
        %1131 = vrot.lane.b32.xlu0 %v544, 64
        %v1132 = vpop.permute.xlu0 %1131
        %1133 = vrot.lane.b32.xlu0 %v547, 64
        %v1134 = vpop.permute.xlu0 %1133
        %1135 = vrot.lane.b32.xlu0 %v550, 64
        %v1136 = vpop.permute.xlu0 %1135
        %1137 = vrot.lane.b32.xlu0 %v553, 64
        %v1138 = vpop.permute.xlu0 %1137
        %v1147 = vcombine.low %v1124, %v1128
        %v1148 = vcombine.high %v1124, %v1128
        %v1150 = vunpack.c.l.s4 1983009808
        %v1151 = vunpack.c.0.s8 %v1150
        %v1152 = vlaneseq
        %v1153 = vshrl.u32 %v1152, 7
        %v1154 = vsub.s32 %v1151, %v1153
        %v1155 = vrot.slane %v1147, %v1154
        %v1157 = vunpack.c.l.s4 1983009808
        %v1158 = vunpack.c.0.s8 %v1157
        %v1159 = vlaneseq
        %v1160 = vshrl.u32 %v1159, 7
        %v1161 = vsub.s32 %v1158, %v1160
        %v1162 = vrot.slane %v1148, %v1161
        %v1163 = vcombine.low %v1126, %v1130
        %v1164 = vcombine.high %v1126, %v1130
        %v1166 = vunpack.c.l.s4 1983009808
        %v1167 = vunpack.c.0.s8 %v1166
        %v1168 = vlaneseq
        %v1169 = vshrl.u32 %v1168, 7
        %v1170 = vsub.s32 %v1167, %v1169
        %v1171 = vrot.slane %v1163, %v1170
        %v1173 = vunpack.c.l.s4 1983009808
        %v1174 = vunpack.c.0.s8 %v1173
        %v1175 = vlaneseq
        %v1176 = vshrl.u32 %v1175, 7
        %v1177 = vsub.s32 %v1174, %v1176
        %v1178 = vrot.slane %v1164, %v1177
        %v1179 = vcombine.low %v1132, %v1136
        %v1180 = vcombine.high %v1132, %v1136
        %v1182 = vunpack.c.l.s4 1983009808
        %v1183 = vunpack.c.0.s8 %v1182
        %v1184 = vlaneseq
        %v1185 = vshrl.u32 %v1184, 7
        %v1186 = vsub.s32 %v1183, %v1185
        %v1187 = vrot.slane %v1179, %v1186
        %v1189 = vunpack.c.l.s4 1983009808
        %v1190 = vunpack.c.0.s8 %v1189
        %v1191 = vlaneseq
        %v1192 = vshrl.u32 %v1191, 7
        %v1193 = vsub.s32 %v1190, %v1192
        %v1194 = vrot.slane %v1180, %v1193
        %v1195 = vcombine.low %v1134, %v1138
        %v1196 = vcombine.high %v1134, %v1138
        %v1198 = vunpack.c.l.s4 1983009808
        %v1199 = vunpack.c.0.s8 %v1198
        %v1200 = vlaneseq
        %v1201 = vshrl.u32 %v1200, 7
        %v1202 = vsub.s32 %v1199, %v1201
        %v1203 = vrot.slane %v1195, %v1202
        %v1205 = vunpack.c.l.s4 1983009808
        %v1206 = vunpack.c.0.s8 %v1205
        %v1207 = vlaneseq
        %v1208 = vshrl.u32 %v1207, 7
        %v1209 = vsub.s32 %v1206, %v1208
        %v1210 = vrot.slane %v1196, %v1209
        %v1211 = vcombine.low %v1155, %v1171
        %v1212 = vcombine.high %v1155, %v1171
        %v1214 = vunpack.c.l.s4 1934713408
        %v1215 = vunpack.c.0.s8 %v1214
        %v1216 = vlaneseq
        %v1217 = vshrl.u32 %v1216, 7
        %v1218 = vsub.s32 %v1215, %v1217
        %v1219 = vrot.slane %v1211, %v1218
        %v1221 = vunpack.c.l.s4 1934713408
        %v1222 = vunpack.c.0.s8 %v1221
        %v1223 = vlaneseq
        %v1224 = vshrl.u32 %v1223, 7
        %v1225 = vsub.s32 %v1222, %v1224
        %v1226 = vrot.slane %v1212, %v1225
        %v1227 = vcombine.low %v1162, %v1178
        %v1228 = vcombine.high %v1162, %v1178
        %v1230 = vunpack.c.l.s4 1934713408
        %v1231 = vunpack.c.0.s8 %v1230
        %v1232 = vlaneseq
        %v1233 = vshrl.u32 %v1232, 7
        %v1234 = vsub.s32 %v1231, %v1233
        %v1235 = vrot.slane %v1227, %v1234
        %v1237 = vunpack.c.l.s4 1934713408
        %v1238 = vunpack.c.0.s8 %v1237
        %v1239 = vlaneseq
        %v1240 = vshrl.u32 %v1239, 7
        %v1241 = vsub.s32 %v1238, %v1240
        %v1242 = vrot.slane %v1228, %v1241
        %v1243 = vcombine.low %v1187, %v1203
        %v1244 = vcombine.high %v1187, %v1203
        %v1246 = vunpack.c.l.s4 1934713408
        %v1247 = vunpack.c.0.s8 %v1246
        %v1248 = vlaneseq
        %v1249 = vshrl.u32 %v1248, 7
        %v1250 = vsub.s32 %v1247, %v1249
        %v1251 = vrot.slane %v1243, %v1250
        %v1253 = vunpack.c.l.s4 1934713408
        %v1254 = vunpack.c.0.s8 %v1253
        %v1255 = vlaneseq
        %v1256 = vshrl.u32 %v1255, 7
        %v1257 = vsub.s32 %v1254, %v1256
        %v1258 = vrot.slane %v1244, %v1257
        %v1259 = vcombine.low %v1194, %v1210
        %v1260 = vcombine.high %v1194, %v1210
        %v1262 = vunpack.c.l.s4 1934713408
        %v1263 = vunpack.c.0.s8 %v1262
        %v1264 = vlaneseq
        %v1265 = vshrl.u32 %v1264, 7
        %v1266 = vsub.s32 %v1263, %v1265
        %v1267 = vrot.slane %v1259, %v1266
        %v1269 = vunpack.c.l.s4 1934713408
        %v1270 = vunpack.c.0.s8 %v1269
        %v1271 = vlaneseq
        %v1272 = vshrl.u32 %v1271, 7
        %v1273 = vsub.s32 %v1270, %v1272
        %v1274 = vrot.slane %v1260, %v1273
        %v1275 = vcombine.low %v1219, %v1251
        %v1276 = vcombine.high %v1219, %v1251
        %v1277 = vcombine.low %v1226, %v1258
        %v1278 = vcombine.high %v1226, %v1258
        %v1279 = vcombine.low %v1235, %v1267
        %v1280 = vcombine.high %v1235, %v1267
        %v1281 = vcombine.low %v1242, %v1274
        %v1282 = vcombine.high %v1242, %v1274
        %v1283 = vcombine.low %v1275, %v1277
        %v1284 = vcombine.high %v1275, %v1277
        %v1286 = vunpack.c.l.s4 1983009808
        %v1287 = vunpack.c.0.s8 %v1286
        %v1288 = vlaneseq
        %v1289 = vshrl.u32 %v1288, 7
        %v1290 = vsub.s32 %v1287, %v1289
        %v1291 = vrot.slane %v1283, %v1290
        %v1293 = vunpack.c.l.s4 1983009808
        %v1294 = vunpack.c.0.s8 %v1293
        %v1295 = vlaneseq
        %v1296 = vshrl.u32 %v1295, 7
        %v1297 = vsub.s32 %v1294, %v1296
        %v1298 = vrot.slane %v1284, %v1297
        %v1299 = vcombine.low %v1276, %v1278
        %v1300 = vcombine.high %v1276, %v1278
        %v1302 = vunpack.c.l.s4 1983009808
        %v1303 = vunpack.c.0.s8 %v1302
        %v1304 = vlaneseq
        %v1305 = vshrl.u32 %v1304, 7
        %v1306 = vsub.s32 %v1303, %v1305
        %v1307 = vrot.slane %v1299, %v1306
        %v1309 = vunpack.c.l.s4 1983009808
        %v1310 = vunpack.c.0.s8 %v1309
        %v1311 = vlaneseq
        %v1312 = vshrl.u32 %v1311, 7
        %v1313 = vsub.s32 %v1310, %v1312
        %v1314 = vrot.slane %v1300, %v1313
        %v1315 = vcombine.low %v1279, %v1281
        %v1316 = vcombine.high %v1279, %v1281
        %v1318 = vunpack.c.l.s4 1983009808
        %v1319 = vunpack.c.0.s8 %v1318
        %v1320 = vlaneseq
        %v1321 = vshrl.u32 %v1320, 7
        %v1322 = vsub.s32 %v1319, %v1321
        %v1323 = vrot.slane %v1315, %v1322
        %v1325 = vunpack.c.l.s4 1983009808
        %v1326 = vunpack.c.0.s8 %v1325
        %v1327 = vlaneseq
        %v1328 = vshrl.u32 %v1327, 7
        %v1329 = vsub.s32 %v1326, %v1328
        %v1330 = vrot.slane %v1316, %v1329
        %v1331 = vcombine.low %v1280, %v1282
        %v1332 = vcombine.high %v1280, %v1282
        %v1334 = vunpack.c.l.s4 1983009808
        %v1335 = vunpack.c.0.s8 %v1334
        %v1336 = vlaneseq
        %v1337 = vshrl.u32 %v1336, 7
        %v1338 = vsub.s32 %v1335, %v1337
        %v1339 = vrot.slane %v1331, %v1338
        %v1341 = vunpack.c.l.s4 1983009808
        %v1342 = vunpack.c.0.s8 %v1341
        %v1343 = vlaneseq
        %v1344 = vshrl.u32 %v1343, 7
        %v1345 = vsub.s32 %v1342, %v1344
        %v1346 = vrot.slane %v1332, %v1345
        %v1347 = vcombine.low %v1291, %v1307
        %v1348 = vcombine.high %v1291, %v1307
        %v1350 = vunpack.c.l.s4 1934713408
        %v1351 = vunpack.c.0.s8 %v1350
        %v1352 = vlaneseq
        %v1353 = vshrl.u32 %v1352, 7
        %v1354 = vsub.s32 %v1351, %v1353
        %v1355 = vrot.slane %v1347, %v1354
        %v1357 = vunpack.c.l.s4 1934713408
        %v1358 = vunpack.c.0.s8 %v1357
        %v1359 = vlaneseq
        %v1360 = vshrl.u32 %v1359, 7
        %v1361 = vsub.s32 %v1358, %v1360
        %v1362 = vrot.slane %v1348, %v1361
        %v1363 = vcombine.low %v1298, %v1314
        %v1364 = vcombine.high %v1298, %v1314
        %v1366 = vunpack.c.l.s4 1934713408
        %v1367 = vunpack.c.0.s8 %v1366
        %v1368 = vlaneseq
        %v1369 = vshrl.u32 %v1368, 7
        %v1370 = vsub.s32 %v1367, %v1369
        %v1371 = vrot.slane %v1363, %v1370
        %v1373 = vunpack.c.l.s4 1934713408
        %v1374 = vunpack.c.0.s8 %v1373
        %v1375 = vlaneseq
        %v1376 = vshrl.u32 %v1375, 7
        %v1377 = vsub.s32 %v1374, %v1376
        %v1378 = vrot.slane %v1364, %v1377
        %v1379 = vcombine.low %v1323, %v1339
        %v1380 = vcombine.high %v1323, %v1339
        %v1382 = vunpack.c.l.s4 1934713408
        %v1383 = vunpack.c.0.s8 %v1382
        %v1384 = vlaneseq
        %v1385 = vshrl.u32 %v1384, 7
        %v1386 = vsub.s32 %v1383, %v1385
        %v1387 = vrot.slane %v1379, %v1386
        %v1389 = vunpack.c.l.s4 1934713408
        %v1390 = vunpack.c.0.s8 %v1389
        %v1391 = vlaneseq
        %v1392 = vshrl.u32 %v1391, 7
        %v1393 = vsub.s32 %v1390, %v1392
        %v1394 = vrot.slane %v1380, %v1393
        %v1395 = vcombine.low %v1330, %v1346
        %v1396 = vcombine.high %v1330, %v1346
        %v1398 = vunpack.c.l.s4 1934713408
        %v1399 = vunpack.c.0.s8 %v1398
        %v1400 = vlaneseq
        %v1401 = vshrl.u32 %v1400, 7
        %v1402 = vsub.s32 %v1399, %v1401
        %v1403 = vrot.slane %v1395, %v1402
        %v1405 = vunpack.c.l.s4 1934713408
        %v1406 = vunpack.c.0.s8 %v1405
        %v1407 = vlaneseq
        %v1408 = vshrl.u32 %v1407, 7
        %v1409 = vsub.s32 %v1406, %v1408
        %v1410 = vrot.slane %v1396, %v1409
        %v1411 = vcombine.low %v1355, %v1387
        %v1412 = vcombine.high %v1355, %v1387
        %v1413 = vcombine.low %v1362, %v1394
        %v1414 = vcombine.high %v1362, %v1394
        %v1415 = vcombine.low %v1371, %v1403
        %v1416 = vcombine.high %v1371, %v1403
        %v1417 = vcombine.low %v1378, %v1410
        %v1418 = vcombine.high %v1378, %v1410
        %vm1419 = vcmask 31744
        %v1421 = vsel %vm1419, %v819, 0
        %v1424 = vsel %vm1419, %v1115, 0
        %1426 = vmatprep.subr.mxu0 0.0
        %1427 = vmatpush1.xpose.msra.mxu0 %v1424
        %1428 = vmatprep.subr.mxu0 0.0
        %1429 = vmatpush1.xpose.msra.mxu0 0.0
        %1430 = vmatprep.subr.mxu0 0.0
        %1431 = vmatpush1.xpose.msra.mxu0 0.0
        %1432 = vmatprep.subr.mxu0 0.0
        %1433 = vmatpush1.xpose.msra.mxu0 0.0
        %1434 = vmatprep.subr.mxu0 0.0
        %1435 = vmatpush1.xpose.msra.mxu0 0.0
        %1436 = vmatprep.subr.mxu0 0.0
        %1437 = vmatpush1.xpose.msra.mxu0 0.0
        %1438 = vmatprep.subr.mxu0 0.0
        %1439 = vmatpush1.xpose.msra.mxu0 0.0
        %1440 = vmatprep.subr.mxu0 0.0
        %1441 = vmatpush1.xpose.msra.mxu0 0.0
        %1442 = vmatprep.subr.mxu0 0.0
        %1443 = vmatpush1.xpose.msra.mxu0 0.0
        %1444 = vmatprep.subr.mxu0 0.0
        %1445 = vmatpush1.xpose.msra.mxu0 0.0
        %1446 = vmatprep.subr.mxu0 0.0
        %1447 = vmatpush1.xpose.msra.mxu0 0.0
        %1448 = vmatprep.subr.mxu0 0.0
        %1449 = vmatpush1.xpose.msra.mxu0 0.0
        %1450 = vmatprep.subr.mxu0 0.0
        %1451 = vmatpush1.xpose.msra.mxu0 0.0
        %1452 = vmatprep.subr.mxu0 0.0
        %1453 = vmatpush1.xpose.msra.mxu0 0.0
        %1454 = vmatprep.subr.mxu0 0.0
        %1455 = vmatpush1.xpose.msra.mxu0 0.0
        %1456 = vmatprep.subr.mxu0 0.0
        %1457 = vmatpush1.xpose.msra.mxu0 0.0
        %1458 = vmatprep.subr.mxu0 0.0
        %1459 = vmatpush1.xpose.msra.mxu0 0.0
        %1460 = vmatprep.subr.mxu0 0.0
        %1461 = vmatpush1.xpose.msra.mxu0 0.0
        %1462 = vmatprep.subr.mxu0 0.0
        %1463 = vmatpush1.xpose.msra.mxu0 0.0
        %1464 = vmatprep.subr.mxu0 0.0
        %1465 = vmatpush1.xpose.msra.mxu0 0.0
        %1466 = vmatprep.subr.mxu0 0.0
        %1467 = vmatpush1.xpose.msra.mxu0 0.0
        %1468 = vmatprep.subr.mxu0 0.0
        %1469 = vmatpush1.xpose.msra.mxu0 0.0
        %1470 = vmatprep.subr.mxu0 0.0
        %1471 = vmatpush1.xpose.msra.mxu0 0.0
        %1472 = vmatprep.subr.mxu0 0.0
        %1473 = vmatpush1.xpose.msra.mxu0 0.0
        %1474 = vmatprep.subr.mxu0 0.0
        %1475 = vmatpush1.xpose.msra.mxu0 0.0
        %1476 = vmatprep.subr.mxu0 0.0
        %1477 = vmatpush1.xpose.msra.mxu0 0.0
        %1478 = vmatprep.subr.mxu0 0.0
        %1479 = vmatpush1.xpose.msra.mxu0 0.0
        %1480 = vmatprep.subr.mxu0 0.0
        %1481 = vmatpush1.xpose.msra.mxu0 0.0
        %1482 = vmatprep.subr.mxu0 0.0
        %1483 = vmatpush1.xpose.msra.mxu0 0.0
        %1484 = vmatprep.subr.mxu0 0.0
        %1485 = vmatpush1.xpose.msra.mxu0 0.0
        %1486 = vmatprep.subr.mxu0 0.0
        %1487 = vmatpush1.xpose.msra.mxu0 0.0
        %1488 = vmatprep.subr.mxu0 0.0
        %1489 = vmatpush1.xpose.msra.mxu0 0.0
        %1490 = vmatprep.mubr.f32.mxu0 0.0
        %1491 = vmatmul.mubr.f32.gmra.mrb[0].mxu0 %v1421
        %v1492 = vpop.f32.mrb[0].mxu0
        %v1493 = vadd.f32 0.0, %v1492
        %v1494 = vpop.f32.mrb[0].mxu0
        %1495 = vdwg.mxu0
        %v1497 = vsel %vm1419, %v820, 0
        %v1500 = vsel %vm1419, %v1116, 0
        %1502 = vmatprep.subr.mxu0 0.0
        %1503 = vmatpush1.xpose.msra.mxu0 %v1500
        %1504 = vmatprep.subr.mxu0 0.0
        %1505 = vmatpush1.xpose.msra.mxu0 0.0
        %1506 = vmatprep.subr.mxu0 0.0
        %1507 = vmatpush1.xpose.msra.mxu0 0.0
        %1508 = vmatprep.subr.mxu0 0.0
        %1509 = vmatpush1.xpose.msra.mxu0 0.0
        %1510 = vmatprep.subr.mxu0 0.0
        %1511 = vmatpush1.xpose.msra.mxu0 0.0
        %1512 = vmatprep.subr.mxu0 0.0
        %1513 = vmatpush1.xpose.msra.mxu0 0.0
        %1514 = vmatprep.subr.mxu0 0.0
        %1515 = vmatpush1.xpose.msra.mxu0 0.0
        %1516 = vmatprep.subr.mxu0 0.0
        %1517 = vmatpush1.xpose.msra.mxu0 0.0
        %1518 = vmatprep.subr.mxu0 0.0
        %1519 = vmatpush1.xpose.msra.mxu0 0.0
        %1520 = vmatprep.subr.mxu0 0.0
        %1521 = vmatpush1.xpose.msra.mxu0 0.0
        %1522 = vmatprep.subr.mxu0 0.0
        %1523 = vmatpush1.xpose.msra.mxu0 0.0
        %1524 = vmatprep.subr.mxu0 0.0
        %1525 = vmatpush1.xpose.msra.mxu0 0.0
        %1526 = vmatprep.subr.mxu0 0.0
        %1527 = vmatpush1.xpose.msra.mxu0 0.0
        %1528 = vmatprep.subr.mxu0 0.0
        %1529 = vmatpush1.xpose.msra.mxu0 0.0
        %1530 = vmatprep.subr.mxu0 0.0
        %1531 = vmatpush1.xpose.msra.mxu0 0.0
        %1532 = vmatprep.subr.mxu0 0.0
        %1533 = vmatpush1.xpose.msra.mxu0 0.0
        %1534 = vmatprep.subr.mxu0 0.0
        %1535 = vmatpush1.xpose.msra.mxu0 0.0
        %1536 = vmatprep.subr.mxu0 0.0
        %1537 = vmatpush1.xpose.msra.mxu0 0.0
        %1538 = vmatprep.subr.mxu0 0.0
        %1539 = vmatpush1.xpose.msra.mxu0 0.0
        %1540 = vmatprep.subr.mxu0 0.0
        %1541 = vmatpush1.xpose.msra.mxu0 0.0
        %1542 = vmatprep.subr.mxu0 0.0
        %1543 = vmatpush1.xpose.msra.mxu0 0.0
        %1544 = vmatprep.subr.mxu0 0.0
        %1545 = vmatpush1.xpose.msra.mxu0 0.0
        %1546 = vmatprep.subr.mxu0 0.0
        %1547 = vmatpush1.xpose.msra.mxu0 0.0
        %1548 = vmatprep.subr.mxu0 0.0
        %1549 = vmatpush1.xpose.msra.mxu0 0.0
        %1550 = vmatprep.subr.mxu0 0.0
        %1551 = vmatpush1.xpose.msra.mxu0 0.0
        %1552 = vmatprep.subr.mxu0 0.0
        %1553 = vmatpush1.xpose.msra.mxu0 0.0
        %1554 = vmatprep.subr.mxu0 0.0
        %1555 = vmatpush1.xpose.msra.mxu0 0.0
        %1556 = vmatprep.subr.mxu0 0.0
        %1557 = vmatpush1.xpose.msra.mxu0 0.0
        %1558 = vmatprep.subr.mxu0 0.0
        %1559 = vmatpush1.xpose.msra.mxu0 0.0
        %1560 = vmatprep.subr.mxu0 0.0
        %1561 = vmatpush1.xpose.msra.mxu0 0.0
        %1562 = vmatprep.subr.mxu0 0.0
        %1563 = vmatpush1.xpose.msra.mxu0 0.0
        %1564 = vmatprep.subr.mxu0 0.0
        %1565 = vmatpush1.xpose.msra.mxu0 0.0
        %1566 = vmatprep.mubr.f32.mxu0 0.0
        %1567 = vmatmul.mubr.f32.gmra.mrb[0].mxu0 %v1497
        %v1568 = vpop.f32.mrb[0].mxu0
        %v1569 = vadd.f32 0.0, %v1568
        %v1570 = vpop.f32.mrb[0].mxu0
        %1571 = vdwg.mxu0
        %v1573 = vsel %vm1419, %v821, 0
        %v1576 = vsel %vm1419, %v1117, 0
        %1578 = vmatprep.subr.mxu0 0.0
        %1579 = vmatpush1.xpose.msra.mxu0 %v1576
        %1580 = vmatprep.subr.mxu0 0.0
        %1581 = vmatpush1.xpose.msra.mxu0 0.0
        %1582 = vmatprep.subr.mxu0 0.0
        %1583 = vmatpush1.xpose.msra.mxu0 0.0
        %1584 = vmatprep.subr.mxu0 0.0
        %1585 = vmatpush1.xpose.msra.mxu0 0.0
        %1586 = vmatprep.subr.mxu0 0.0
        %1587 = vmatpush1.xpose.msra.mxu0 0.0
        %1588 = vmatprep.subr.mxu0 0.0
        %1589 = vmatpush1.xpose.msra.mxu0 0.0
        %1590 = vmatprep.subr.mxu0 0.0
        %1591 = vmatpush1.xpose.msra.mxu0 0.0
        %1592 = vmatprep.subr.mxu0 0.0
        %1593 = vmatpush1.xpose.msra.mxu0 0.0
        %1594 = vmatprep.subr.mxu0 0.0
        %1595 = vmatpush1.xpose.msra.mxu0 0.0
        %1596 = vmatprep.subr.mxu0 0.0
        %1597 = vmatpush1.xpose.msra.mxu0 0.0
        %1598 = vmatprep.subr.mxu0 0.0
        %1599 = vmatpush1.xpose.msra.mxu0 0.0
        %1600 = vmatprep.subr.mxu0 0.0
        %1601 = vmatpush1.xpose.msra.mxu0 0.0
        %1602 = vmatprep.subr.mxu0 0.0
        %1603 = vmatpush1.xpose.msra.mxu0 0.0
        %1604 = vmatprep.subr.mxu0 0.0
        %1605 = vmatpush1.xpose.msra.mxu0 0.0
        %1606 = vmatprep.subr.mxu0 0.0
        %1607 = vmatpush1.xpose.msra.mxu0 0.0
        %1608 = vmatprep.subr.mxu0 0.0
        %1609 = vmatpush1.xpose.msra.mxu0 0.0
        %1610 = vmatprep.subr.mxu0 0.0
        %1611 = vmatpush1.xpose.msra.mxu0 0.0
        %1612 = vmatprep.subr.mxu0 0.0
        %1613 = vmatpush1.xpose.msra.mxu0 0.0
        %1614 = vmatprep.subr.mxu0 0.0
        %1615 = vmatpush1.xpose.msra.mxu0 0.0
        %1616 = vmatprep.subr.mxu0 0.0
        %1617 = vmatpush1.xpose.msra.mxu0 0.0
        %1618 = vmatprep.subr.mxu0 0.0
        %1619 = vmatpush1.xpose.msra.mxu0 0.0
        %1620 = vmatprep.subr.mxu0 0.0
        %1621 = vmatpush1.xpose.msra.mxu0 0.0
        %1622 = vmatprep.subr.mxu0 0.0
        %1623 = vmatpush1.xpose.msra.mxu0 0.0
        %1624 = vmatprep.subr.mxu0 0.0
        %1625 = vmatpush1.xpose.msra.mxu0 0.0
        %1626 = vmatprep.subr.mxu0 0.0
        %1627 = vmatpush1.xpose.msra.mxu0 0.0
        %1628 = vmatprep.subr.mxu0 0.0
        %1629 = vmatpush1.xpose.msra.mxu0 0.0
        %1630 = vmatprep.subr.mxu0 0.0
        %1631 = vmatpush1.xpose.msra.mxu0 0.0
        %1632 = vmatprep.subr.mxu0 0.0
        %1633 = vmatpush1.xpose.msra.mxu0 0.0
        %1634 = vmatprep.subr.mxu0 0.0
        %1635 = vmatpush1.xpose.msra.mxu0 0.0
        %1636 = vmatprep.subr.mxu0 0.0
        %1637 = vmatpush1.xpose.msra.mxu0 0.0
        %1638 = vmatprep.subr.mxu0 0.0
        %1639 = vmatpush1.xpose.msra.mxu0 0.0
        %1640 = vmatprep.subr.mxu0 0.0
        %1641 = vmatpush1.xpose.msra.mxu0 0.0
        %1642 = vmatprep.mubr.f32.mxu0 0.0
        %1643 = vmatmul.mubr.f32.gmra.mrb[0].mxu0 %v1573
        %v1644 = vpop.f32.mrb[0].mxu0
        %v1645 = vadd.f32 0.0, %v1644
        %v1646 = vpop.f32.mrb[0].mxu0
        %1647 = vdwg.mxu0
        %v1649 = vsel %vm1419, %v822, 0
        %v1652 = vsel %vm1419, %v1118, 0
        %1654 = vmatprep.subr.mxu0 0.0
        %1655 = vmatpush1.xpose.msra.mxu0 %v1652
        %1656 = vmatprep.subr.mxu0 0.0
        %1657 = vmatpush1.xpose.msra.mxu0 0.0
        %1658 = vmatprep.subr.mxu0 0.0
        %1659 = vmatpush1.xpose.msra.mxu0 0.0
        %1660 = vmatprep.subr.mxu0 0.0
        %1661 = vmatpush1.xpose.msra.mxu0 0.0
        %1662 = vmatprep.subr.mxu0 0.0
        %1663 = vmatpush1.xpose.msra.mxu0 0.0
        %1664 = vmatprep.subr.mxu0 0.0
        %1665 = vmatpush1.xpose.msra.mxu0 0.0
        %1666 = vmatprep.subr.mxu0 0.0
        %1667 = vmatpush1.xpose.msra.mxu0 0.0
        %1668 = vmatprep.subr.mxu0 0.0
        %1669 = vmatpush1.xpose.msra.mxu0 0.0
        %1670 = vmatprep.subr.mxu0 0.0
        %1671 = vmatpush1.xpose.msra.mxu0 0.0
        %1672 = vmatprep.subr.mxu0 0.0
        %1673 = vmatpush1.xpose.msra.mxu0 0.0
        %1674 = vmatprep.subr.mxu0 0.0
        %1675 = vmatpush1.xpose.msra.mxu0 0.0
        %1676 = vmatprep.subr.mxu0 0.0
        %1677 = vmatpush1.xpose.msra.mxu0 0.0
        %1678 = vmatprep.subr.mxu0 0.0
        %1679 = vmatpush1.xpose.msra.mxu0 0.0
        %1680 = vmatprep.subr.mxu0 0.0
        %1681 = vmatpush1.xpose.msra.mxu0 0.0
        %1682 = vmatprep.subr.mxu0 0.0
        %1683 = vmatpush1.xpose.msra.mxu0 0.0
        %1684 = vmatprep.subr.mxu0 0.0
        %1685 = vmatpush1.xpose.msra.mxu0 0.0
        %1686 = vmatprep.subr.mxu0 0.0
        %1687 = vmatpush1.xpose.msra.mxu0 0.0
        %1688 = vmatprep.subr.mxu0 0.0
        %1689 = vmatpush1.xpose.msra.mxu0 0.0
        %1690 = vmatprep.subr.mxu0 0.0
        %1691 = vmatpush1.xpose.msra.mxu0 0.0
        %1692 = vmatprep.subr.mxu0 0.0
        %1693 = vmatpush1.xpose.msra.mxu0 0.0
        %1694 = vmatprep.subr.mxu0 0.0
        %1695 = vmatpush1.xpose.msra.mxu0 0.0
        %1696 = vmatprep.subr.mxu0 0.0
        %1697 = vmatpush1.xpose.msra.mxu0 0.0
        %1698 = vmatprep.subr.mxu0 0.0
        %1699 = vmatpush1.xpose.msra.mxu0 0.0
        %1700 = vmatprep.subr.mxu0 0.0
        %1701 = vmatpush1.xpose.msra.mxu0 0.0
        %1702 = vmatprep.subr.mxu0 0.0
        %1703 = vmatpush1.xpose.msra.mxu0 0.0
        %1704 = vmatprep.subr.mxu0 0.0
        %1705 = vmatpush1.xpose.msra.mxu0 0.0
        %1706 = vmatprep.subr.mxu0 0.0
        %1707 = vmatpush1.xpose.msra.mxu0 0.0
        %1708 = vmatprep.subr.mxu0 0.0
        %1709 = vmatpush1.xpose.msra.mxu0 0.0
        %1710 = vmatprep.subr.mxu0 0.0
        %1711 = vmatpush1.xpose.msra.mxu0 0.0
        %1712 = vmatprep.subr.mxu0 0.0
        %1713 = vmatpush1.xpose.msra.mxu0 0.0
        %1714 = vmatprep.subr.mxu0 0.0
        %1715 = vmatpush1.xpose.msra.mxu0 0.0
        %1716 = vmatprep.subr.mxu0 0.0
        %1717 = vmatpush1.xpose.msra.mxu0 0.0
        %1718 = vmatprep.mubr.f32.mxu0 0.0
        %1719 = vmatmul.mubr.f32.gmra.mrb[0].mxu0 %v1649
        %v1720 = vpop.f32.mrb[0].mxu0
        %v1721 = vadd.f32 0.0, %v1720
        %v1722 = vpop.f32.mrb[0].mxu0
        %1723 = vdwg.mxu0
        %v1725 = vsel %vm1419, %v823, 0
        %v1728 = vsel %vm1419, %v1119, 0
        %1730 = vmatprep.subr.mxu0 0.0
        %1731 = vmatpush1.xpose.msra.mxu0 %v1728
        %1732 = vmatprep.subr.mxu0 0.0
        %1733 = vmatpush1.xpose.msra.mxu0 0.0
        %1734 = vmatprep.subr.mxu0 0.0
        %1735 = vmatpush1.xpose.msra.mxu0 0.0
        %1736 = vmatprep.subr.mxu0 0.0
        %1737 = vmatpush1.xpose.msra.mxu0 0.0
        %1738 = vmatprep.subr.mxu0 0.0
        %1739 = vmatpush1.xpose.msra.mxu0 0.0
        %1740 = vmatprep.subr.mxu0 0.0
        %1741 = vmatpush1.xpose.msra.mxu0 0.0
        %1742 = vmatprep.subr.mxu0 0.0
        %1743 = vmatpush1.xpose.msra.mxu0 0.0
        %1744 = vmatprep.subr.mxu0 0.0
        %1745 = vmatpush1.xpose.msra.mxu0 0.0
        %1746 = vmatprep.subr.mxu0 0.0
        %1747 = vmatpush1.xpose.msra.mxu0 0.0
        %1748 = vmatprep.subr.mxu0 0.0
        %1749 = vmatpush1.xpose.msra.mxu0 0.0
        %1750 = vmatprep.subr.mxu0 0.0
        %1751 = vmatpush1.xpose.msra.mxu0 0.0
        %1752 = vmatprep.subr.mxu0 0.0
        %1753 = vmatpush1.xpose.msra.mxu0 0.0
        %1754 = vmatprep.subr.mxu0 0.0
        %1755 = vmatpush1.xpose.msra.mxu0 0.0
        %1756 = vmatprep.subr.mxu0 0.0
        %1757 = vmatpush1.xpose.msra.mxu0 0.0
        %1758 = vmatprep.subr.mxu0 0.0
        %1759 = vmatpush1.xpose.msra.mxu0 0.0
        %1760 = vmatprep.subr.mxu0 0.0
        %1761 = vmatpush1.xpose.msra.mxu0 0.0
        %1762 = vmatprep.subr.mxu0 0.0
        %1763 = vmatpush1.xpose.msra.mxu0 0.0
        %1764 = vmatprep.subr.mxu0 0.0
        %1765 = vmatpush1.xpose.msra.mxu0 0.0
        %1766 = vmatprep.subr.mxu0 0.0
        %1767 = vmatpush1.xpose.msra.mxu0 0.0
        %1768 = vmatprep.subr.mxu0 0.0
        %1769 = vmatpush1.xpose.msra.mxu0 0.0
        %1770 = vmatprep.subr.mxu0 0.0
        %1771 = vmatpush1.xpose.msra.mxu0 0.0
        %1772 = vmatprep.subr.mxu0 0.0
        %1773 = vmatpush1.xpose.msra.mxu0 0.0
        %1774 = vmatprep.subr.mxu0 0.0
        %1775 = vmatpush1.xpose.msra.mxu0 0.0
        %1776 = vmatprep.subr.mxu0 0.0
        %1777 = vmatpush1.xpose.msra.mxu0 0.0
        %1778 = vmatprep.subr.mxu0 0.0
        %1779 = vmatpush1.xpose.msra.mxu0 0.0
        %1780 = vmatprep.subr.mxu0 0.0
        %1781 = vmatpush1.xpose.msra.mxu0 0.0
        %1782 = vmatprep.subr.mxu0 0.0
        %1783 = vmatpush1.xpose.msra.mxu0 0.0
        %1784 = vmatprep.subr.mxu0 0.0
        %1785 = vmatpush1.xpose.msra.mxu0 0.0
        %1786 = vmatprep.subr.mxu0 0.0
        %1787 = vmatpush1.xpose.msra.mxu0 0.0
        %1788 = vmatprep.subr.mxu0 0.0
        %1789 = vmatpush1.xpose.msra.mxu0 0.0
        %1790 = vmatprep.subr.mxu0 0.0
        %1791 = vmatpush1.xpose.msra.mxu0 0.0
        %1792 = vmatprep.subr.mxu0 0.0
        %1793 = vmatpush1.xpose.msra.mxu0 0.0
        %1794 = vmatprep.mubr.f32.mxu0 0.0
        %1795 = vmatmul.mubr.f32.gmra.mrb[0].mxu0 %v1725
        %v1796 = vpop.f32.mrb[0].mxu0
        %v1797 = vadd.f32 0.0, %v1796
        %v1798 = vpop.f32.mrb[0].mxu0
        %1799 = vdwg.mxu0
        %v1801 = vsel %vm1419, %v824, 0
        %v1804 = vsel %vm1419, %v1120, 0
        %1806 = vmatprep.subr.mxu0 0.0
        %1807 = vmatpush1.xpose.msra.mxu0 %v1804
        %1808 = vmatprep.subr.mxu0 0.0
        %1809 = vmatpush1.xpose.msra.mxu0 0.0
        %1810 = vmatprep.subr.mxu0 0.0
        %1811 = vmatpush1.xpose.msra.mxu0 0.0
        %1812 = vmatprep.subr.mxu0 0.0
        %1813 = vmatpush1.xpose.msra.mxu0 0.0
        %1814 = vmatprep.subr.mxu0 0.0
        %1815 = vmatpush1.xpose.msra.mxu0 0.0
        %1816 = vmatprep.subr.mxu0 0.0
        %1817 = vmatpush1.xpose.msra.mxu0 0.0
        %1818 = vmatprep.subr.mxu0 0.0
        %1819 = vmatpush1.xpose.msra.mxu0 0.0
        %1820 = vmatprep.subr.mxu0 0.0
        %1821 = vmatpush1.xpose.msra.mxu0 0.0
        %1822 = vmatprep.subr.mxu0 0.0
        %1823 = vmatpush1.xpose.msra.mxu0 0.0
        %1824 = vmatprep.subr.mxu0 0.0
        %1825 = vmatpush1.xpose.msra.mxu0 0.0
        %1826 = vmatprep.subr.mxu0 0.0
        %1827 = vmatpush1.xpose.msra.mxu0 0.0
        %1828 = vmatprep.subr.mxu0 0.0
        %1829 = vmatpush1.xpose.msra.mxu0 0.0
        %1830 = vmatprep.subr.mxu0 0.0
        %1831 = vmatpush1.xpose.msra.mxu0 0.0
        %1832 = vmatprep.subr.mxu0 0.0
        %1833 = vmatpush1.xpose.msra.mxu0 0.0
        %1834 = vmatprep.subr.mxu0 0.0
        %1835 = vmatpush1.xpose.msra.mxu0 0.0
        %1836 = vmatprep.subr.mxu0 0.0
        %1837 = vmatpush1.xpose.msra.mxu0 0.0
        %1838 = vmatprep.subr.mxu0 0.0
        %1839 = vmatpush1.xpose.msra.mxu0 0.0
        %1840 = vmatprep.subr.mxu0 0.0
        %1841 = vmatpush1.xpose.msra.mxu0 0.0
        %1842 = vmatprep.subr.mxu0 0.0
        %1843 = vmatpush1.xpose.msra.mxu0 0.0
        %1844 = vmatprep.subr.mxu0 0.0
        %1845 = vmatpush1.xpose.msra.mxu0 0.0
        %1846 = vmatprep.subr.mxu0 0.0
        %1847 = vmatpush1.xpose.msra.mxu0 0.0
        %1848 = vmatprep.subr.mxu0 0.0
        %1849 = vmatpush1.xpose.msra.mxu0 0.0
        %1850 = vmatprep.subr.mxu0 0.0
        %1851 = vmatpush1.xpose.msra.mxu0 0.0
        %1852 = vmatprep.subr.mxu0 0.0
        %1853 = vmatpush1.xpose.msra.mxu0 0.0
        %1854 = vmatprep.subr.mxu0 0.0
        %1855 = vmatpush1.xpose.msra.mxu0 0.0
        %1856 = vmatprep.subr.mxu0 0.0
        %1857 = vmatpush1.xpose.msra.mxu0 0.0
        %1858 = vmatprep.subr.mxu0 0.0
        %1859 = vmatpush1.xpose.msra.mxu0 0.0
        %1860 = vmatprep.subr.mxu0 0.0
        %1861 = vmatpush1.xpose.msra.mxu0 0.0
        %1862 = vmatprep.subr.mxu0 0.0
        %1863 = vmatpush1.xpose.msra.mxu0 0.0
        %1864 = vmatprep.subr.mxu0 0.0
        %1865 = vmatpush1.xpose.msra.mxu0 0.0
        %1866 = vmatprep.subr.mxu0 0.0
        %1867 = vmatpush1.xpose.msra.mxu0 0.0
        %1868 = vmatprep.subr.mxu0 0.0
        %1869 = vmatpush1.xpose.msra.mxu0 0.0
        %1870 = vmatprep.mubr.f32.mxu0 0.0
        %1871 = vmatmul.mubr.f32.gmra.mrb[0].mxu0 %v1801
        %v1872 = vpop.f32.mrb[0].mxu0
        %v1873 = vadd.f32 0.0, %v1872
        %v1874 = vpop.f32.mrb[0].mxu0
        %1875 = vdwg.mxu0
        %v1877 = vsel %vm1419, %v825, 0
        %v1880 = vsel %vm1419, %v1121, 0
        %1882 = vmatprep.subr.mxu0 0.0
        %1883 = vmatpush1.xpose.msra.mxu0 %v1880
        %1884 = vmatprep.subr.mxu0 0.0
        %1885 = vmatpush1.xpose.msra.mxu0 0.0
        %1886 = vmatprep.subr.mxu0 0.0
        %1887 = vmatpush1.xpose.msra.mxu0 0.0
        %1888 = vmatprep.subr.mxu0 0.0
        %1889 = vmatpush1.xpose.msra.mxu0 0.0
        %1890 = vmatprep.subr.mxu0 0.0
        %1891 = vmatpush1.xpose.msra.mxu0 0.0
        %1892 = vmatprep.subr.mxu0 0.0
        %1893 = vmatpush1.xpose.msra.mxu0 0.0
        %1894 = vmatprep.subr.mxu0 0.0
        %1895 = vmatpush1.xpose.msra.mxu0 0.0
        %1896 = vmatprep.subr.mxu0 0.0
        %1897 = vmatpush1.xpose.msra.mxu0 0.0
        %1898 = vmatprep.subr.mxu0 0.0
        %1899 = vmatpush1.xpose.msra.mxu0 0.0
        %1900 = vmatprep.subr.mxu0 0.0
        %1901 = vmatpush1.xpose.msra.mxu0 0.0
        %1902 = vmatprep.subr.mxu0 0.0
        %1903 = vmatpush1.xpose.msra.mxu0 0.0
        %1904 = vmatprep.subr.mxu0 0.0
        %1905 = vmatpush1.xpose.msra.mxu0 0.0
        %1906 = vmatprep.subr.mxu0 0.0
        %1907 = vmatpush1.xpose.msra.mxu0 0.0
        %1908 = vmatprep.subr.mxu0 0.0
        %1909 = vmatpush1.xpose.msra.mxu0 0.0
        %1910 = vmatprep.subr.mxu0 0.0
        %1911 = vmatpush1.xpose.msra.mxu0 0.0
        %1912 = vmatprep.subr.mxu0 0.0
        %1913 = vmatpush1.xpose.msra.mxu0 0.0
        %1914 = vmatprep.subr.mxu0 0.0
        %1915 = vmatpush1.xpose.msra.mxu0 0.0
        %1916 = vmatprep.subr.mxu0 0.0
        %1917 = vmatpush1.xpose.msra.mxu0 0.0
        %1918 = vmatprep.subr.mxu0 0.0
        %1919 = vmatpush1.xpose.msra.mxu0 0.0
        %1920 = vmatprep.subr.mxu0 0.0
        %1921 = vmatpush1.xpose.msra.mxu0 0.0
        %1922 = vmatprep.subr.mxu0 0.0
        %1923 = vmatpush1.xpose.msra.mxu0 0.0
        %1924 = vmatprep.subr.mxu0 0.0
        %1925 = vmatpush1.xpose.msra.mxu0 0.0
        %1926 = vmatprep.subr.mxu0 0.0
        %1927 = vmatpush1.xpose.msra.mxu0 0.0
        %1928 = vmatprep.subr.mxu0 0.0
        %1929 = vmatpush1.xpose.msra.mxu0 0.0
        %1930 = vmatprep.subr.mxu0 0.0
        %1931 = vmatpush1.xpose.msra.mxu0 0.0
        %1932 = vmatprep.subr.mxu0 0.0
        %1933 = vmatpush1.xpose.msra.mxu0 0.0
        %1934 = vmatprep.subr.mxu0 0.0
        %1935 = vmatpush1.xpose.msra.mxu0 0.0
        %1936 = vmatprep.subr.mxu0 0.0
        %1937 = vmatpush1.xpose.msra.mxu0 0.0
        %1938 = vmatprep.subr.mxu0 0.0
        %1939 = vmatpush1.xpose.msra.mxu0 0.0
        %1940 = vmatprep.subr.mxu0 0.0
        %1941 = vmatpush1.xpose.msra.mxu0 0.0
        %1942 = vmatprep.subr.mxu0 0.0
        %1943 = vmatpush1.xpose.msra.mxu0 0.0
        %1944 = vmatprep.subr.mxu0 0.0
        %1945 = vmatpush1.xpose.msra.mxu0 0.0
        %1946 = vmatprep.mubr.f32.mxu0 0.0
        %1947 = vmatmul.mubr.f32.gmra.mrb[0].mxu0 %v1877
        %v1948 = vpop.f32.mrb[0].mxu0
        %v1949 = vadd.f32 0.0, %v1948
        %v1950 = vpop.f32.mrb[0].mxu0
        %1951 = vdwg.mxu0
        %v1953 = vsel %vm1419, %v826, 0
        %v1956 = vsel %vm1419, %v1122, 0
        %1958 = vmatprep.subr.mxu0 0.0
        %1959 = vmatpush1.xpose.msra.mxu0 %v1956
        %1960 = vmatprep.subr.mxu0 0.0
        %1961 = vmatpush1.xpose.msra.mxu0 0.0
        %1962 = vmatprep.subr.mxu0 0.0
        %1963 = vmatpush1.xpose.msra.mxu0 0.0
        %1964 = vmatprep.subr.mxu0 0.0
        %1965 = vmatpush1.xpose.msra.mxu0 0.0
        %1966 = vmatprep.subr.mxu0 0.0
        %1967 = vmatpush1.xpose.msra.mxu0 0.0
        %1968 = vmatprep.subr.mxu0 0.0
        %1969 = vmatpush1.xpose.msra.mxu0 0.0
        %1970 = vmatprep.subr.mxu0 0.0
        %1971 = vmatpush1.xpose.msra.mxu0 0.0
        %1972 = vmatprep.subr.mxu0 0.0
        %1973 = vmatpush1.xpose.msra.mxu0 0.0
        %1974 = vmatprep.subr.mxu0 0.0
        %1975 = vmatpush1.xpose.msra.mxu0 0.0
        %1976 = vmatprep.subr.mxu0 0.0
        %1977 = vmatpush1.xpose.msra.mxu0 0.0
        %1978 = vmatprep.subr.mxu0 0.0
        %1979 = vmatpush1.xpose.msra.mxu0 0.0
        %1980 = vmatprep.subr.mxu0 0.0
        %1981 = vmatpush1.xpose.msra.mxu0 0.0
        %1982 = vmatprep.subr.mxu0 0.0
        %1983 = vmatpush1.xpose.msra.mxu0 0.0
        %1984 = vmatprep.subr.mxu0 0.0
        %1985 = vmatpush1.xpose.msra.mxu0 0.0
        %1986 = vmatprep.subr.mxu0 0.0
        %1987 = vmatpush1.xpose.msra.mxu0 0.0
        %1988 = vmatprep.subr.mxu0 0.0
        %1989 = vmatpush1.xpose.msra.mxu0 0.0
        %1990 = vmatprep.subr.mxu0 0.0
        %1991 = vmatpush1.xpose.msra.mxu0 0.0
        %1992 = vmatprep.subr.mxu0 0.0
        %1993 = vmatpush1.xpose.msra.mxu0 0.0
        %1994 = vmatprep.subr.mxu0 0.0
        %1995 = vmatpush1.xpose.msra.mxu0 0.0
        %1996 = vmatprep.subr.mxu0 0.0
        %1997 = vmatpush1.xpose.msra.mxu0 0.0
        %1998 = vmatprep.subr.mxu0 0.0
        %1999 = vmatpush1.xpose.msra.mxu0 0.0
        %2000 = vmatprep.subr.mxu0 0.0
        %2001 = vmatpush1.xpose.msra.mxu0 0.0
        %2002 = vmatprep.subr.mxu0 0.0
        %2003 = vmatpush1.xpose.msra.mxu0 0.0
        %2004 = vmatprep.subr.mxu0 0.0
        %2005 = vmatpush1.xpose.msra.mxu0 0.0
        %2006 = vmatprep.subr.mxu0 0.0
        %2007 = vmatpush1.xpose.msra.mxu0 0.0
        %2008 = vmatprep.subr.mxu0 0.0
        %2009 = vmatpush1.xpose.msra.mxu0 0.0
        %2010 = vmatprep.subr.mxu0 0.0
        %2011 = vmatpush1.xpose.msra.mxu0 0.0
        %2012 = vmatprep.subr.mxu0 0.0
        %2013 = vmatpush1.xpose.msra.mxu0 0.0
        %2014 = vmatprep.subr.mxu0 0.0
        %2015 = vmatpush1.xpose.msra.mxu0 0.0
        %2016 = vmatprep.subr.mxu0 0.0
        %2017 = vmatpush1.xpose.msra.mxu0 0.0
        %2018 = vmatprep.subr.mxu0 0.0
        %2019 = vmatpush1.xpose.msra.mxu0 0.0
        %2020 = vmatprep.subr.mxu0 0.0
        %2021 = vmatpush1.xpose.msra.mxu0 0.0
        %2022 = vmatprep.mubr.f32.mxu0 0.0
        %2023 = vmatmul.mubr.f32.gmra.mrb[0].mxu0 %v1953
        %v2024 = vpop.f32.mrb[0].mxu0
        %v2025 = vadd.f32 0.0, %v2024
        %v2026 = vpop.f32.mrb[0].mxu0
        %2027 = vdwg.mxu0
        %v2028 = vmul.f32 %v1493, 0.5
        %v2029 = vmul.f32 %v1569, 0.5
        %v2030 = vmul.f32 %v1645, 0.5
        %v2031 = vmul.f32 %v1721, 0.5
        %v2032 = vmul.f32 %v1797, 0.5
        %v2033 = vmul.f32 %v1873, 0.5
        %v2034 = vmul.f32 %v1949, 0.5
        %v2035 = vmul.f32 %v2025, 0.5
        %vm2036 = vcmask 64512
        %v2037 = vsel %vm2036, %v2028, -inf
        %2038 = vmax.xlane.f32.xlu0 %v2037
        %v2039 = vpop.xlane.xlu0 %2038
        %v2040 = vsel %vm2036, %v2029, -inf
        %2041 = vmax.xlane.f32.xlu0 %v2040
        %v2042 = vpop.xlane.xlu0 %2041
        %v2043 = vsel %vm2036, %v2030, -inf
        %2044 = vmax.xlane.f32.xlu0 %v2043
        %v2045 = vpop.xlane.xlu0 %2044
        %v2046 = vsel %vm2036, %v2031, -inf
        %2047 = vmax.xlane.f32.xlu0 %v2046
        %v2048 = vpop.xlane.xlu0 %2047
        %v2049 = vsel %vm2036, %v2032, -inf
        %2050 = vmax.xlane.f32.xlu0 %v2049
        %v2051 = vpop.xlane.xlu0 %2050
        %v2052 = vsel %vm2036, %v2033, -inf
        %2053 = vmax.xlane.f32.xlu0 %v2052
        %v2054 = vpop.xlane.xlu0 %2053
        %v2055 = vsel %vm2036, %v2034, -inf
        %2056 = vmax.xlane.f32.xlu0 %v2055
        %v2057 = vpop.xlane.xlu0 %2056
        %v2058 = vsel %vm2036, %v2035, -inf
        %2059 = vmax.xlane.f32.xlu0 %v2058
        %v2060 = vpop.xlane.xlu0 %2059
        %v2061 = vsub.f32 %v2028, %v2039
        %v2062 = vsub.f32 %v2029, %v2042
        %v2063 = vsub.f32 %v2030, %v2045
        %v2064 = vsub.f32 %v2031, %v2048
        %v2065 = vsub.f32 %v2032, %v2051
        %v2066 = vsub.f32 %v2033, %v2054
        %v2067 = vsub.f32 %v2034, %v2057
        %v2068 = vsub.f32 %v2035, %v2060
        %v2069 = vmul.f32 %v2061, 1.442695
        %v2070 = vpow.pop %v2069
        %v2071 = vmul.f32 %v2062, 1.442695
        %v2072 = vpow.pop %v2071
        %v2073 = vmul.f32 %v2063, 1.442695
        %v2074 = vpow.pop %v2073
        %v2075 = vmul.f32 %v2064, 1.442695
        %v2076 = vpow.pop %v2075
        %v2077 = vmul.f32 %v2065, 1.442695
        %v2078 = vpow.pop %v2077
        %v2079 = vmul.f32 %v2066, 1.442695
        %v2080 = vpow.pop %v2079
        %v2081 = vmul.f32 %v2067, 1.442695
        %v2082 = vpow.pop %v2081
        %v2083 = vmul.f32 %v2068, 1.442695
        %v2084 = vpow.pop %v2083
        %v2085 = vsel %vm2036, %v2070, 0.0
        %2086 = vadd.xlane.f32.xlu0 %v2085
        %v2087 = vpop.xlane.xlu0 %2086
        %v2088 = vsel %vm2036, %v2072, 0.0
        %2089 = vadd.xlane.f32.xlu0 %v2088
        %v2090 = vpop.xlane.xlu0 %2089
        %v2091 = vsel %vm2036, %v2074, 0.0
        %2092 = vadd.xlane.f32.xlu0 %v2091
        %v2093 = vpop.xlane.xlu0 %2092
        %v2094 = vsel %vm2036, %v2076, 0.0
        %2095 = vadd.xlane.f32.xlu0 %v2094
        %v2096 = vpop.xlane.xlu0 %2095
        %v2097 = vsel %vm2036, %v2078, 0.0
        %2098 = vadd.xlane.f32.xlu0 %v2097
        %v2099 = vpop.xlane.xlu0 %2098
        %v2100 = vsel %vm2036, %v2080, 0.0
        %2101 = vadd.xlane.f32.xlu0 %v2100
        %v2102 = vpop.xlane.xlu0 %2101
        %v2103 = vsel %vm2036, %v2082, 0.0
        %2104 = vadd.xlane.f32.xlu0 %v2103
        %v2105 = vpop.xlane.xlu0 %2104
        %v2106 = vsel %vm2036, %v2084, 0.0
        %2107 = vadd.xlane.f32.xlu0 %v2106
        %v2108 = vpop.xlane.xlu0 %2107
        %v2109 = vrcp.pop %v2087
        %v2110 = vrcp.pop %v2090
        %v2111 = vrcp.pop %v2093
        %v2112 = vrcp.pop %v2096
        %v2113 = vrcp.pop %v2099
        %v2114 = vrcp.pop %v2102
        %v2115 = vrcp.pop %v2105
        %v2116 = vrcp.pop %v2108
        %v2117 = vmul.f32 %v2070, %v2109
        %v2118 = vmul.f32 %v2072, %v2110
        %v2119 = vmul.f32 %v2074, %v2111
        %v2120 = vmul.f32 %v2076, %v2112
        %v2121 = vmul.f32 %v2078, %v2113
        %v2122 = vmul.f32 %v2080, %v2114
        %v2123 = vmul.f32 %v2082, %v2115
        %v2124 = vmul.f32 %v2084, %v2116
        %v2126 = vsel %vm2036, %v2117, 0
        %2128 = vmatprep.subr.mxu0 0.0
        %2129 = vmatpush1.msra.mxu0 %v1411
        %2130 = vmatprep.subr.mxu0 0.0
        %2131 = vmatpush1.msra.mxu0 0.0
        %2132 = vmatprep.subr.mxu0 0.0
        %2133 = vmatpush1.msra.mxu0 0.0
        %2134 = vmatprep.subr.mxu0 0.0
        %2135 = vmatpush1.msra.mxu0 0.0
        %2136 = vmatprep.subr.mxu0 0.0
        %2137 = vmatpush1.msra.mxu0 0.0
        %2138 = vmatprep.subr.mxu0 0.0
        %2139 = vmatpush1.msra.mxu0 0.0
        %2140 = vmatprep.subr.mxu0 0.0
        %2141 = vmatpush1.msra.mxu0 0.0
        %2142 = vmatprep.subr.mxu0 0.0
        %2143 = vmatpush1.msra.mxu0 0.0
        %2144 = vmatprep.subr.mxu0 0.0
        %2145 = vmatpush1.msra.mxu0 0.0
        %2146 = vmatprep.subr.mxu0 0.0
        %2147 = vmatpush1.msra.mxu0 0.0
        %2148 = vmatprep.subr.mxu0 0.0
        %2149 = vmatpush1.msra.mxu0 0.0
        %2150 = vmatprep.subr.mxu0 0.0
        %2151 = vmatpush1.msra.mxu0 0.0
        %2152 = vmatprep.subr.mxu0 0.0
        %2153 = vmatpush1.msra.mxu0 0.0
        %2154 = vmatprep.subr.mxu0 0.0
        %2155 = vmatpush1.msra.mxu0 0.0
        %2156 = vmatprep.subr.mxu0 0.0
        %2157 = vmatpush1.msra.mxu0 0.0
        %2158 = vmatprep.subr.mxu0 0.0
        %2159 = vmatpush1.msra.mxu0 0.0
        %2160 = vmatprep.subr.mxu0 0.0
        %2161 = vmatpush1.msra.mxu0 0.0
        %2162 = vmatprep.subr.mxu0 0.0
        %2163 = vmatpush1.msra.mxu0 0.0
        %2164 = vmatprep.subr.mxu0 0.0
        %2165 = vmatpush1.msra.mxu0 0.0
        %2166 = vmatprep.subr.mxu0 0.0
        %2167 = vmatpush1.msra.mxu0 0.0
        %2168 = vmatprep.subr.mxu0 0.0
        %2169 = vmatpush1.msra.mxu0 0.0
        %2170 = vmatprep.subr.mxu0 0.0
        %2171 = vmatpush1.msra.mxu0 0.0
        %2172 = vmatprep.subr.mxu0 0.0
        %2173 = vmatpush1.msra.mxu0 0.0
        %2174 = vmatprep.subr.mxu0 0.0
        %2175 = vmatpush1.msra.mxu0 0.0
        %2176 = vmatprep.subr.mxu0 0.0
        %2177 = vmatpush1.msra.mxu0 0.0
        %2178 = vmatprep.subr.mxu0 0.0
        %2179 = vmatpush1.msra.mxu0 0.0
        %2180 = vmatprep.subr.mxu0 0.0
        %2181 = vmatpush1.msra.mxu0 0.0
        %2182 = vmatprep.subr.mxu0 0.0
        %2183 = vmatpush1.msra.mxu0 0.0
        %2184 = vmatprep.subr.mxu0 0.0
        %2185 = vmatpush1.msra.mxu0 0.0
        %2186 = vmatprep.subr.mxu0 0.0
        %2187 = vmatpush1.msra.mxu0 0.0
        %2188 = vmatprep.subr.mxu0 0.0
        %2189 = vmatpush1.msra.mxu0 0.0
        %2190 = vmatprep.subr.mxu0 0.0
        %2191 = vmatpush1.msra.mxu0 0.0
        %2192 = vmatprep.mubr.f32.mxu0 0.0
        %2193 = vmatmul.mubr.f32.gmra.mrb[0].mxu0 %v2126
        %v2194 = vpop.f32.mrb[0].mxu0
        %v2195 = vadd.f32 0.0, %v2194
        %v2196 = vpop.f32.mrb[0].mxu0
        %2197 = vdwg.mxu0
        %v2199 = vsel %vm2036, %v2118, 0
        %2201 = vmatprep.subr.mxu0 0.0
        %2202 = vmatpush1.msra.mxu0 %v1412
        %2203 = vmatprep.subr.mxu0 0.0
        %2204 = vmatpush1.msra.mxu0 0.0
        %2205 = vmatprep.subr.mxu0 0.0
        %2206 = vmatpush1.msra.mxu0 0.0
        %2207 = vmatprep.subr.mxu0 0.0
        %2208 = vmatpush1.msra.mxu0 0.0
        %2209 = vmatprep.subr.mxu0 0.0
        %2210 = vmatpush1.msra.mxu0 0.0
        %2211 = vmatprep.subr.mxu0 0.0
        %2212 = vmatpush1.msra.mxu0 0.0
        %2213 = vmatprep.subr.mxu0 0.0
        %2214 = vmatpush1.msra.mxu0 0.0
        %2215 = vmatprep.subr.mxu0 0.0
        %2216 = vmatpush1.msra.mxu0 0.0
        %2217 = vmatprep.subr.mxu0 0.0
        %2218 = vmatpush1.msra.mxu0 0.0
        %2219 = vmatprep.subr.mxu0 0.0
        %2220 = vmatpush1.msra.mxu0 0.0
        %2221 = vmatprep.subr.mxu0 0.0
        %2222 = vmatpush1.msra.mxu0 0.0
        %2223 = vmatprep.subr.mxu0 0.0
        %2224 = vmatpush1.msra.mxu0 0.0
        %2225 = vmatprep.subr.mxu0 0.0
        %2226 = vmatpush1.msra.mxu0 0.0
        %2227 = vmatprep.subr.mxu0 0.0
        %2228 = vmatpush1.msra.mxu0 0.0
        %2229 = vmatprep.subr.mxu0 0.0
        %2230 = vmatpush1.msra.mxu0 0.0
        %2231 = vmatprep.subr.mxu0 0.0
        %2232 = vmatpush1.msra.mxu0 0.0
        %2233 = vmatprep.subr.mxu0 0.0
        %2234 = vmatpush1.msra.mxu0 0.0
        %2235 = vmatprep.subr.mxu0 0.0
        %2236 = vmatpush1.msra.mxu0 0.0
        %2237 = vmatprep.subr.mxu0 0.0
        %2238 = vmatpush1.msra.mxu0 0.0
        %2239 = vmatprep.subr.mxu0 0.0
        %2240 = vmatpush1.msra.mxu0 0.0
        %2241 = vmatprep.subr.mxu0 0.0
        %2242 = vmatpush1.msra.mxu0 0.0
        %2243 = vmatprep.subr.mxu0 0.0
        %2244 = vmatpush1.msra.mxu0 0.0
        %2245 = vmatprep.subr.mxu0 0.0
        %2246 = vmatpush1.msra.mxu0 0.0
        %2247 = vmatprep.subr.mxu0 0.0
        %2248 = vmatpush1.msra.mxu0 0.0
        %2249 = vmatprep.subr.mxu0 0.0
        %2250 = vmatpush1.msra.mxu0 0.0
        %2251 = vmatprep.subr.mxu0 0.0
        %2252 = vmatpush1.msra.mxu0 0.0
        %2253 = vmatprep.subr.mxu0 0.0
        %2254 = vmatpush1.msra.mxu0 0.0
        %2255 = vmatprep.subr.mxu0 0.0
        %2256 = vmatpush1.msra.mxu0 0.0
        %2257 = vmatprep.subr.mxu0 0.0
        %2258 = vmatpush1.msra.mxu0 0.0
        %2259 = vmatprep.subr.mxu0 0.0
        %2260 = vmatpush1.msra.mxu0 0.0
        %2261 = vmatprep.subr.mxu0 0.0
        %2262 = vmatpush1.msra.mxu0 0.0
        %2263 = vmatprep.subr.mxu0 0.0
        %2264 = vmatpush1.msra.mxu0 0.0
        %2265 = vmatprep.mubr.f32.mxu0 0.0
        %2266 = vmatmul.mubr.f32.gmra.mrb[0].mxu0 %v2199
        %v2267 = vpop.f32.mrb[0].mxu0
        %v2268 = vadd.f32 0.0, %v2267
        %v2269 = vpop.f32.mrb[0].mxu0
        %2270 = vdwg.mxu0
        %v2272 = vsel %vm2036, %v2119, 0
        %2274 = vmatprep.subr.mxu0 0.0
        %2275 = vmatpush1.msra.mxu0 %v1413
        %2276 = vmatprep.subr.mxu0 0.0
        %2277 = vmatpush1.msra.mxu0 0.0
        %2278 = vmatprep.subr.mxu0 0.0
        %2279 = vmatpush1.msra.mxu0 0.0
        %2280 = vmatprep.subr.mxu0 0.0
        %2281 = vmatpush1.msra.mxu0 0.0
        %2282 = vmatprep.subr.mxu0 0.0
        %2283 = vmatpush1.msra.mxu0 0.0
        %2284 = vmatprep.subr.mxu0 0.0
        %2285 = vmatpush1.msra.mxu0 0.0
        %2286 = vmatprep.subr.mxu0 0.0
        %2287 = vmatpush1.msra.mxu0 0.0
        %2288 = vmatprep.subr.mxu0 0.0
        %2289 = vmatpush1.msra.mxu0 0.0
        %2290 = vmatprep.subr.mxu0 0.0
        %2291 = vmatpush1.msra.mxu0 0.0
        %2292 = vmatprep.subr.mxu0 0.0
        %2293 = vmatpush1.msra.mxu0 0.0
        %2294 = vmatprep.subr.mxu0 0.0
        %2295 = vmatpush1.msra.mxu0 0.0
        %2296 = vmatprep.subr.mxu0 0.0
        %2297 = vmatpush1.msra.mxu0 0.0
        %2298 = vmatprep.subr.mxu0 0.0
        %2299 = vmatpush1.msra.mxu0 0.0
        %2300 = vmatprep.subr.mxu0 0.0
        %2301 = vmatpush1.msra.mxu0 0.0
        %2302 = vmatprep.subr.mxu0 0.0
        %2303 = vmatpush1.msra.mxu0 0.0
        %2304 = vmatprep.subr.mxu0 0.0
        %2305 = vmatpush1.msra.mxu0 0.0
        %2306 = vmatprep.subr.mxu0 0.0
        %2307 = vmatpush1.msra.mxu0 0.0
        %2308 = vmatprep.subr.mxu0 0.0
        %2309 = vmatpush1.msra.mxu0 0.0
        %2310 = vmatprep.subr.mxu0 0.0
        %2311 = vmatpush1.msra.mxu0 0.0
        %2312 = vmatprep.subr.mxu0 0.0
        %2313 = vmatpush1.msra.mxu0 0.0
        %2314 = vmatprep.subr.mxu0 0.0
        %2315 = vmatpush1.msra.mxu0 0.0
        %2316 = vmatprep.subr.mxu0 0.0
        %2317 = vmatpush1.msra.mxu0 0.0
        %2318 = vmatprep.subr.mxu0 0.0
        %2319 = vmatpush1.msra.mxu0 0.0
        %2320 = vmatprep.subr.mxu0 0.0
        %2321 = vmatpush1.msra.mxu0 0.0
        %2322 = vmatprep.subr.mxu0 0.0
        %2323 = vmatpush1.msra.mxu0 0.0
        %2324 = vmatprep.subr.mxu0 0.0
        %2325 = vmatpush1.msra.mxu0 0.0
        %2326 = vmatprep.subr.mxu0 0.0
        %2327 = vmatpush1.msra.mxu0 0.0
        %2328 = vmatprep.subr.mxu0 0.0
        %2329 = vmatpush1.msra.mxu0 0.0
        %2330 = vmatprep.subr.mxu0 0.0
        %2331 = vmatpush1.msra.mxu0 0.0
        %2332 = vmatprep.subr.mxu0 0.0
        %2333 = vmatpush1.msra.mxu0 0.0
        %2334 = vmatprep.subr.mxu0 0.0
        %2335 = vmatpush1.msra.mxu0 0.0
        %2336 = vmatprep.subr.mxu0 0.0
        %2337 = vmatpush1.msra.mxu0 0.0
        %2338 = vmatprep.mubr.f32.mxu0 0.0
        %2339 = vmatmul.mubr.f32.gmra.mrb[0].mxu0 %v2272
        %v2340 = vpop.f32.mrb[0].mxu0
        %v2341 = vadd.f32 0.0, %v2340
        %v2342 = vpop.f32.mrb[0].mxu0
        %2343 = vdwg.mxu0
        %v2345 = vsel %vm2036, %v2120, 0
        %2347 = vmatprep.subr.mxu0 0.0
        %2348 = vmatpush1.msra.mxu0 %v1414
        %2349 = vmatprep.subr.mxu0 0.0
        %2350 = vmatpush1.msra.mxu0 0.0
        %2351 = vmatprep.subr.mxu0 0.0
        %2352 = vmatpush1.msra.mxu0 0.0
        %2353 = vmatprep.subr.mxu0 0.0
        %2354 = vmatpush1.msra.mxu0 0.0
        %2355 = vmatprep.subr.mxu0 0.0
        %2356 = vmatpush1.msra.mxu0 0.0
        %2357 = vmatprep.subr.mxu0 0.0
        %2358 = vmatpush1.msra.mxu0 0.0
        %2359 = vmatprep.subr.mxu0 0.0
        %2360 = vmatpush1.msra.mxu0 0.0
        %2361 = vmatprep.subr.mxu0 0.0
        %2362 = vmatpush1.msra.mxu0 0.0
        %2363 = vmatprep.subr.mxu0 0.0
        %2364 = vmatpush1.msra.mxu0 0.0
        %2365 = vmatprep.subr.mxu0 0.0
        %2366 = vmatpush1.msra.mxu0 0.0
        %2367 = vmatprep.subr.mxu0 0.0
        %2368 = vmatpush1.msra.mxu0 0.0
        %2369 = vmatprep.subr.mxu0 0.0
        %2370 = vmatpush1.msra.mxu0 0.0
        %2371 = vmatprep.subr.mxu0 0.0
        %2372 = vmatpush1.msra.mxu0 0.0
        %2373 = vmatprep.subr.mxu0 0.0
        %2374 = vmatpush1.msra.mxu0 0.0
        %2375 = vmatprep.subr.mxu0 0.0
        %2376 = vmatpush1.msra.mxu0 0.0
        %2377 = vmatprep.subr.mxu0 0.0
        %2378 = vmatpush1.msra.mxu0 0.0
        %2379 = vmatprep.subr.mxu0 0.0
        %2380 = vmatpush1.msra.mxu0 0.0
        %2381 = vmatprep.subr.mxu0 0.0
        %2382 = vmatpush1.msra.mxu0 0.0
        %2383 = vmatprep.subr.mxu0 0.0
        %2384 = vmatpush1.msra.mxu0 0.0
        %2385 = vmatprep.subr.mxu0 0.0
        %2386 = vmatpush1.msra.mxu0 0.0
        %2387 = vmatprep.subr.mxu0 0.0
        %2388 = vmatpush1.msra.mxu0 0.0
        %2389 = vmatprep.subr.mxu0 0.0
        %2390 = vmatpush1.msra.mxu0 0.0
        %2391 = vmatprep.subr.mxu0 0.0
        %2392 = vmatpush1.msra.mxu0 0.0
        %2393 = vmatprep.subr.mxu0 0.0
        %2394 = vmatpush1.msra.mxu0 0.0
        %2395 = vmatprep.subr.mxu0 0.0
        %2396 = vmatpush1.msra.mxu0 0.0
        %2397 = vmatprep.subr.mxu0 0.0
        %2398 = vmatpush1.msra.mxu0 0.0
        %2399 = vmatprep.subr.mxu0 0.0
        %2400 = vmatpush1.msra.mxu0 0.0
        %2401 = vmatprep.subr.mxu0 0.0
        %2402 = vmatpush1.msra.mxu0 0.0
        %2403 = vmatprep.subr.mxu0 0.0
        %2404 = vmatpush1.msra.mxu0 0.0
        %2405 = vmatprep.subr.mxu0 0.0
        %2406 = vmatpush1.msra.mxu0 0.0
        %2407 = vmatprep.subr.mxu0 0.0
        %2408 = vmatpush1.msra.mxu0 0.0
        %2409 = vmatprep.subr.mxu0 0.0
        %2410 = vmatpush1.msra.mxu0 0.0
        %2411 = vmatprep.mubr.f32.mxu0 0.0
        %2412 = vmatmul.mubr.f32.gmra.mrb[0].mxu0 %v2345
        %v2413 = vpop.f32.mrb[0].mxu0
        %v2414 = vadd.f32 0.0, %v2413
        %v2415 = vpop.f32.mrb[0].mxu0
        %2416 = vdwg.mxu0
        %v2418 = vsel %vm2036, %v2121, 0
        %2420 = vmatprep.subr.mxu0 0.0
        %2421 = vmatpush1.msra.mxu0 %v1415
        %2422 = vmatprep.subr.mxu0 0.0
        %2423 = vmatpush1.msra.mxu0 0.0
        %2424 = vmatprep.subr.mxu0 0.0
        %2425 = vmatpush1.msra.mxu0 0.0
        %2426 = vmatprep.subr.mxu0 0.0
        %2427 = vmatpush1.msra.mxu0 0.0
        %2428 = vmatprep.subr.mxu0 0.0
        %2429 = vmatpush1.msra.mxu0 0.0
        %2430 = vmatprep.subr.mxu0 0.0
        %2431 = vmatpush1.msra.mxu0 0.0
        %2432 = vmatprep.subr.mxu0 0.0
        %2433 = vmatpush1.msra.mxu0 0.0
        %2434 = vmatprep.subr.mxu0 0.0
        %2435 = vmatpush1.msra.mxu0 0.0
        %2436 = vmatprep.subr.mxu0 0.0
        %2437 = vmatpush1.msra.mxu0 0.0
        %2438 = vmatprep.subr.mxu0 0.0
        %2439 = vmatpush1.msra.mxu0 0.0
        %2440 = vmatprep.subr.mxu0 0.0
        %2441 = vmatpush1.msra.mxu0 0.0
        %2442 = vmatprep.subr.mxu0 0.0
        %2443 = vmatpush1.msra.mxu0 0.0
        %2444 = vmatprep.subr.mxu0 0.0
        %2445 = vmatpush1.msra.mxu0 0.0
        %2446 = vmatprep.subr.mxu0 0.0
        %2447 = vmatpush1.msra.mxu0 0.0
        %2448 = vmatprep.subr.mxu0 0.0
        %2449 = vmatpush1.msra.mxu0 0.0
        %2450 = vmatprep.subr.mxu0 0.0
        %2451 = vmatpush1.msra.mxu0 0.0
        %2452 = vmatprep.subr.mxu0 0.0
        %2453 = vmatpush1.msra.mxu0 0.0
        %2454 = vmatprep.subr.mxu0 0.0
        %2455 = vmatpush1.msra.mxu0 0.0
        %2456 = vmatprep.subr.mxu0 0.0
        %2457 = vmatpush1.msra.mxu0 0.0
        %2458 = vmatprep.subr.mxu0 0.0
        %2459 = vmatpush1.msra.mxu0 0.0
        %2460 = vmatprep.subr.mxu0 0.0
        %2461 = vmatpush1.msra.mxu0 0.0
        %2462 = vmatprep.subr.mxu0 0.0
        %2463 = vmatpush1.msra.mxu0 0.0
        %2464 = vmatprep.subr.mxu0 0.0
        %2465 = vmatpush1.msra.mxu0 0.0
        %2466 = vmatprep.subr.mxu0 0.0
        %2467 = vmatpush1.msra.mxu0 0.0
        %2468 = vmatprep.subr.mxu0 0.0
        %2469 = vmatpush1.msra.mxu0 0.0
        %2470 = vmatprep.subr.mxu0 0.0
        %2471 = vmatpush1.msra.mxu0 0.0
        %2472 = vmatprep.subr.mxu0 0.0
        %2473 = vmatpush1.msra.mxu0 0.0
        %2474 = vmatprep.subr.mxu0 0.0
        %2475 = vmatpush1.msra.mxu0 0.0
        %2476 = vmatprep.subr.mxu0 0.0
        %2477 = vmatpush1.msra.mxu0 0.0
        %2478 = vmatprep.subr.mxu0 0.0
        %2479 = vmatpush1.msra.mxu0 0.0
        %2480 = vmatprep.subr.mxu0 0.0
        %2481 = vmatpush1.msra.mxu0 0.0
        %2482 = vmatprep.subr.mxu0 0.0
        %2483 = vmatpush1.msra.mxu0 0.0
        %2484 = vmatprep.mubr.f32.mxu0 0.0
        %2485 = vmatmul.mubr.f32.gmra.mrb[0].mxu0 %v2418
        %v2486 = vpop.f32.mrb[0].mxu0
        %v2487 = vadd.f32 0.0, %v2486
        %v2488 = vpop.f32.mrb[0].mxu0
        %2489 = vdwg.mxu0
        %v2491 = vsel %vm2036, %v2122, 0
        %2493 = vmatprep.subr.mxu0 0.0
        %2494 = vmatpush1.msra.mxu0 %v1416
        %2495 = vmatprep.subr.mxu0 0.0
        %2496 = vmatpush1.msra.mxu0 0.0
        %2497 = vmatprep.subr.mxu0 0.0
        %2498 = vmatpush1.msra.mxu0 0.0
        %2499 = vmatprep.subr.mxu0 0.0
        %2500 = vmatpush1.msra.mxu0 0.0
        %2501 = vmatprep.subr.mxu0 0.0
        %2502 = vmatpush1.msra.mxu0 0.0
        %2503 = vmatprep.subr.mxu0 0.0
        %2504 = vmatpush1.msra.mxu0 0.0
        %2505 = vmatprep.subr.mxu0 0.0
        %2506 = vmatpush1.msra.mxu0 0.0
        %2507 = vmatprep.subr.mxu0 0.0
        %2508 = vmatpush1.msra.mxu0 0.0
        %2509 = vmatprep.subr.mxu0 0.0
        %2510 = vmatpush1.msra.mxu0 0.0
        %2511 = vmatprep.subr.mxu0 0.0
        %2512 = vmatpush1.msra.mxu0 0.0
        %2513 = vmatprep.subr.mxu0 0.0
        %2514 = vmatpush1.msra.mxu0 0.0
        %2515 = vmatprep.subr.mxu0 0.0
        %2516 = vmatpush1.msra.mxu0 0.0
        %2517 = vmatprep.subr.mxu0 0.0
        %2518 = vmatpush1.msra.mxu0 0.0
        %2519 = vmatprep.subr.mxu0 0.0
        %2520 = vmatpush1.msra.mxu0 0.0
        %2521 = vmatprep.subr.mxu0 0.0
        %2522 = vmatpush1.msra.mxu0 0.0
        %2523 = vmatprep.subr.mxu0 0.0
        %2524 = vmatpush1.msra.mxu0 0.0
        %2525 = vmatprep.subr.mxu0 0.0
        %2526 = vmatpush1.msra.mxu0 0.0
        %2527 = vmatprep.subr.mxu0 0.0
        %2528 = vmatpush1.msra.mxu0 0.0
        %2529 = vmatprep.subr.mxu0 0.0
        %2530 = vmatpush1.msra.mxu0 0.0
        %2531 = vmatprep.subr.mxu0 0.0
        %2532 = vmatpush1.msra.mxu0 0.0
        %2533 = vmatprep.subr.mxu0 0.0
        %2534 = vmatpush1.msra.mxu0 0.0
        %2535 = vmatprep.subr.mxu0 0.0
        %2536 = vmatpush1.msra.mxu0 0.0
        %2537 = vmatprep.subr.mxu0 0.0
        %2538 = vmatpush1.msra.mxu0 0.0
        %2539 = vmatprep.subr.mxu0 0.0
        %2540 = vmatpush1.msra.mxu0 0.0
        %2541 = vmatprep.subr.mxu0 0.0
        %2542 = vmatpush1.msra.mxu0 0.0
        %2543 = vmatprep.subr.mxu0 0.0
        %2544 = vmatpush1.msra.mxu0 0.0
        %2545 = vmatprep.subr.mxu0 0.0
        %2546 = vmatpush1.msra.mxu0 0.0
        %2547 = vmatprep.subr.mxu0 0.0
        %2548 = vmatpush1.msra.mxu0 0.0
        %2549 = vmatprep.subr.mxu0 0.0
        %2550 = vmatpush1.msra.mxu0 0.0
        %2551 = vmatprep.subr.mxu0 0.0
        %2552 = vmatpush1.msra.mxu0 0.0
        %2553 = vmatprep.subr.mxu0 0.0
        %2554 = vmatpush1.msra.mxu0 0.0
        %2555 = vmatprep.subr.mxu0 0.0
        %2556 = vmatpush1.msra.mxu0 0.0
        %2557 = vmatprep.mubr.f32.mxu0 0.0
        %2558 = vmatmul.mubr.f32.gmra.mrb[0].mxu0 %v2491
        %v2559 = vpop.f32.mrb[0].mxu0
        %v2560 = vadd.f32 0.0, %v2559
        %v2561 = vpop.f32.mrb[0].mxu0
        %2562 = vdwg.mxu0
        %v2564 = vsel %vm2036, %v2123, 0
        %2566 = vmatprep.subr.mxu0 0.0
        %2567 = vmatpush1.msra.mxu0 %v1417
        %2568 = vmatprep.subr.mxu0 0.0
        %2569 = vmatpush1.msra.mxu0 0.0
        %2570 = vmatprep.subr.mxu0 0.0
        %2571 = vmatpush1.msra.mxu0 0.0
        %2572 = vmatprep.subr.mxu0 0.0
        %2573 = vmatpush1.msra.mxu0 0.0
        %2574 = vmatprep.subr.mxu0 0.0
        %2575 = vmatpush1.msra.mxu0 0.0
        %2576 = vmatprep.subr.mxu0 0.0
        %2577 = vmatpush1.msra.mxu0 0.0
        %2578 = vmatprep.subr.mxu0 0.0
        %2579 = vmatpush1.msra.mxu0 0.0
        %2580 = vmatprep.subr.mxu0 0.0
        %2581 = vmatpush1.msra.mxu0 0.0
        %2582 = vmatprep.subr.mxu0 0.0
        %2583 = vmatpush1.msra.mxu0 0.0
        %2584 = vmatprep.subr.mxu0 0.0
        %2585 = vmatpush1.msra.mxu0 0.0
        %2586 = vmatprep.subr.mxu0 0.0
        %2587 = vmatpush1.msra.mxu0 0.0
        %2588 = vmatprep.subr.mxu0 0.0
        %2589 = vmatpush1.msra.mxu0 0.0
        %2590 = vmatprep.subr.mxu0 0.0
        %2591 = vmatpush1.msra.mxu0 0.0
        %2592 = vmatprep.subr.mxu0 0.0
        %2593 = vmatpush1.msra.mxu0 0.0
        %2594 = vmatprep.subr.mxu0 0.0
        %2595 = vmatpush1.msra.mxu0 0.0
        %2596 = vmatprep.subr.mxu0 0.0
        %2597 = vmatpush1.msra.mxu0 0.0
        %2598 = vmatprep.subr.mxu0 0.0
        %2599 = vmatpush1.msra.mxu0 0.0
        %2600 = vmatprep.subr.mxu0 0.0
        %2601 = vmatpush1.msra.mxu0 0.0
        %2602 = vmatprep.subr.mxu0 0.0
        %2603 = vmatpush1.msra.mxu0 0.0
        %2604 = vmatprep.subr.mxu0 0.0
        %2605 = vmatpush1.msra.mxu0 0.0
        %2606 = vmatprep.subr.mxu0 0.0
        %2607 = vmatpush1.msra.mxu0 0.0
        %2608 = vmatprep.subr.mxu0 0.0
        %2609 = vmatpush1.msra.mxu0 0.0
        %2610 = vmatprep.subr.mxu0 0.0
        %2611 = vmatpush1.msra.mxu0 0.0
        %2612 = vmatprep.subr.mxu0 0.0
        %2613 = vmatpush1.msra.mxu0 0.0
        %2614 = vmatprep.subr.mxu0 0.0
        %2615 = vmatpush1.msra.mxu0 0.0
        %2616 = vmatprep.subr.mxu0 0.0
        %2617 = vmatpush1.msra.mxu0 0.0
        %2618 = vmatprep.subr.mxu0 0.0
        %2619 = vmatpush1.msra.mxu0 0.0
        %2620 = vmatprep.subr.mxu0 0.0
        %2621 = vmatpush1.msra.mxu0 0.0
        %2622 = vmatprep.subr.mxu0 0.0
        %2623 = vmatpush1.msra.mxu0 0.0
        %2624 = vmatprep.subr.mxu0 0.0
        %2625 = vmatpush1.msra.mxu0 0.0
        %2626 = vmatprep.subr.mxu0 0.0
        %2627 = vmatpush1.msra.mxu0 0.0
        %2628 = vmatprep.subr.mxu0 0.0
        %2629 = vmatpush1.msra.mxu0 0.0
        %2630 = vmatprep.mubr.f32.mxu0 0.0
        %2631 = vmatmul.mubr.f32.gmra.mrb[0].mxu0 %v2564
        %v2632 = vpop.f32.mrb[0].mxu0
        %v2633 = vadd.f32 0.0, %v2632
        %v2634 = vpop.f32.mrb[0].mxu0
        %2635 = vdwg.mxu0
        %v2637 = vsel %vm2036, %v2124, 0
        %2639 = vmatprep.subr.mxu0 0.0
        %2640 = vmatpush1.msra.mxu0 %v1418
        %2641 = vmatprep.subr.mxu0 0.0
        %2642 = vmatpush1.msra.mxu0 0.0
        %2643 = vmatprep.subr.mxu0 0.0
        %2644 = vmatpush1.msra.mxu0 0.0
        %2645 = vmatprep.subr.mxu0 0.0
        %2646 = vmatpush1.msra.mxu0 0.0
        %2647 = vmatprep.subr.mxu0 0.0
        %2648 = vmatpush1.msra.mxu0 0.0
        %2649 = vmatprep.subr.mxu0 0.0
        %2650 = vmatpush1.msra.mxu0 0.0
        %2651 = vmatprep.subr.mxu0 0.0
        %2652 = vmatpush1.msra.mxu0 0.0
        %2653 = vmatprep.subr.mxu0 0.0
        %2654 = vmatpush1.msra.mxu0 0.0
        %2655 = vmatprep.subr.mxu0 0.0
        %2656 = vmatpush1.msra.mxu0 0.0
        %2657 = vmatprep.subr.mxu0 0.0
        %2658 = vmatpush1.msra.mxu0 0.0
        %2659 = vmatprep.subr.mxu0 0.0
        %2660 = vmatpush1.msra.mxu0 0.0
        %2661 = vmatprep.subr.mxu0 0.0
        %2662 = vmatpush1.msra.mxu0 0.0
        %2663 = vmatprep.subr.mxu0 0.0
        %2664 = vmatpush1.msra.mxu0 0.0
        %2665 = vmatprep.subr.mxu0 0.0
        %2666 = vmatpush1.msra.mxu0 0.0
        %2667 = vmatprep.subr.mxu0 0.0
        %2668 = vmatpush1.msra.mxu0 0.0
        %2669 = vmatprep.subr.mxu0 0.0
        %2670 = vmatpush1.msra.mxu0 0.0
        %2671 = vmatprep.subr.mxu0 0.0
        %2672 = vmatpush1.msra.mxu0 0.0
        %2673 = vmatprep.subr.mxu0 0.0
        %2674 = vmatpush1.msra.mxu0 0.0
        %2675 = vmatprep.subr.mxu0 0.0
        %2676 = vmatpush1.msra.mxu0 0.0
        %2677 = vmatprep.subr.mxu0 0.0
        %2678 = vmatpush1.msra.mxu0 0.0
        %2679 = vmatprep.subr.mxu0 0.0
        %2680 = vmatpush1.msra.mxu0 0.0
        %2681 = vmatprep.subr.mxu0 0.0
        %2682 = vmatpush1.msra.mxu0 0.0
        %2683 = vmatprep.subr.mxu0 0.0
        %2684 = vmatpush1.msra.mxu0 0.0
        %2685 = vmatprep.subr.mxu0 0.0
        %2686 = vmatpush1.msra.mxu0 0.0
        %2687 = vmatprep.subr.mxu0 0.0
        %2688 = vmatpush1.msra.mxu0 0.0
        %2689 = vmatprep.subr.mxu0 0.0
        %2690 = vmatpush1.msra.mxu0 0.0
        %2691 = vmatprep.subr.mxu0 0.0
        %2692 = vmatpush1.msra.mxu0 0.0
        %2693 = vmatprep.subr.mxu0 0.0
        %2694 = vmatpush1.msra.mxu0 0.0
        %2695 = vmatprep.subr.mxu0 0.0
        %2696 = vmatpush1.msra.mxu0 0.0
        %2697 = vmatprep.subr.mxu0 0.0
        %2698 = vmatpush1.msra.mxu0 0.0
        %2699 = vmatprep.subr.mxu0 0.0
        %2700 = vmatpush1.msra.mxu0 0.0
        %2701 = vmatprep.subr.mxu0 0.0
        %2702 = vmatpush1.msra.mxu0 0.0
        %2703 = vmatprep.mubr.f32.mxu0 0.0
        %2704 = vmatmul.mubr.f32.gmra.mrb[0].mxu0 %v2637
        %v2705 = vpop.f32.mrb[0].mxu0
        %v2706 = vadd.f32 0.0, %v2705
        %v2707 = vpop.f32.mrb[0].mxu0
        %2708 = vdwg.mxu0
        %v2709 = vcombine.low %v2195, %v2341
        %v2710 = vcombine.high %v2195, %v2341
        %v2712 = vunpack.c.l.s4 1983009808
        %v2713 = vunpack.c.0.s8 %v2712
        %v2714 = vlaneseq
        %v2715 = vshrl.u32 %v2714, 7
        %v2716 = vsub.s32 %v2713, %v2715
        %v2717 = vrot.slane %v2709, %v2716
        %v2719 = vunpack.c.l.s4 1983009808
        %v2720 = vunpack.c.0.s8 %v2719
        %v2721 = vlaneseq
        %v2722 = vshrl.u32 %v2721, 7
        %v2723 = vsub.s32 %v2720, %v2722
        %v2724 = vrot.slane %v2710, %v2723
        %v2725 = vcombine.low %v2268, %v2414
        %v2726 = vcombine.high %v2268, %v2414
        %v2728 = vunpack.c.l.s4 1983009808
        %v2729 = vunpack.c.0.s8 %v2728
        %v2730 = vlaneseq
        %v2731 = vshrl.u32 %v2730, 7
        %v2732 = vsub.s32 %v2729, %v2731
        %v2733 = vrot.slane %v2725, %v2732
        %v2735 = vunpack.c.l.s4 1983009808
        %v2736 = vunpack.c.0.s8 %v2735
        %v2737 = vlaneseq
        %v2738 = vshrl.u32 %v2737, 7
        %v2739 = vsub.s32 %v2736, %v2738
        %v2740 = vrot.slane %v2726, %v2739
        %v2741 = vcombine.low %v2487, %v2633
        %v2742 = vcombine.high %v2487, %v2633
        %v2744 = vunpack.c.l.s4 1983009808
        %v2745 = vunpack.c.0.s8 %v2744
        %v2746 = vlaneseq
        %v2747 = vshrl.u32 %v2746, 7
        %v2748 = vsub.s32 %v2745, %v2747
        %v2749 = vrot.slane %v2741, %v2748
        %v2751 = vunpack.c.l.s4 1983009808
        %v2752 = vunpack.c.0.s8 %v2751
        %v2753 = vlaneseq
        %v2754 = vshrl.u32 %v2753, 7
        %v2755 = vsub.s32 %v2752, %v2754
        %v2756 = vrot.slane %v2742, %v2755
        %v2757 = vcombine.low %v2560, %v2706
        %v2758 = vcombine.high %v2560, %v2706
        %v2760 = vunpack.c.l.s4 1983009808
        %v2761 = vunpack.c.0.s8 %v2760
        %v2762 = vlaneseq
        %v2763 = vshrl.u32 %v2762, 7
        %v2764 = vsub.s32 %v2761, %v2763
        %v2765 = vrot.slane %v2757, %v2764
        %v2767 = vunpack.c.l.s4 1983009808
        %v2768 = vunpack.c.0.s8 %v2767
        %v2769 = vlaneseq
        %v2770 = vshrl.u32 %v2769, 7
        %v2771 = vsub.s32 %v2768, %v2770
        %v2772 = vrot.slane %v2758, %v2771
        %v2773 = vcombine.low %v2717, %v2733
        %v2774 = vcombine.high %v2717, %v2733
        %v2776 = vunpack.c.l.s4 1934713408
        %v2777 = vunpack.c.0.s8 %v2776
        %v2778 = vlaneseq
        %v2779 = vshrl.u32 %v2778, 7
        %v2780 = vsub.s32 %v2777, %v2779
        %v2781 = vrot.slane %v2773, %v2780
        %v2783 = vunpack.c.l.s4 1934713408
        %v2784 = vunpack.c.0.s8 %v2783
        %v2785 = vlaneseq
        %v2786 = vshrl.u32 %v2785, 7
        %v2787 = vsub.s32 %v2784, %v2786
        %v2788 = vrot.slane %v2774, %v2787
        %v2789 = vcombine.low %v2724, %v2740
        %v2790 = vcombine.high %v2724, %v2740
        %v2792 = vunpack.c.l.s4 1934713408
        %v2793 = vunpack.c.0.s8 %v2792
        %v2794 = vlaneseq
        %v2795 = vshrl.u32 %v2794, 7
        %v2796 = vsub.s32 %v2793, %v2795
        %v2797 = vrot.slane %v2789, %v2796
        %v2799 = vunpack.c.l.s4 1934713408
        %v2800 = vunpack.c.0.s8 %v2799
        %v2801 = vlaneseq
        %v2802 = vshrl.u32 %v2801, 7
        %v2803 = vsub.s32 %v2800, %v2802
        %v2804 = vrot.slane %v2790, %v2803
        %v2805 = vcombine.low %v2749, %v2765
        %v2806 = vcombine.high %v2749, %v2765
        %v2808 = vunpack.c.l.s4 1934713408
        %v2809 = vunpack.c.0.s8 %v2808
        %v2810 = vlaneseq
        %v2811 = vshrl.u32 %v2810, 7
        %v2812 = vsub.s32 %v2809, %v2811
        %v2813 = vrot.slane %v2805, %v2812
        %v2815 = vunpack.c.l.s4 1934713408
        %v2816 = vunpack.c.0.s8 %v2815
        %v2817 = vlaneseq
        %v2818 = vshrl.u32 %v2817, 7
        %v2819 = vsub.s32 %v2816, %v2818
        %v2820 = vrot.slane %v2806, %v2819
        %v2821 = vcombine.low %v2756, %v2772
        %v2822 = vcombine.high %v2756, %v2772
        %v2824 = vunpack.c.l.s4 1934713408
        %v2825 = vunpack.c.0.s8 %v2824
        %v2826 = vlaneseq
        %v2827 = vshrl.u32 %v2826, 7
        %v2828 = vsub.s32 %v2825, %v2827
        %v2829 = vrot.slane %v2821, %v2828
        %v2831 = vunpack.c.l.s4 1934713408
        %v2832 = vunpack.c.0.s8 %v2831
        %v2833 = vlaneseq
        %v2834 = vshrl.u32 %v2833, 7
        %v2835 = vsub.s32 %v2832, %v2834
        %v2836 = vrot.slane %v2822, %v2835
        %v2837 = vcombine.low %v2781, %v2813
        %v2838 = vcombine.high %v2781, %v2813
        %v2839 = vcombine.low %v2788, %v2820
        %v2840 = vcombine.high %v2788, %v2820
        %v2841 = vcombine.low %v2797, %v2829
        %v2842 = vcombine.high %v2797, %v2829
        %v2843 = vcombine.low %v2804, %v2836
        %v2844 = vcombine.high %v2804, %v2836
        %v2845 = vcombine.low %v2837, %v2839
        %v2846 = vcombine.high %v2837, %v2839
        %v2848 = vunpack.c.l.s4 1983009808
        %v2849 = vunpack.c.0.s8 %v2848
        %v2850 = vlaneseq
        %v2851 = vshrl.u32 %v2850, 7
        %v2852 = vsub.s32 %v2849, %v2851
        %v2853 = vrot.slane %v2845, %v2852
        %v2855 = vunpack.c.l.s4 1983009808
        %v2856 = vunpack.c.0.s8 %v2855
        %v2857 = vlaneseq
        %v2858 = vshrl.u32 %v2857, 7
        %v2859 = vsub.s32 %v2856, %v2858
        %v2860 = vrot.slane %v2846, %v2859
        %v2861 = vcombine.low %v2838, %v2840
        %v2862 = vcombine.high %v2838, %v2840
        %v2864 = vunpack.c.l.s4 1983009808
        %v2865 = vunpack.c.0.s8 %v2864
        %v2866 = vlaneseq
        %v2867 = vshrl.u32 %v2866, 7
        %v2868 = vsub.s32 %v2865, %v2867
        %v2869 = vrot.slane %v2861, %v2868
        %v2871 = vunpack.c.l.s4 1983009808
        %v2872 = vunpack.c.0.s8 %v2871
        %v2873 = vlaneseq
        %v2874 = vshrl.u32 %v2873, 7
        %v2875 = vsub.s32 %v2872, %v2874
        %v2876 = vrot.slane %v2862, %v2875
        %v2877 = vcombine.low %v2841, %v2843
        %v2878 = vcombine.high %v2841, %v2843
        %v2880 = vunpack.c.l.s4 1983009808
        %v2881 = vunpack.c.0.s8 %v2880
        %v2882 = vlaneseq
        %v2883 = vshrl.u32 %v2882, 7
        %v2884 = vsub.s32 %v2881, %v2883
        %v2885 = vrot.slane %v2877, %v2884
        %v2887 = vunpack.c.l.s4 1983009808
        %v2888 = vunpack.c.0.s8 %v2887
        %v2889 = vlaneseq
        %v2890 = vshrl.u32 %v2889, 7
        %v2891 = vsub.s32 %v2888, %v2890
        %v2892 = vrot.slane %v2878, %v2891
        %v2893 = vcombine.low %v2842, %v2844
        %v2894 = vcombine.high %v2842, %v2844
        %v2896 = vunpack.c.l.s4 1983009808
        %v2897 = vunpack.c.0.s8 %v2896
        %v2898 = vlaneseq
        %v2899 = vshrl.u32 %v2898, 7
        %v2900 = vsub.s32 %v2897, %v2899
        %v2901 = vrot.slane %v2893, %v2900
        %v2903 = vunpack.c.l.s4 1983009808
        %v2904 = vunpack.c.0.s8 %v2903
        %v2905 = vlaneseq
        %v2906 = vshrl.u32 %v2905, 7
        %v2907 = vsub.s32 %v2904, %v2906
        %v2908 = vrot.slane %v2894, %v2907
        %v2909 = vcombine.low %v2853, %v2869
        %v2910 = vcombine.high %v2853, %v2869
        %v2912 = vunpack.c.l.s4 1934713408
        %v2913 = vunpack.c.0.s8 %v2912
        %v2914 = vlaneseq
        %v2915 = vshrl.u32 %v2914, 7
        %v2916 = vsub.s32 %v2913, %v2915
        %v2917 = vrot.slane %v2909, %v2916
        %v2919 = vunpack.c.l.s4 1934713408
        %v2920 = vunpack.c.0.s8 %v2919
        %v2921 = vlaneseq
        %v2922 = vshrl.u32 %v2921, 7
        %v2923 = vsub.s32 %v2920, %v2922
        %v2924 = vrot.slane %v2910, %v2923
        %v2925 = vcombine.low %v2860, %v2876
        %v2926 = vcombine.high %v2860, %v2876
        %v2928 = vunpack.c.l.s4 1934713408
        %v2929 = vunpack.c.0.s8 %v2928
        %v2930 = vlaneseq
        %v2931 = vshrl.u32 %v2930, 7
        %v2932 = vsub.s32 %v2929, %v2931
        %v2933 = vrot.slane %v2925, %v2932
        %v2935 = vunpack.c.l.s4 1934713408
        %v2936 = vunpack.c.0.s8 %v2935
        %v2937 = vlaneseq
        %v2938 = vshrl.u32 %v2937, 7
        %v2939 = vsub.s32 %v2936, %v2938
        %v2940 = vrot.slane %v2926, %v2939
        %v2941 = vcombine.low %v2885, %v2901
        %v2942 = vcombine.high %v2885, %v2901
        %v2944 = vunpack.c.l.s4 1934713408
        %v2945 = vunpack.c.0.s8 %v2944
        %v2946 = vlaneseq
        %v2947 = vshrl.u32 %v2946, 7
        %v2948 = vsub.s32 %v2945, %v2947
        %v2949 = vrot.slane %v2941, %v2948
        %v2951 = vunpack.c.l.s4 1934713408
        %v2952 = vunpack.c.0.s8 %v2951
        %v2953 = vlaneseq
        %v2954 = vshrl.u32 %v2953, 7
        %v2955 = vsub.s32 %v2952, %v2954
        %v2956 = vrot.slane %v2942, %v2955
        %v2957 = vcombine.low %v2892, %v2908
        %v2958 = vcombine.high %v2892, %v2908
        %v2960 = vunpack.c.l.s4 1934713408
        %v2961 = vunpack.c.0.s8 %v2960
        %v2962 = vlaneseq
        %v2963 = vshrl.u32 %v2962, 7
        %v2964 = vsub.s32 %v2961, %v2963
        %v2965 = vrot.slane %v2957, %v2964
        %v2967 = vunpack.c.l.s4 1934713408
        %v2968 = vunpack.c.0.s8 %v2967
        %v2969 = vlaneseq
        %v2970 = vshrl.u32 %v2969, 7
        %v2971 = vsub.s32 %v2968, %v2970
        %v2972 = vrot.slane %v2958, %v2971
        %v2973 = vcombine.low %v2917, %v2949
        %v2974 = vcombine.high %v2917, %v2949
        %v2975 = vcombine.low %v2924, %v2956
        %v2976 = vcombine.high %v2924, %v2956
        %v2977 = vcombine.low %v2933, %v2965
        %v2978 = vcombine.high %v2933, %v2965
        %v2979 = vcombine.low %v2940, %v2972
        %v2980 = vcombine.high %v2940, %v2972
        %2982 = vrot.lane.b32.xlu0 %v2974, 4
        %v2983 = vpop.permute.xlu0 %2982
        %2986 = vrot.lane.b32.xlu0 %v2975, 8
        %v2987 = vpop.permute.xlu0 %2986
        %2990 = vrot.lane.b32.xlu0 %v2976, 12
        %v2991 = vpop.permute.xlu0 %2990
        %2994 = vrot.lane.b32.xlu0 %v2977, 16
        %v2995 = vpop.permute.xlu0 %2994
        %2998 = vrot.lane.b32.xlu0 %v2978, 20
        %v2999 = vpop.permute.xlu0 %2998
        %3002 = vrot.lane.b32.xlu0 %v2979, 24
        %v3003 = vpop.permute.xlu0 %3002
        %3006 = vrot.lane.b32.xlu0 %v2980, 28
        %v3007 = vpop.permute.xlu0 %3006
        %v3009 = vsel %vm1419, %v2973, %v2983
        %v3010 = vsel %vm2036, %v3009, %v2987
        %vm3011 = vcmask 97280
        %v3012 = vsel %vm3011, %v3010, %v2991
        %vm3013 = vcmask 130048
        %v3014 = vsel %vm3013, %v3012, %v2995
        %vm3015 = vcmask 162816
        %v3016 = vsel %vm3015, %v3014, %v2999
        %vm3017 = vcmask 195584
        %v3018 = vsel %vm3017, %v3016, %v3003
        %vm3019 = vcmask 228352
        %v3020 = vsel %vm3019, %v3018, %v3007
        %v3021 = vld [vmem:[%s5] sm:$0xff]
        %v3022 = vld [vmem:[%s5 + $0x8] sm:$0xff]
        %v3023 = vld [vmem:[%s5 + $0x10] sm:$0xff]
        %v3024 = vld [vmem:[%s5 + $0x18] sm:$0xff]
        %v3026 = vsel %vm413, %v3020, 0
        %3028 = vmatprep.subr.mxu0 0.0
        %3029 = vmatpush1.msra.mxu0 %v3021
        %3030 = vmatprep.subr.mxu0 0.0
        %3031 = vmatpush1.msra.mxu0 %v3022
        %3032 = vmatprep.subr.mxu0 0.0
        %3033 = vmatpush1.msra.mxu0 %v3023
        %3034 = vmatprep.subr.mxu0 0.0
        %3035 = vmatpush1.msra.mxu0 %v3024
        %3036 = vmatprep.subr.mxu0 0.0
        %3037 = vmatpush1.msra.mxu0 0.0
        %3038 = vmatprep.subr.mxu0 0.0
        %3039 = vmatpush1.msra.mxu0 0.0
        %3040 = vmatprep.subr.mxu0 0.0
        %3041 = vmatpush1.msra.mxu0 0.0
        %3042 = vmatprep.subr.mxu0 0.0
        %3043 = vmatpush1.msra.mxu0 0.0
        %3044 = vmatprep.subr.mxu0 0.0
        %3045 = vmatpush1.msra.mxu0 0.0
        %3046 = vmatprep.subr.mxu0 0.0
        %3047 = vmatpush1.msra.mxu0 0.0
        %3048 = vmatprep.subr.mxu0 0.0
        %3049 = vmatpush1.msra.mxu0 0.0
        %3050 = vmatprep.subr.mxu0 0.0
        %3051 = vmatpush1.msra.mxu0 0.0
        %3052 = vmatprep.subr.mxu0 0.0
        %3053 = vmatpush1.msra.mxu0 0.0
        %3054 = vmatprep.subr.mxu0 0.0
        %3055 = vmatpush1.msra.mxu0 0.0
        %3056 = vmatprep.subr.mxu0 0.0
        %3057 = vmatpush1.msra.mxu0 0.0
        %3058 = vmatprep.subr.mxu0 0.0
        %3059 = vmatpush1.msra.mxu0 0.0
        %3060 = vmatprep.subr.mxu0 0.0
        %3061 = vmatpush1.msra.mxu0 0.0
        %3062 = vmatprep.subr.mxu0 0.0
        %3063 = vmatpush1.msra.mxu0 0.0
        %3064 = vmatprep.subr.mxu0 0.0
        %3065 = vmatpush1.msra.mxu0 0.0
        %3066 = vmatprep.subr.mxu0 0.0
        %3067 = vmatpush1.msra.mxu0 0.0
        %3068 = vmatprep.subr.mxu0 0.0
        %3069 = vmatpush1.msra.mxu0 0.0
        %3070 = vmatprep.subr.mxu0 0.0
        %3071 = vmatpush1.msra.mxu0 0.0
        %3072 = vmatprep.subr.mxu0 0.0
        %3073 = vmatpush1.msra.mxu0 0.0
        %3074 = vmatprep.subr.mxu0 0.0
        %3075 = vmatpush1.msra.mxu0 0.0
        %3076 = vmatprep.subr.mxu0 0.0
        %3077 = vmatpush1.msra.mxu0 0.0
        %3078 = vmatprep.subr.mxu0 0.0
        %3079 = vmatpush1.msra.mxu0 0.0
        %3080 = vmatprep.subr.mxu0 0.0
        %3081 = vmatpush1.msra.mxu0 0.0
        %3082 = vmatprep.subr.mxu0 0.0
        %3083 = vmatpush1.msra.mxu0 0.0
        %3084 = vmatprep.subr.mxu0 0.0
        %3085 = vmatpush1.msra.mxu0 0.0
        %3086 = vmatprep.subr.mxu0 0.0
        %3087 = vmatpush1.msra.mxu0 0.0
        %3088 = vmatprep.subr.mxu0 0.0
        %3089 = vmatpush1.msra.mxu0 0.0
        %3090 = vmatprep.subr.mxu0 0.0
        %3091 = vmatpush1.msra.mxu0 0.0
        %3092 = vmatprep.mubr.f32.mxu0 0.0
        %3093 = vmatmul.mubr.f32.gmra.mrb[0].mxu0 %v3026
        %v3094 = vpop.f32.mrb[0].mxu0
        %v3095 = vadd.f32 0.0, %v3094
        %v3096 = vpop.f32.mrb[0].mxu0
        %3097 = vdwg.mxu0
        %v3098 = vadd.f32 %v410, %v3095
        %v3099 = vld [vmem:[%s6] sm:$0x1]
        %v3100 = vld [vmem:[%s7] sm:$0x1]
        %v3101 = vsel %vm413, %v3098, 0.0
        %3102 = vadd.xlane.f32.xlu0 %v3101
        %v3103 = vpop.xlane.xlu0 %3102
        %v3104 = vmul.f32 %v3103, %v417
        %v3105 = vsub.f32 %v3098, %v3104
        %v3106 = vmul.f32 %v3105, %v3105
        %v3107 = vsel %vm413, %v3106, 0.0
        %3108 = vadd.xlane.f32.xlu0 %v3107
        %v3109 = vpop.xlane.xlu0 %3108
        %v3110 = vmul.f32 %v3109, 0.032258064
        %v3111 = vrsqrt.pop %v3110
        %v3112 = vmul.f32 %v3110, %v3111
        %vm3113 = vcmp.eq.f32.partialorder %v3110, inf
        %v3114 = vsel %vm3113, %v3110, %v3112
        %vm3115 = vcmp.eq.f32.partialorder %v3110, 0.0
        %v3116 = vand.u32 %v3110, 2147483648
        %v3117 = vsel %vm3115, %v3116, %v3114
        %v3118 = vadd.f32 %v3117, 1e-06
        %v3119 = vrcp.pop %v3118
        %v3121 = vlaneseq
        %v3122 = vshrl.u32 %v3121, 7
        %v3123 = vsub.s32 0, %v3122
        %v3124 = vrot.slane %v3099, %v3123
        %v3126 = vmul.f32 %v3124, %v3105
        %v3127 = vmul.f32 %v3126, %v3119
        %v3129 = vlaneseq
        %v3130 = vshrl.u32 %v3129, 7
        %v3131 = vsub.s32 0, %v3130
        %v3132 = vrot.slane %v3100, %v3131
        %v3134 = vadd.f32 %v3127, %v3132
        %v3135 = vpack.c.bf16 %v3134, %v3134
        %v3136 = vld [vmem:[%s8] sm:$0xff]
        %v3137 = vld [vmem:[%s8 + $0x8] sm:$0xff]
        %v3138 = vld [vmem:[%s8 + $0x10] sm:$0xff]
        %v3139 = vld [vmem:[%s8 + $0x18] sm:$0xff]
        %v3140 = vld [vmem:[%s8 + $0x20] sm:$0xff]
        %v3141 = vld [vmem:[%s8 + $0x28] sm:$0xff]
        %v3142 = vld [vmem:[%s8 + $0x30] sm:$0xff]
        %v3143 = vld [vmem:[%s8 + $0x38] sm:$0xff]
        %v3144 = vld [vmem:[%s8 + $0x40] sm:$0xff]
        %v3145 = vld [vmem:[%s8 + $0x48] sm:$0xff]
        %v3146 = vld [vmem:[%s8 + $0x50] sm:$0xff]
        %v3147 = vld [vmem:[%s8 + $0x58] sm:$0xff]
        %v3148 = vld [vmem:[%s8 + $0x60] sm:$0xff]
        %v3149 = vld [vmem:[%s8 + $0x68] sm:$0xff]
        %v3150 = vld [vmem:[%s8 + $0x70] sm:$0xff]
        %v3151 = vld [vmem:[%s8 + $0x78] sm:$0xff]
        %v3152 = vld [vmem:[%s8 + $0x80] sm:$0xff]
        %v3153 = vld [vmem:[%s8 + $0x88] sm:$0xff]
        %v3154 = vld [vmem:[%s8 + $0x90] sm:$0xff]
        %v3155 = vld [vmem:[%s8 + $0x98] sm:$0xff]
        %v3156 = vld [vmem:[%s8 + $0xa0] sm:$0xff]
        %v3157 = vld [vmem:[%s8 + $0xa8] sm:$0xff]
        %v3158 = vld [vmem:[%s8 + $0xb0] sm:$0xff]
        %v3159 = vld [vmem:[%s8 + $0xb8] sm:$0xff]
        %v3160 = vld [vmem:[%s8 + $0xc0] sm:$0xff]
        %v3161 = vld [vmem:[%s8 + $0xc8] sm:$0xff]
        %v3162 = vld [vmem:[%s8 + $0xd0] sm:$0xff]
        %v3163 = vld [vmem:[%s8 + $0xd8] sm:$0xff]
        %v3164 = vld [vmem:[%s8 + $0xe0] sm:$0xff]
        %v3165 = vld [vmem:[%s8 + $0xe8] sm:$0xff]
        %v3166 = vld [vmem:[%s8 + $0xf0] sm:$0xff]
        %v3167 = vld [vmem:[%s8 + $0xf8] sm:$0xff]
        %v3168 = vld [vmem:[%s9] sm:$0xff]
        %v3169 = vld [vmem:[%s9 + $0x8] sm:$0xff]
        %v3172 = vlaneseq
        %v3173 = vshrl.u32 %v3172, 7
        %v3174 = vsub.s32 0, %v3173
        %v3175 = vrot.slane %v3168, %v3174
        %v3176 = vlaneseq
        %v3177 = vshrl.u32 %v3176, 7
        %v3178 = vsub.s32 1, %v3177
        %v3179 = vrot.slane %v3168, %v3178
        %v3180 = vlaneseq
        %v3181 = vshrl.u32 %v3180, 7
        %v3182 = vsub.s32 2, %v3181
        %v3183 = vrot.slane %v3168, %v3182
        %v3184 = vlaneseq
        %v3185 = vshrl.u32 %v3184, 7
        %v3186 = vsub.s32 3, %v3185
        %v3187 = vrot.slane %v3168, %v3186
        %v3188 = vlaneseq
        %v3189 = vshrl.u32 %v3188, 7
        %v3190 = vsub.s32 4, %v3189
        %v3191 = vrot.slane %v3168, %v3190
        %v3192 = vlaneseq
        %v3193 = vshrl.u32 %v3192, 7
        %v3194 = vsub.s32 5, %v3193
        %v3195 = vrot.slane %v3168, %v3194
        %v3196 = vlaneseq
        %v3197 = vshrl.u32 %v3196, 7
        %v3198 = vsub.s32 6, %v3197
        %v3199 = vrot.slane %v3168, %v3198
        %v3200 = vlaneseq
        %v3201 = vshrl.u32 %v3200, 7
        %v3202 = vsub.s32 7, %v3201
        %v3203 = vrot.slane %v3168, %v3202
        %v3204 = vlaneseq
        %v3205 = vshrl.u32 %v3204, 7
        %v3206 = vsub.s32 0, %v3205
        %v3207 = vrot.slane %v3169, %v3206
        %v3208 = vlaneseq
        %v3209 = vshrl.u32 %v3208, 7
        %v3210 = vsub.s32 1, %v3209
        %v3211 = vrot.slane %v3169, %v3210
        %v3212 = vlaneseq
        %v3213 = vshrl.u32 %v3212, 7
        %v3214 = vsub.s32 2, %v3213
        %v3215 = vrot.slane %v3169, %v3214
        %v3216 = vlaneseq
        %v3217 = vshrl.u32 %v3216, 7
        %v3218 = vsub.s32 3, %v3217
        %v3219 = vrot.slane %v3169, %v3218
        %v3220 = vlaneseq
        %v3221 = vshrl.u32 %v3220, 7
        %v3222 = vsub.s32 4, %v3221
        %v3223 = vrot.slane %v3169, %v3222
        %v3224 = vlaneseq
        %v3225 = vshrl.u32 %v3224, 7
        %v3226 = vsub.s32 5, %v3225
        %v3227 = vrot.slane %v3169, %v3226
        %v3228 = vlaneseq
        %v3229 = vshrl.u32 %v3228, 7
        %v3230 = vsub.s32 6, %v3229
        %v3231 = vrot.slane %v3169, %v3230
        %v3232 = vlaneseq
        %v3233 = vshrl.u32 %v3232, 7
        %v3234 = vsub.s32 7, %v3233
        %v3235 = vrot.slane %v3169, %v3234
        %v3284 = vunpack.c.l.b16 %v3136
        %v3285 = vunpack.c.h.b16 %v3136
        %v3286 = vunpack.c.l.b16 %v3137
        %v3287 = vunpack.c.h.b16 %v3137
        %v3288 = vunpack.c.l.b16 %v3138
        %v3289 = vunpack.c.h.b16 %v3138
        %v3290 = vunpack.c.l.b16 %v3139
        %v3291 = vunpack.c.h.b16 %v3139
        %v3292 = vunpack.c.l.b16 %v3140
        %v3293 = vunpack.c.h.b16 %v3140
        %v3294 = vunpack.c.l.b16 %v3141
        %v3295 = vunpack.c.h.b16 %v3141
        %v3296 = vunpack.c.l.b16 %v3142
        %v3297 = vunpack.c.h.b16 %v3142
        %v3298 = vunpack.c.l.b16 %v3143
        %v3299 = vunpack.c.h.b16 %v3143
        %v3300 = vunpack.c.l.b16 %v3144
        %v3301 = vunpack.c.h.b16 %v3144
        %v3302 = vunpack.c.l.b16 %v3145
        %v3303 = vunpack.c.h.b16 %v3145
        %v3304 = vunpack.c.l.b16 %v3146
        %v3305 = vunpack.c.h.b16 %v3146
        %v3306 = vunpack.c.l.b16 %v3147
        %v3307 = vunpack.c.h.b16 %v3147
        %v3308 = vunpack.c.l.b16 %v3148
        %v3309 = vunpack.c.h.b16 %v3148
        %v3310 = vunpack.c.l.b16 %v3149
        %v3311 = vunpack.c.h.b16 %v3149
        %v3312 = vunpack.c.l.b16 %v3150
        %v3313 = vunpack.c.h.b16 %v3150
        %v3314 = vunpack.c.l.b16 %v3151
        %v3315 = vunpack.c.h.b16 %v3151
        %v3316 = vunpack.c.l.b16 %v3152
        %v3317 = vunpack.c.h.b16 %v3152
        %v3318 = vunpack.c.l.b16 %v3153
        %v3319 = vunpack.c.h.b16 %v3153
        %v3320 = vunpack.c.l.b16 %v3154
        %v3321 = vunpack.c.h.b16 %v3154
        %v3322 = vunpack.c.l.b16 %v3155
        %v3323 = vunpack.c.h.b16 %v3155
        %v3324 = vunpack.c.l.b16 %v3156
        %v3325 = vunpack.c.h.b16 %v3156
        %v3326 = vunpack.c.l.b16 %v3157
        %v3327 = vunpack.c.h.b16 %v3157
        %v3328 = vunpack.c.l.b16 %v3158
        %v3329 = vunpack.c.h.b16 %v3158
        %v3330 = vunpack.c.l.b16 %v3159
        %v3331 = vunpack.c.h.b16 %v3159
        %v3332 = vunpack.c.l.b16 %v3160
        %v3333 = vunpack.c.h.b16 %v3160
        %v3334 = vunpack.c.l.b16 %v3161
        %v3335 = vunpack.c.h.b16 %v3161
        %v3336 = vunpack.c.l.b16 %v3162
        %v3337 = vunpack.c.h.b16 %v3162
        %v3338 = vunpack.c.l.b16 %v3163
        %v3339 = vunpack.c.h.b16 %v3163
        %v3340 = vunpack.c.l.b16 %v3164
        %v3341 = vunpack.c.h.b16 %v3164
        %v3342 = vunpack.c.l.b16 %v3165
        %v3343 = vunpack.c.h.b16 %v3165
        %v3344 = vunpack.c.l.b16 %v3166
        %v3345 = vunpack.c.h.b16 %v3166
        %v3346 = vunpack.c.l.b16 %v3167
        %v3347 = vunpack.c.h.b16 %v3167
        %v3348 = vpack.c.b16 %v3300, %v3284
        %v3349 = vpack.c.b16 %v3301, %v3285
        %v3350 = vpack.c.b16 %v3302, %v3286
        %v3351 = vpack.c.b16 %v3303, %v3287
        %v3352 = vpack.c.b16 %v3304, %v3288
        %v3353 = vpack.c.b16 %v3305, %v3289
        %v3354 = vpack.c.b16 %v3306, %v3290
        %v3355 = vpack.c.b16 %v3307, %v3291
        %v3356 = vpack.c.b16 %v3308, %v3292
        %v3357 = vpack.c.b16 %v3309, %v3293
        %v3358 = vpack.c.b16 %v3310, %v3294
        %v3359 = vpack.c.b16 %v3311, %v3295
        %v3360 = vpack.c.b16 %v3312, %v3296
        %v3361 = vpack.c.b16 %v3313, %v3297
        %v3362 = vpack.c.b16 %v3314, %v3298
        %v3363 = vpack.c.b16 %v3315, %v3299
        %v3364 = vpack.c.b16 %v3332, %v3316
        %v3365 = vpack.c.b16 %v3333, %v3317
        %v3366 = vpack.c.b16 %v3334, %v3318
        %v3367 = vpack.c.b16 %v3335, %v3319
        %v3368 = vpack.c.b16 %v3336, %v3320
        %v3369 = vpack.c.b16 %v3337, %v3321
        %v3370 = vpack.c.b16 %v3338, %v3322
        %v3371 = vpack.c.b16 %v3339, %v3323
        %v3372 = vpack.c.b16 %v3340, %v3324
        %v3373 = vpack.c.b16 %v3341, %v3325
        %v3374 = vpack.c.b16 %v3342, %v3326
        %v3375 = vpack.c.b16 %v3343, %v3327
        %v3376 = vpack.c.b16 %v3344, %v3328
        %v3377 = vpack.c.b16 %v3345, %v3329
        %v3378 = vpack.c.b16 %v3346, %v3330
        %v3379 = vpack.c.b16 %v3347, %v3331
        %v3413 = vsel %vm413, %v3135, 0
        %3415 = vmatprep.subr.bf16.mxu0 %v3349
        %3416 = vmatpush1.bf16.msra.mxu0 %v3348
        %3417 = vmatprep.subr.bf16.mxu0 %v3365
        %3418 = vmatpush1.bf16.msra.mxu0 %v3364
        %3419 = vmatprep.subr.bf16.mxu0 0
        %3420 = vmatpush1.bf16.msra.mxu0 0
        %3421 = vmatprep.subr.bf16.mxu0 0
        %3422 = vmatpush1.bf16.msra.mxu0 0
        %3423 = vmatprep.subr.bf16.mxu0 0
        %3424 = vmatpush1.bf16.msra.mxu0 0
        %3425 = vmatprep.subr.bf16.mxu0 0
        %3426 = vmatpush1.bf16.msra.mxu0 0
        %3427 = vmatprep.subr.bf16.mxu0 0
        %3428 = vmatpush1.bf16.msra.mxu0 0
        %3429 = vmatprep.subr.bf16.mxu0 0
        %3430 = vmatpush1.bf16.msra.mxu0 0
        %3431 = vmatprep.subr.bf16.mxu0 0
        %3432 = vmatpush1.bf16.msra.mxu0 0
        %3433 = vmatprep.subr.bf16.mxu0 0
        %3434 = vmatpush1.bf16.msra.mxu0 0
        %3435 = vmatprep.subr.bf16.mxu0 0
        %3436 = vmatpush1.bf16.msra.mxu0 0
        %3437 = vmatprep.subr.bf16.mxu0 0
        %3438 = vmatpush1.bf16.msra.mxu0 0
        %3439 = vmatprep.subr.bf16.mxu0 0
        %3440 = vmatpush1.bf16.msra.mxu0 0
        %3441 = vmatprep.subr.bf16.mxu0 0
        %3442 = vmatpush1.bf16.msra.mxu0 0
        %3443 = vmatprep.subr.bf16.mxu0 0
        %3444 = vmatpush1.bf16.msra.mxu0 0
        %3445 = vmatprep.subr.bf16.mxu0 0
        %3446 = vmatpush1.bf16.msra.mxu0 0
        %3447 = vmatprep.mubr.bf16.mxu0 0
        %3448 = vmatmul.mubr.bf16.gmra.mrb[0].mxu0 %v3413
        %v3449 = vpop.f32.mrb[0].mxu0
        %v3450 = vadd.f32 %v3175, %v3449
        %v3451 = vpop.f32.mrb[0].mxu0
        %v3452 = vadd.f32 %v3179, %v3451
        %v3453 = vpop.f32.mrb[0].mxu0
        %v3454 = vpop.f32.mrb[0].mxu0
        %3455 = vdwg.mxu0
        %3456 = vmatprep.subr.bf16.mxu0 %v3351
        %3457 = vmatpush1.bf16.msra.mxu0 %v3350
        %3458 = vmatprep.subr.bf16.mxu0 %v3367
        %3459 = vmatpush1.bf16.msra.mxu0 %v3366
        %3460 = vmatprep.subr.bf16.mxu0 0
        %3461 = vmatpush1.bf16.msra.mxu0 0
        %3462 = vmatprep.subr.bf16.mxu0 0
        %3463 = vmatpush1.bf16.msra.mxu0 0
        %3464 = vmatprep.subr.bf16.mxu0 0
        %3465 = vmatpush1.bf16.msra.mxu0 0
        %3466 = vmatprep.subr.bf16.mxu0 0
        %3467 = vmatpush1.bf16.msra.mxu0 0
        %3468 = vmatprep.subr.bf16.mxu0 0
        %3469 = vmatpush1.bf16.msra.mxu0 0
        %3470 = vmatprep.subr.bf16.mxu0 0
        %3471 = vmatpush1.bf16.msra.mxu0 0
        %3472 = vmatprep.subr.bf16.mxu0 0
        %3473 = vmatpush1.bf16.msra.mxu0 0
        %3474 = vmatprep.subr.bf16.mxu0 0
        %3475 = vmatpush1.bf16.msra.mxu0 0
        %3476 = vmatprep.subr.bf16.mxu0 0
        %3477 = vmatpush1.bf16.msra.mxu0 0
        %3478 = vmatprep.subr.bf16.mxu0 0
        %3479 = vmatpush1.bf16.msra.mxu0 0
        %3480 = vmatprep.subr.bf16.mxu0 0
        %3481 = vmatpush1.bf16.msra.mxu0 0
        %3482 = vmatprep.subr.bf16.mxu0 0
        %3483 = vmatpush1.bf16.msra.mxu0 0
        %3484 = vmatprep.subr.bf16.mxu0 0
        %3485 = vmatpush1.bf16.msra.mxu0 0
        %3486 = vmatprep.subr.bf16.mxu0 0
        %3487 = vmatpush1.bf16.msra.mxu0 0
        %3488 = vmatprep.mubr.bf16.mxu0 0
        %3489 = vmatmul.mubr.bf16.gmra.mrb[0].mxu0 %v3413
        %v3490 = vpop.f32.mrb[0].mxu0
        %v3491 = vadd.f32 %v3183, %v3490
        %v3492 = vpop.f32.mrb[0].mxu0
        %v3493 = vadd.f32 %v3187, %v3492
        %v3494 = vpop.f32.mrb[0].mxu0
        %v3495 = vpop.f32.mrb[0].mxu0
        %3496 = vdwg.mxu0
        %3497 = vmatprep.subr.bf16.mxu0 %v3353
        %3498 = vmatpush1.bf16.msra.mxu0 %v3352
        %3499 = vmatprep.subr.bf16.mxu0 %v3369
        %3500 = vmatpush1.bf16.msra.mxu0 %v3368
        %3501 = vmatprep.subr.bf16.mxu0 0
        %3502 = vmatpush1.bf16.msra.mxu0 0
        %3503 = vmatprep.subr.bf16.mxu0 0
        %3504 = vmatpush1.bf16.msra.mxu0 0
        %3505 = vmatprep.subr.bf16.mxu0 0
        %3506 = vmatpush1.bf16.msra.mxu0 0
        %3507 = vmatprep.subr.bf16.mxu0 0
        %3508 = vmatpush1.bf16.msra.mxu0 0
        %3509 = vmatprep.subr.bf16.mxu0 0
        %3510 = vmatpush1.bf16.msra.mxu0 0
        %3511 = vmatprep.subr.bf16.mxu0 0
        %3512 = vmatpush1.bf16.msra.mxu0 0
        %3513 = vmatprep.subr.bf16.mxu0 0
        %3514 = vmatpush1.bf16.msra.mxu0 0
        %3515 = vmatprep.subr.bf16.mxu0 0
        %3516 = vmatpush1.bf16.msra.mxu0 0
        %3517 = vmatprep.subr.bf16.mxu0 0
        %3518 = vmatpush1.bf16.msra.mxu0 0
        %3519 = vmatprep.subr.bf16.mxu0 0
        %3520 = vmatpush1.bf16.msra.mxu0 0
        %3521 = vmatprep.subr.bf16.mxu0 0
        %3522 = vmatpush1.bf16.msra.mxu0 0
        %3523 = vmatprep.subr.bf16.mxu0 0
        %3524 = vmatpush1.bf16.msra.mxu0 0
        %3525 = vmatprep.subr.bf16.mxu0 0
        %3526 = vmatpush1.bf16.msra.mxu0 0
        %3527 = vmatprep.subr.bf16.mxu0 0
        %3528 = vmatpush1.bf16.msra.mxu0 0
        %3529 = vmatprep.mubr.bf16.mxu0 0
        %3530 = vmatmul.mubr.bf16.gmra.mrb[0].mxu0 %v3413
        %v3531 = vpop.f32.mrb[0].mxu0
        %v3532 = vadd.f32 %v3191, %v3531
        %v3533 = vpop.f32.mrb[0].mxu0
        %v3534 = vadd.f32 %v3195, %v3533
        %v3535 = vpop.f32.mrb[0].mxu0
        %v3536 = vpop.f32.mrb[0].mxu0
        %3537 = vdwg.mxu0
        %3538 = vmatprep.subr.bf16.mxu0 %v3355
        %3539 = vmatpush1.bf16.msra.mxu0 %v3354
        %3540 = vmatprep.subr.bf16.mxu0 %v3371
        %3541 = vmatpush1.bf16.msra.mxu0 %v3370
        %3542 = vmatprep.subr.bf16.mxu0 0
        %3543 = vmatpush1.bf16.msra.mxu0 0
        %3544 = vmatprep.subr.bf16.mxu0 0
        %3545 = vmatpush1.bf16.msra.mxu0 0
        %3546 = vmatprep.subr.bf16.mxu0 0
        %3547 = vmatpush1.bf16.msra.mxu0 0
        %3548 = vmatprep.subr.bf16.mxu0 0
        %3549 = vmatpush1.bf16.msra.mxu0 0
        %3550 = vmatprep.subr.bf16.mxu0 0
        %3551 = vmatpush1.bf16.msra.mxu0 0
        %3552 = vmatprep.subr.bf16.mxu0 0
        %3553 = vmatpush1.bf16.msra.mxu0 0
        %3554 = vmatprep.subr.bf16.mxu0 0
        %3555 = vmatpush1.bf16.msra.mxu0 0
        %3556 = vmatprep.subr.bf16.mxu0 0
        %3557 = vmatpush1.bf16.msra.mxu0 0
        %3558 = vmatprep.subr.bf16.mxu0 0
        %3559 = vmatpush1.bf16.msra.mxu0 0
        %3560 = vmatprep.subr.bf16.mxu0 0
        %3561 = vmatpush1.bf16.msra.mxu0 0
        %3562 = vmatprep.subr.bf16.mxu0 0
        %3563 = vmatpush1.bf16.msra.mxu0 0
        %3564 = vmatprep.subr.bf16.mxu0 0
        %3565 = vmatpush1.bf16.msra.mxu0 0
        %3566 = vmatprep.subr.bf16.mxu0 0
        %3567 = vmatpush1.bf16.msra.mxu0 0
        %3568 = vmatprep.subr.bf16.mxu0 0
        %3569 = vmatpush1.bf16.msra.mxu0 0
        %3570 = vmatprep.mubr.bf16.mxu0 0
        %3571 = vmatmul.mubr.bf16.gmra.mrb[0].mxu0 %v3413
        %v3572 = vpop.f32.mrb[0].mxu0
        %v3573 = vadd.f32 %v3199, %v3572
        %v3574 = vpop.f32.mrb[0].mxu0
        %v3575 = vadd.f32 %v3203, %v3574
        %v3576 = vpop.f32.mrb[0].mxu0
        %v3577 = vpop.f32.mrb[0].mxu0
        %3578 = vdwg.mxu0
        %3579 = vmatprep.subr.bf16.mxu0 %v3357
        %3580 = vmatpush1.bf16.msra.mxu0 %v3356
        %3581 = vmatprep.subr.bf16.mxu0 %v3373
        %3582 = vmatpush1.bf16.msra.mxu0 %v3372
        %3583 = vmatprep.subr.bf16.mxu0 0
        %3584 = vmatpush1.bf16.msra.mxu0 0
        %3585 = vmatprep.subr.bf16.mxu0 0
        %3586 = vmatpush1.bf16.msra.mxu0 0
        %3587 = vmatprep.subr.bf16.mxu0 0
        %3588 = vmatpush1.bf16.msra.mxu0 0
        %3589 = vmatprep.subr.bf16.mxu0 0
        %3590 = vmatpush1.bf16.msra.mxu0 0
        %3591 = vmatprep.subr.bf16.mxu0 0
        %3592 = vmatpush1.bf16.msra.mxu0 0
        %3593 = vmatprep.subr.bf16.mxu0 0
        %3594 = vmatpush1.bf16.msra.mxu0 0
        %3595 = vmatprep.subr.bf16.mxu0 0
        %3596 = vmatpush1.bf16.msra.mxu0 0
        %3597 = vmatprep.subr.bf16.mxu0 0
        %3598 = vmatpush1.bf16.msra.mxu0 0
        %3599 = vmatprep.subr.bf16.mxu0 0
        %3600 = vmatpush1.bf16.msra.mxu0 0
        %3601 = vmatprep.subr.bf16.mxu0 0
        %3602 = vmatpush1.bf16.msra.mxu0 0
        %3603 = vmatprep.subr.bf16.mxu0 0
        %3604 = vmatpush1.bf16.msra.mxu0 0
        %3605 = vmatprep.subr.bf16.mxu0 0
        %3606 = vmatpush1.bf16.msra.mxu0 0
        %3607 = vmatprep.subr.bf16.mxu0 0
        %3608 = vmatpush1.bf16.msra.mxu0 0
        %3609 = vmatprep.subr.bf16.mxu0 0
        %3610 = vmatpush1.bf16.msra.mxu0 0
        %3611 = vmatprep.mubr.bf16.mxu0 0
        %3612 = vmatmul.mubr.bf16.gmra.mrb[0].mxu0 %v3413
        %v3613 = vpop.f32.mrb[0].mxu0
        %v3614 = vadd.f32 %v3207, %v3613
        %v3615 = vpop.f32.mrb[0].mxu0
        %v3616 = vadd.f32 %v3211, %v3615
        %v3617 = vpop.f32.mrb[0].mxu0
        %v3618 = vpop.f32.mrb[0].mxu0
        %3619 = vdwg.mxu0
        %3620 = vmatprep.subr.bf16.mxu0 %v3359
        %3621 = vmatpush1.bf16.msra.mxu0 %v3358
        %3622 = vmatprep.subr.bf16.mxu0 %v3375
        %3623 = vmatpush1.bf16.msra.mxu0 %v3374
        %3624 = vmatprep.subr.bf16.mxu0 0
        %3625 = vmatpush1.bf16.msra.mxu0 0
        %3626 = vmatprep.subr.bf16.mxu0 0
        %3627 = vmatpush1.bf16.msra.mxu0 0
        %3628 = vmatprep.subr.bf16.mxu0 0
        %3629 = vmatpush1.bf16.msra.mxu0 0
        %3630 = vmatprep.subr.bf16.mxu0 0
        %3631 = vmatpush1.bf16.msra.mxu0 0
        %3632 = vmatprep.subr.bf16.mxu0 0
        %3633 = vmatpush1.bf16.msra.mxu0 0
        %3634 = vmatprep.subr.bf16.mxu0 0
        %3635 = vmatpush1.bf16.msra.mxu0 0
        %3636 = vmatprep.subr.bf16.mxu0 0
        %3637 = vmatpush1.bf16.msra.mxu0 0
        %3638 = vmatprep.subr.bf16.mxu0 0
        %3639 = vmatpush1.bf16.msra.mxu0 0
        %3640 = vmatprep.subr.bf16.mxu0 0
        %3641 = vmatpush1.bf16.msra.mxu0 0
        %3642 = vmatprep.subr.bf16.mxu0 0
        %3643 = vmatpush1.bf16.msra.mxu0 0
        %3644 = vmatprep.subr.bf16.mxu0 0
        %3645 = vmatpush1.bf16.msra.mxu0 0
        %3646 = vmatprep.subr.bf16.mxu0 0
        %3647 = vmatpush1.bf16.msra.mxu0 0
        %3648 = vmatprep.subr.bf16.mxu0 0
        %3649 = vmatpush1.bf16.msra.mxu0 0
        %3650 = vmatprep.subr.bf16.mxu0 0
        %3651 = vmatpush1.bf16.msra.mxu0 0
        %3652 = vmatprep.mubr.bf16.mxu0 0
        %3653 = vmatmul.mubr.bf16.gmra.mrb[0].mxu0 %v3413
        %v3654 = vpop.f32.mrb[0].mxu0
        %v3655 = vadd.f32 %v3215, %v3654
        %v3656 = vpop.f32.mrb[0].mxu0
        %v3657 = vadd.f32 %v3219, %v3656
        %v3658 = vpop.f32.mrb[0].mxu0
        %v3659 = vpop.f32.mrb[0].mxu0
        %3660 = vdwg.mxu0
        %3661 = vmatprep.subr.bf16.mxu0 %v3361
        %3662 = vmatpush1.bf16.msra.mxu0 %v3360
        %3663 = vmatprep.subr.bf16.mxu0 %v3377
        %3664 = vmatpush1.bf16.msra.mxu0 %v3376
        %3665 = vmatprep.subr.bf16.mxu0 0
        %3666 = vmatpush1.bf16.msra.mxu0 0
        %3667 = vmatprep.subr.bf16.mxu0 0
        %3668 = vmatpush1.bf16.msra.mxu0 0
        %3669 = vmatprep.subr.bf16.mxu0 0
        %3670 = vmatpush1.bf16.msra.mxu0 0
        %3671 = vmatprep.subr.bf16.mxu0 0
        %3672 = vmatpush1.bf16.msra.mxu0 0
        %3673 = vmatprep.subr.bf16.mxu0 0
        %3674 = vmatpush1.bf16.msra.mxu0 0
        %3675 = vmatprep.subr.bf16.mxu0 0
        %3676 = vmatpush1.bf16.msra.mxu0 0
        %3677 = vmatprep.subr.bf16.mxu0 0
        %3678 = vmatpush1.bf16.msra.mxu0 0
        %3679 = vmatprep.subr.bf16.mxu0 0
        %3680 = vmatpush1.bf16.msra.mxu0 0
        %3681 = vmatprep.subr.bf16.mxu0 0
        %3682 = vmatpush1.bf16.msra.mxu0 0
        %3683 = vmatprep.subr.bf16.mxu0 0
        %3684 = vmatpush1.bf16.msra.mxu0 0
        %3685 = vmatprep.subr.bf16.mxu0 0
        %3686 = vmatpush1.bf16.msra.mxu0 0
        %3687 = vmatprep.subr.bf16.mxu0 0
        %3688 = vmatpush1.bf16.msra.mxu0 0
        %3689 = vmatprep.subr.bf16.mxu0 0
        %3690 = vmatpush1.bf16.msra.mxu0 0
        %3691 = vmatprep.subr.bf16.mxu0 0
        %3692 = vmatpush1.bf16.msra.mxu0 0
        %3693 = vmatprep.mubr.bf16.mxu0 0
        %3694 = vmatmul.mubr.bf16.gmra.mrb[0].mxu0 %v3413
        %v3695 = vpop.f32.mrb[0].mxu0
        %v3696 = vadd.f32 %v3223, %v3695
        %v3697 = vpop.f32.mrb[0].mxu0
        %v3698 = vadd.f32 %v3227, %v3697
        %v3699 = vpop.f32.mrb[0].mxu0
        %v3700 = vpop.f32.mrb[0].mxu0
        %3701 = vdwg.mxu0
        %3702 = vmatprep.subr.bf16.mxu0 %v3363
        %3703 = vmatpush1.bf16.msra.mxu0 %v3362
        %3704 = vmatprep.subr.bf16.mxu0 %v3379
        %3705 = vmatpush1.bf16.msra.mxu0 %v3378
        %3706 = vmatprep.subr.bf16.mxu0 0
        %3707 = vmatpush1.bf16.msra.mxu0 0
        %3708 = vmatprep.subr.bf16.mxu0 0
        %3709 = vmatpush1.bf16.msra.mxu0 0
        %3710 = vmatprep.subr.bf16.mxu0 0
        %3711 = vmatpush1.bf16.msra.mxu0 0
        %3712 = vmatprep.subr.bf16.mxu0 0
        %3713 = vmatpush1.bf16.msra.mxu0 0
        %3714 = vmatprep.subr.bf16.mxu0 0
        %3715 = vmatpush1.bf16.msra.mxu0 0
        %3716 = vmatprep.subr.bf16.mxu0 0
        %3717 = vmatpush1.bf16.msra.mxu0 0
        %3718 = vmatprep.subr.bf16.mxu0 0
        %3719 = vmatpush1.bf16.msra.mxu0 0
        %3720 = vmatprep.subr.bf16.mxu0 0
        %3721 = vmatpush1.bf16.msra.mxu0 0
        %3722 = vmatprep.subr.bf16.mxu0 0
        %3723 = vmatpush1.bf16.msra.mxu0 0
        %3724 = vmatprep.subr.bf16.mxu0 0
        %3725 = vmatpush1.bf16.msra.mxu0 0
        %3726 = vmatprep.subr.bf16.mxu0 0
        %3727 = vmatpush1.bf16.msra.mxu0 0
        %3728 = vmatprep.subr.bf16.mxu0 0
        %3729 = vmatpush1.bf16.msra.mxu0 0
        %3730 = vmatprep.subr.bf16.mxu0 0
        %3731 = vmatpush1.bf16.msra.mxu0 0
        %3732 = vmatprep.subr.bf16.mxu0 0
        %3733 = vmatpush1.bf16.msra.mxu0 0
        %3734 = vmatprep.mubr.bf16.mxu0 0
        %3735 = vmatmul.mubr.bf16.gmra.mrb[0].mxu0 %v3413
        %v3736 = vpop.f32.mrb[0].mxu0
        %v3737 = vadd.f32 %v3231, %v3736
        %v3738 = vpop.f32.mrb[0].mxu0
        %v3739 = vadd.f32 %v3235, %v3738
        %v3740 = vpop.f32.mrb[0].mxu0
        %v3741 = vpop.f32.mrb[0].mxu0
        %3742 = vdwg.mxu0
        %v3743 = vmax.f32 %v3450, 0.0
        %v3744 = vmax.f32 %v3452, 0.0
        %v3745 = vmax.f32 %v3491, 0.0
        %v3746 = vmax.f32 %v3493, 0.0
        %v3747 = vmax.f32 %v3532, 0.0
        %v3748 = vmax.f32 %v3534, 0.0
        %v3749 = vmax.f32 %v3573, 0.0
        %v3750 = vmax.f32 %v3575, 0.0
        %v3751 = vmax.f32 %v3614, 0.0
        %v3752 = vmax.f32 %v3616, 0.0
        %v3753 = vmax.f32 %v3655, 0.0
        %v3754 = vmax.f32 %v3657, 0.0
        %v3755 = vmax.f32 %v3696, 0.0
        %v3756 = vmax.f32 %v3698, 0.0
        %v3757 = vmax.f32 %v3737, 0.0
        %v3758 = vmax.f32 %v3739, 0.0
        %v3759 = vpack.c.bf16 %v3743, %v3743
        %v3760 = vpack.c.bf16 %v3744, %v3744
        %v3761 = vpack.c.bf16 %v3745, %v3745
        %v3762 = vpack.c.bf16 %v3746, %v3746
        %v3763 = vpack.c.bf16 %v3747, %v3747
        %v3764 = vpack.c.bf16 %v3748, %v3748
        %v3765 = vpack.c.bf16 %v3749, %v3749
        %v3766 = vpack.c.bf16 %v3750, %v3750
        %v3767 = vpack.c.bf16 %v3751, %v3751
        %v3768 = vpack.c.bf16 %v3752, %v3752
        %v3769 = vpack.c.bf16 %v3753, %v3753
        %v3770 = vpack.c.bf16 %v3754, %v3754
        %v3771 = vpack.c.bf16 %v3755, %v3755
        %v3772 = vpack.c.bf16 %v3756, %v3756
        %v3773 = vpack.c.bf16 %v3757, %v3757
        %v3774 = vpack.c.bf16 %v3758, %v3758
        %v3775 = vld [vmem:[%s10] sm:$0xf]
        %v3776 = vld [vmem:[%s10 + $0x4] sm:$0xf]
        %v3777 = vld [vmem:[%s10 + $0x8] sm:$0xf]
        %v3778 = vld [vmem:[%s10 + $0xc] sm:$0xf]
        %v3779 = vld [vmem:[%s10 + $0x10] sm:$0xf]
        %v3780 = vld [vmem:[%s10 + $0x14] sm:$0xf]
        %v3781 = vld [vmem:[%s10 + $0x18] sm:$0xf]
        %v3782 = vld [vmem:[%s10 + $0x1c] sm:$0xf]
        %v3783 = vld [vmem:[%s10 + $0x20] sm:$0xf]
        %v3784 = vld [vmem:[%s10 + $0x24] sm:$0xf]
        %v3785 = vld [vmem:[%s10 + $0x28] sm:$0xf]
        %v3786 = vld [vmem:[%s10 + $0x2c] sm:$0xf]
        %v3787 = vld [vmem:[%s10 + $0x30] sm:$0xf]
        %v3788 = vld [vmem:[%s10 + $0x34] sm:$0xf]
        %v3789 = vld [vmem:[%s10 + $0x38] sm:$0xf]
        %v3790 = vld [vmem:[%s10 + $0x3c] sm:$0xf]
        %v3791 = vld [vmem:[%s10 + $0x40] sm:$0xf]
        %v3792 = vld [vmem:[%s10 + $0x44] sm:$0xf]
        %v3793 = vld [vmem:[%s10 + $0x48] sm:$0xf]
        %v3794 = vld [vmem:[%s10 + $0x4c] sm:$0xf]
        %v3795 = vld [vmem:[%s10 + $0x50] sm:$0xf]
        %v3796 = vld [vmem:[%s10 + $0x54] sm:$0xf]
        %v3797 = vld [vmem:[%s10 + $0x58] sm:$0xf]
        %v3798 = vld [vmem:[%s10 + $0x5c] sm:$0xf]
        %v3799 = vld [vmem:[%s10 + $0x60] sm:$0xf]
        %v3800 = vld [vmem:[%s10 + $0x64] sm:$0xf]
        %v3801 = vld [vmem:[%s10 + $0x68] sm:$0xf]
        %v3802 = vld [vmem:[%s10 + $0x6c] sm:$0xf]
        %v3803 = vld [vmem:[%s10 + $0x70] sm:$0xf]
        %v3804 = vld [vmem:[%s10 + $0x74] sm:$0xf]
        %v3805 = vld [vmem:[%s10 + $0x78] sm:$0xf]
        %v3806 = vld [vmem:[%s10 + $0x7c] sm:$0xf]
        %v3807 = vld [vmem:[%s10 + $0x80] sm:$0xf]
        %v3808 = vld [vmem:[%s10 + $0x84] sm:$0xf]
        %v3809 = vld [vmem:[%s10 + $0x88] sm:$0xf]
        %v3810 = vld [vmem:[%s10 + $0x8c] sm:$0xf]
        %v3811 = vld [vmem:[%s10 + $0x90] sm:$0xf]
        %v3812 = vld [vmem:[%s10 + $0x94] sm:$0xf]
        %v3813 = vld [vmem:[%s10 + $0x98] sm:$0xf]
        %v3814 = vld [vmem:[%s10 + $0x9c] sm:$0xf]
        %v3815 = vld [vmem:[%s10 + $0xa0] sm:$0xf]
        %v3816 = vld [vmem:[%s10 + $0xa4] sm:$0xf]
        %v3817 = vld [vmem:[%s10 + $0xa8] sm:$0xf]
        %v3818 = vld [vmem:[%s10 + $0xac] sm:$0xf]
        %v3819 = vld [vmem:[%s10 + $0xb0] sm:$0xf]
        %v3820 = vld [vmem:[%s10 + $0xb4] sm:$0xf]
        %v3821 = vld [vmem:[%s10 + $0xb8] sm:$0xf]
        %v3822 = vld [vmem:[%s10 + $0xbc] sm:$0xf]
        %v3823 = vld [vmem:[%s10 + $0xc0] sm:$0xf]
        %v3824 = vld [vmem:[%s10 + $0xc4] sm:$0xf]
        %v3825 = vld [vmem:[%s10 + $0xc8] sm:$0xf]
        %v3826 = vld [vmem:[%s10 + $0xcc] sm:$0xf]
        %v3827 = vld [vmem:[%s10 + $0xd0] sm:$0xf]
        %v3828 = vld [vmem:[%s10 + $0xd4] sm:$0xf]
        %v3829 = vld [vmem:[%s10 + $0xd8] sm:$0xf]
        %v3830 = vld [vmem:[%s10 + $0xdc] sm:$0xf]
        %v3831 = vld [vmem:[%s10 + $0xe0] sm:$0xf]
        %v3832 = vld [vmem:[%s10 + $0xe4] sm:$0xf]
        %v3833 = vld [vmem:[%s10 + $0xe8] sm:$0xf]
        %v3834 = vld [vmem:[%s10 + $0xec] sm:$0xf]
        %v3835 = vld [vmem:[%s10 + $0xf0] sm:$0xf]
        %v3836 = vld [vmem:[%s10 + $0xf4] sm:$0xf]
        %v3837 = vld [vmem:[%s10 + $0xf8] sm:$0xf]
        %v3838 = vld [vmem:[%s10 + $0xfc] sm:$0xf]
        %v3839 = vld [vmem:[%s10 + $0x100] sm:$0xf]
        %v3840 = vld [vmem:[%s10 + $0x104] sm:$0xf]
        %v3841 = vld [vmem:[%s10 + $0x108] sm:$0xf]
        %v3842 = vld [vmem:[%s10 + $0x10c] sm:$0xf]
        %v3843 = vld [vmem:[%s10 + $0x110] sm:$0xf]
        %v3844 = vld [vmem:[%s10 + $0x114] sm:$0xf]
        %v3845 = vld [vmem:[%s10 + $0x118] sm:$0xf]
        %v3846 = vld [vmem:[%s10 + $0x11c] sm:$0xf]
        %v3847 = vld [vmem:[%s10 + $0x120] sm:$0xf]
        %v3848 = vld [vmem:[%s10 + $0x124] sm:$0xf]
        %v3849 = vld [vmem:[%s10 + $0x128] sm:$0xf]
        %v3850 = vld [vmem:[%s10 + $0x12c] sm:$0xf]
        %v3851 = vld [vmem:[%s10 + $0x130] sm:$0xf]
        %v3852 = vld [vmem:[%s10 + $0x134] sm:$0xf]
        %v3853 = vld [vmem:[%s10 + $0x138] sm:$0xf]
        %v3854 = vld [vmem:[%s10 + $0x13c] sm:$0xf]
        %v3855 = vld [vmem:[%s10 + $0x140] sm:$0xf]
        %v3856 = vld [vmem:[%s10 + $0x144] sm:$0xf]
        %v3857 = vld [vmem:[%s10 + $0x148] sm:$0xf]
        %v3858 = vld [vmem:[%s10 + $0x14c] sm:$0xf]
        %v3859 = vld [vmem:[%s10 + $0x150] sm:$0xf]
        %v3860 = vld [vmem:[%s10 + $0x154] sm:$0xf]
        %v3861 = vld [vmem:[%s10 + $0x158] sm:$0xf]
        %v3862 = vld [vmem:[%s10 + $0x15c] sm:$0xf]
        %v3863 = vld [vmem:[%s10 + $0x160] sm:$0xf]
        %v3864 = vld [vmem:[%s10 + $0x164] sm:$0xf]
        %v3865 = vld [vmem:[%s10 + $0x168] sm:$0xf]
        %v3866 = vld [vmem:[%s10 + $0x16c] sm:$0xf]
        %v3867 = vld [vmem:[%s10 + $0x170] sm:$0xf]
        %v3868 = vld [vmem:[%s10 + $0x174] sm:$0xf]
        %v3869 = vld [vmem:[%s10 + $0x178] sm:$0xf]
        %v3870 = vld [vmem:[%s10 + $0x17c] sm:$0xf]
        %v3871 = vld [vmem:[%s10 + $0x180] sm:$0xf]
        %v3872 = vld [vmem:[%s10 + $0x184] sm:$0xf]
        %v3873 = vld [vmem:[%s10 + $0x188] sm:$0xf]
        %v3874 = vld [vmem:[%s10 + $0x18c] sm:$0xf]
        %v3875 = vld [vmem:[%s10 + $0x190] sm:$0xf]
        %v3876 = vld [vmem:[%s10 + $0x194] sm:$0xf]
        %v3877 = vld [vmem:[%s10 + $0x198] sm:$0xf]
        %v3878 = vld [vmem:[%s10 + $0x19c] sm:$0xf]
        %v3879 = vld [vmem:[%s10 + $0x1a0] sm:$0xf]
        %v3880 = vld [vmem:[%s10 + $0x1a4] sm:$0xf]
        %v3881 = vld [vmem:[%s10 + $0x1a8] sm:$0xf]
        %v3882 = vld [vmem:[%s10 + $0x1ac] sm:$0xf]
        %v3883 = vld [vmem:[%s10 + $0x1b0] sm:$0xf]
        %v3884 = vld [vmem:[%s10 + $0x1b4] sm:$0xf]
        %v3885 = vld [vmem:[%s10 + $0x1b8] sm:$0xf]
        %v3886 = vld [vmem:[%s10 + $0x1bc] sm:$0xf]
        %v3887 = vld [vmem:[%s10 + $0x1c0] sm:$0xf]
        %v3888 = vld [vmem:[%s10 + $0x1c4] sm:$0xf]
        %v3889 = vld [vmem:[%s10 + $0x1c8] sm:$0xf]
        %v3890 = vld [vmem:[%s10 + $0x1cc] sm:$0xf]
        %v3891 = vld [vmem:[%s10 + $0x1d0] sm:$0xf]
        %v3892 = vld [vmem:[%s10 + $0x1d4] sm:$0xf]
        %v3893 = vld [vmem:[%s10 + $0x1d8] sm:$0xf]
        %v3894 = vld [vmem:[%s10 + $0x1dc] sm:$0xf]
        %v3895 = vld [vmem:[%s10 + $0x1e0] sm:$0xf]
        %v3896 = vld [vmem:[%s10 + $0x1e4] sm:$0xf]
        %v3897 = vld [vmem:[%s10 + $0x1e8] sm:$0xf]
        %v3898 = vld [vmem:[%s10 + $0x1ec] sm:$0xf]
        %v3899 = vld [vmem:[%s10 + $0x1f0] sm:$0xf]
        %v3900 = vld [vmem:[%s10 + $0x1f4] sm:$0xf]
        %v3901 = vld [vmem:[%s10 + $0x1f8] sm:$0xf]
        %v3902 = vld [vmem:[%s10 + $0x1fc] sm:$0xf]
        %v3903 = vld [vmem:[%s10 + $0x200] sm:$0xf]
        %v3904 = vld [vmem:[%s10 + $0x204] sm:$0xf]
        %v3905 = vld [vmem:[%s10 + $0x208] sm:$0xf]
        %v3906 = vld [vmem:[%s10 + $0x20c] sm:$0xf]
        %v3907 = vld [vmem:[%s10 + $0x210] sm:$0xf]
        %v3908 = vld [vmem:[%s10 + $0x214] sm:$0xf]
        %v3909 = vld [vmem:[%s10 + $0x218] sm:$0xf]
        %v3910 = vld [vmem:[%s10 + $0x21c] sm:$0xf]
        %v3911 = vld [vmem:[%s10 + $0x220] sm:$0xf]
        %v3912 = vld [vmem:[%s10 + $0x224] sm:$0xf]
        %v3913 = vld [vmem:[%s10 + $0x228] sm:$0xf]
        %v3914 = vld [vmem:[%s10 + $0x22c] sm:$0xf]
        %v3915 = vld [vmem:[%s10 + $0x230] sm:$0xf]
        %v3916 = vld [vmem:[%s10 + $0x234] sm:$0xf]
        %v3917 = vld [vmem:[%s10 + $0x238] sm:$0xf]
        %v3918 = vld [vmem:[%s10 + $0x23c] sm:$0xf]
        %v3919 = vld [vmem:[%s10 + $0x240] sm:$0xf]
        %v3920 = vld [vmem:[%s10 + $0x244] sm:$0xf]
        %v3921 = vld [vmem:[%s10 + $0x248] sm:$0xf]
        %v3922 = vld [vmem:[%s10 + $0x24c] sm:$0xf]
        %v3923 = vld [vmem:[%s10 + $0x250] sm:$0xf]
        %v3924 = vld [vmem:[%s10 + $0x254] sm:$0xf]
        %v3925 = vld [vmem:[%s10 + $0x258] sm:$0xf]
        %v3926 = vld [vmem:[%s10 + $0x25c] sm:$0xf]
        %v3927 = vld [vmem:[%s10 + $0x260] sm:$0xf]
        %v3928 = vld [vmem:[%s10 + $0x264] sm:$0xf]
        %v3929 = vld [vmem:[%s10 + $0x268] sm:$0xf]
        %v3930 = vld [vmem:[%s10 + $0x26c] sm:$0xf]
        %v3931 = vld [vmem:[%s10 + $0x270] sm:$0xf]
        %v3932 = vld [vmem:[%s10 + $0x274] sm:$0xf]
        %v3933 = vld [vmem:[%s10 + $0x278] sm:$0xf]
        %v3934 = vld [vmem:[%s10 + $0x27c] sm:$0xf]
        %v3935 = vld [vmem:[%s10 + $0x280] sm:$0xf]
        %v3936 = vld [vmem:[%s10 + $0x284] sm:$0xf]
        %v3937 = vld [vmem:[%s10 + $0x288] sm:$0xf]
        %v3938 = vld [vmem:[%s10 + $0x28c] sm:$0xf]
        %v3939 = vld [vmem:[%s10 + $0x290] sm:$0xf]
        %v3940 = vld [vmem:[%s10 + $0x294] sm:$0xf]
        %v3941 = vld [vmem:[%s10 + $0x298] sm:$0xf]
        %v3942 = vld [vmem:[%s10 + $0x29c] sm:$0xf]
        %v3943 = vld [vmem:[%s10 + $0x2a0] sm:$0xf]
        %v3944 = vld [vmem:[%s10 + $0x2a4] sm:$0xf]
        %v3945 = vld [vmem:[%s10 + $0x2a8] sm:$0xf]
        %v3946 = vld [vmem:[%s10 + $0x2ac] sm:$0xf]
        %v3947 = vld [vmem:[%s10 + $0x2b0] sm:$0xf]
        %v3948 = vld [vmem:[%s10 + $0x2b4] sm:$0xf]
        %v3949 = vld [vmem:[%s10 + $0x2b8] sm:$0xf]
        %v3950 = vld [vmem:[%s10 + $0x2bc] sm:$0xf]
        %v3951 = vld [vmem:[%s10 + $0x2c0] sm:$0xf]
        %v3952 = vld [vmem:[%s10 + $0x2c4] sm:$0xf]
        %v3953 = vld [vmem:[%s10 + $0x2c8] sm:$0xf]
        %v3954 = vld [vmem:[%s10 + $0x2cc] sm:$0xf]
        %v3955 = vld [vmem:[%s10 + $0x2d0] sm:$0xf]
        %v3956 = vld [vmem:[%s10 + $0x2d4] sm:$0xf]
        %v3957 = vld [vmem:[%s10 + $0x2d8] sm:$0xf]
        %v3958 = vld [vmem:[%s10 + $0x2dc] sm:$0xf]
        %v3959 = vld [vmem:[%s10 + $0x2e0] sm:$0xf]
        %v3960 = vld [vmem:[%s10 + $0x2e4] sm:$0xf]
        %v3961 = vld [vmem:[%s10 + $0x2e8] sm:$0xf]
        %v3962 = vld [vmem:[%s10 + $0x2ec] sm:$0xf]
        %v3963 = vld [vmem:[%s10 + $0x2f0] sm:$0xf]
        %v3964 = vld [vmem:[%s10 + $0x2f4] sm:$0xf]
        %v3965 = vld [vmem:[%s10 + $0x2f8] sm:$0xf]
        %v3966 = vld [vmem:[%s10 + $0x2fc] sm:$0xf]
        %v3967 = vld [vmem:[%s10 + $0x300] sm:$0xf]
        %v3968 = vld [vmem:[%s10 + $0x304] sm:$0xf]
        %v3969 = vld [vmem:[%s10 + $0x308] sm:$0xf]
        %v3970 = vld [vmem:[%s10 + $0x30c] sm:$0xf]
        %v3971 = vld [vmem:[%s10 + $0x310] sm:$0xf]
        %v3972 = vld [vmem:[%s10 + $0x314] sm:$0xf]
        %v3973 = vld [vmem:[%s10 + $0x318] sm:$0xf]
        %v3974 = vld [vmem:[%s10 + $0x31c] sm:$0xf]
        %v3975 = vld [vmem:[%s10 + $0x320] sm:$0xf]
        %v3976 = vld [vmem:[%s10 + $0x324] sm:$0xf]
        %v3977 = vld [vmem:[%s10 + $0x328] sm:$0xf]
        %v3978 = vld [vmem:[%s10 + $0x32c] sm:$0xf]
        %v3979 = vld [vmem:[%s10 + $0x330] sm:$0xf]
        %v3980 = vld [vmem:[%s10 + $0x334] sm:$0xf]
        %v3981 = vld [vmem:[%s10 + $0x338] sm:$0xf]
        %v3982 = vld [vmem:[%s10 + $0x33c] sm:$0xf]
        %v3983 = vld [vmem:[%s10 + $0x340] sm:$0xf]
        %v3984 = vld [vmem:[%s10 + $0x344] sm:$0xf]
        %v3985 = vld [vmem:[%s10 + $0x348] sm:$0xf]
        %v3986 = vld [vmem:[%s10 + $0x34c] sm:$0xf]
        %v3987 = vld [vmem:[%s10 + $0x350] sm:$0xf]
        %v3988 = vld [vmem:[%s10 + $0x354] sm:$0xf]
        %v3989 = vld [vmem:[%s10 + $0x358] sm:$0xf]
        %v3990 = vld [vmem:[%s10 + $0x35c] sm:$0xf]
        %v3991 = vld [vmem:[%s10 + $0x360] sm:$0xf]
        %v3992 = vld [vmem:[%s10 + $0x364] sm:$0xf]
        %v3993 = vld [vmem:[%s10 + $0x368] sm:$0xf]
        %v3994 = vld [vmem:[%s10 + $0x36c] sm:$0xf]
        %v3995 = vld [vmem:[%s10 + $0x370] sm:$0xf]
        %v3996 = vld [vmem:[%s10 + $0x374] sm:$0xf]
        %v3997 = vld [vmem:[%s10 + $0x378] sm:$0xf]
        %v3998 = vld [vmem:[%s10 + $0x37c] sm:$0xf]
        %v3999 = vld [vmem:[%s10 + $0x380] sm:$0xf]
        %v4000 = vld [vmem:[%s10 + $0x384] sm:$0xf]
        %v4001 = vld [vmem:[%s10 + $0x388] sm:$0xf]
        %v4002 = vld [vmem:[%s10 + $0x38c] sm:$0xf]
        %v4003 = vld [vmem:[%s10 + $0x390] sm:$0xf]
        %v4004 = vld [vmem:[%s10 + $0x394] sm:$0xf]
        %v4005 = vld [vmem:[%s10 + $0x398] sm:$0xf]
        %v4006 = vld [vmem:[%s10 + $0x39c] sm:$0xf]
        %v4007 = vld [vmem:[%s10 + $0x3a0] sm:$0xf]
        %v4008 = vld [vmem:[%s10 + $0x3a4] sm:$0xf]
        %v4009 = vld [vmem:[%s10 + $0x3a8] sm:$0xf]
        %v4010 = vld [vmem:[%s10 + $0x3ac] sm:$0xf]
        %v4011 = vld [vmem:[%s10 + $0x3b0] sm:$0xf]
        %v4012 = vld [vmem:[%s10 + $0x3b4] sm:$0xf]
        %v4013 = vld [vmem:[%s10 + $0x3b8] sm:$0xf]
        %v4014 = vld [vmem:[%s10 + $0x3bc] sm:$0xf]
        %v4015 = vld [vmem:[%s10 + $0x3c0] sm:$0xf]
        %v4016 = vld [vmem:[%s10 + $0x3c4] sm:$0xf]
        %v4017 = vld [vmem:[%s10 + $0x3c8] sm:$0xf]
        %v4018 = vld [vmem:[%s10 + $0x3cc] sm:$0xf]
        %v4019 = vld [vmem:[%s10 + $0x3d0] sm:$0xf]
        %v4020 = vld [vmem:[%s10 + $0x3d4] sm:$0xf]
        %v4021 = vld [vmem:[%s10 + $0x3d8] sm:$0xf]
        %v4022 = vld [vmem:[%s10 + $0x3dc] sm:$0xf]
        %v4023 = vld [vmem:[%s10 + $0x3e0] sm:$0xf]
        %v4024 = vld [vmem:[%s10 + $0x3e4] sm:$0xf]
        %v4025 = vld [vmem:[%s10 + $0x3e8] sm:$0xf]
        %v4026 = vld [vmem:[%s10 + $0x3ec] sm:$0xf]
        %v4027 = vld [vmem:[%s10 + $0x3f0] sm:$0xf]
        %v4028 = vld [vmem:[%s10 + $0x3f4] sm:$0xf]
        %v4029 = vld [vmem:[%s10 + $0x3f8] sm:$0xf]
        %v4030 = vld [vmem:[%s10 + $0x3fc] sm:$0xf]
        %v4031 = vld [vmem:[%s11] sm:$0x1]
        %v4033 = vlaneseq
        %v4034 = vshrl.u32 %v4033, 7
        %v4035 = vsub.s32 0, %v4034
        %v4036 = vrot.slane %v4031, %v4035
        %v4294 = vunpack.c.l.b16 %v3775
        %v4295 = vunpack.c.l.b16 %v3776
        %v4296 = vunpack.c.l.b16 %v3777
        %v4297 = vunpack.c.l.b16 %v3778
        %v4298 = vunpack.c.l.b16 %v3779
        %v4299 = vunpack.c.l.b16 %v3780
        %v4300 = vunpack.c.l.b16 %v3781
        %v4301 = vunpack.c.l.b16 %v3782
        %v4302 = vunpack.c.l.b16 %v3783
        %v4303 = vunpack.c.l.b16 %v3784
        %v4304 = vunpack.c.l.b16 %v3785
        %v4305 = vunpack.c.l.b16 %v3786
        %v4306 = vunpack.c.l.b16 %v3787
        %v4307 = vunpack.c.l.b16 %v3788
        %v4308 = vunpack.c.l.b16 %v3789
        %v4309 = vunpack.c.l.b16 %v3790
        %v4310 = vunpack.c.l.b16 %v3791
        %v4311 = vunpack.c.l.b16 %v3792
        %v4312 = vunpack.c.l.b16 %v3793
        %v4313 = vunpack.c.l.b16 %v3794
        %v4314 = vunpack.c.l.b16 %v3795
        %v4315 = vunpack.c.l.b16 %v3796
        %v4316 = vunpack.c.l.b16 %v3797
        %v4317 = vunpack.c.l.b16 %v3798
        %v4318 = vunpack.c.l.b16 %v3799
        %v4319 = vunpack.c.l.b16 %v3800
        %v4320 = vunpack.c.l.b16 %v3801
        %v4321 = vunpack.c.l.b16 %v3802
        %v4322 = vunpack.c.l.b16 %v3803
        %v4323 = vunpack.c.l.b16 %v3804
        %v4324 = vunpack.c.l.b16 %v3805
        %v4325 = vunpack.c.l.b16 %v3806
        %v4326 = vunpack.c.l.b16 %v3807
        %v4327 = vunpack.c.l.b16 %v3808
        %v4328 = vunpack.c.l.b16 %v3809
        %v4329 = vunpack.c.l.b16 %v3810
        %v4330 = vunpack.c.l.b16 %v3811
        %v4331 = vunpack.c.l.b16 %v3812
        %v4332 = vunpack.c.l.b16 %v3813
        %v4333 = vunpack.c.l.b16 %v3814
        %v4334 = vunpack.c.l.b16 %v3815
        %v4335 = vunpack.c.l.b16 %v3816
        %v4336 = vunpack.c.l.b16 %v3817
        %v4337 = vunpack.c.l.b16 %v3818
        %v4338 = vunpack.c.l.b16 %v3819
        %v4339 = vunpack.c.l.b16 %v3820
        %v4340 = vunpack.c.l.b16 %v3821
        %v4341 = vunpack.c.l.b16 %v3822
        %v4342 = vunpack.c.l.b16 %v3823
        %v4343 = vunpack.c.l.b16 %v3824
        %v4344 = vunpack.c.l.b16 %v3825
        %v4345 = vunpack.c.l.b16 %v3826
        %v4346 = vunpack.c.l.b16 %v3827
        %v4347 = vunpack.c.l.b16 %v3828
        %v4348 = vunpack.c.l.b16 %v3829
        %v4349 = vunpack.c.l.b16 %v3830
        %v4350 = vunpack.c.l.b16 %v3831
        %v4351 = vunpack.c.l.b16 %v3832
        %v4352 = vunpack.c.l.b16 %v3833
        %v4353 = vunpack.c.l.b16 %v3834
        %v4354 = vunpack.c.l.b16 %v3835
        %v4355 = vunpack.c.l.b16 %v3836
        %v4356 = vunpack.c.l.b16 %v3837
        %v4357 = vunpack.c.l.b16 %v3838
        %v4358 = vunpack.c.l.b16 %v3839
        %v4359 = vunpack.c.l.b16 %v3840
        %v4360 = vunpack.c.l.b16 %v3841
        %v4361 = vunpack.c.l.b16 %v3842
        %v4362 = vunpack.c.l.b16 %v3843
        %v4363 = vunpack.c.l.b16 %v3844
        %v4364 = vunpack.c.l.b16 %v3845
        %v4365 = vunpack.c.l.b16 %v3846
        %v4366 = vunpack.c.l.b16 %v3847
        %v4367 = vunpack.c.l.b16 %v3848
        %v4368 = vunpack.c.l.b16 %v3849
        %v4369 = vunpack.c.l.b16 %v3850
        %v4370 = vunpack.c.l.b16 %v3851
        %v4371 = vunpack.c.l.b16 %v3852
        %v4372 = vunpack.c.l.b16 %v3853
        %v4373 = vunpack.c.l.b16 %v3854
        %v4374 = vunpack.c.l.b16 %v3855
        %v4375 = vunpack.c.l.b16 %v3856
        %v4376 = vunpack.c.l.b16 %v3857
        %v4377 = vunpack.c.l.b16 %v3858
        %v4378 = vunpack.c.l.b16 %v3859
        %v4379 = vunpack.c.l.b16 %v3860
        %v4380 = vunpack.c.l.b16 %v3861
        %v4381 = vunpack.c.l.b16 %v3862
        %v4382 = vunpack.c.l.b16 %v3863
        %v4383 = vunpack.c.l.b16 %v3864
        %v4384 = vunpack.c.l.b16 %v3865
        %v4385 = vunpack.c.l.b16 %v3866
        %v4386 = vunpack.c.l.b16 %v3867
        %v4387 = vunpack.c.l.b16 %v3868
        %v4388 = vunpack.c.l.b16 %v3869
        %v4389 = vunpack.c.l.b16 %v3870
        %v4390 = vunpack.c.l.b16 %v3871
        %v4391 = vunpack.c.l.b16 %v3872
        %v4392 = vunpack.c.l.b16 %v3873
        %v4393 = vunpack.c.l.b16 %v3874
        %v4394 = vunpack.c.l.b16 %v3875
        %v4395 = vunpack.c.l.b16 %v3876
        %v4396 = vunpack.c.l.b16 %v3877
        %v4397 = vunpack.c.l.b16 %v3878
        %v4398 = vunpack.c.l.b16 %v3879
        %v4399 = vunpack.c.l.b16 %v3880
        %v4400 = vunpack.c.l.b16 %v3881
        %v4401 = vunpack.c.l.b16 %v3882
        %v4402 = vunpack.c.l.b16 %v3883
        %v4403 = vunpack.c.l.b16 %v3884
        %v4404 = vunpack.c.l.b16 %v3885
        %v4405 = vunpack.c.l.b16 %v3886
        %v4406 = vunpack.c.l.b16 %v3887
        %v4407 = vunpack.c.l.b16 %v3888
        %v4408 = vunpack.c.l.b16 %v3889
        %v4409 = vunpack.c.l.b16 %v3890
        %v4410 = vunpack.c.l.b16 %v3891
        %v4411 = vunpack.c.l.b16 %v3892
        %v4412 = vunpack.c.l.b16 %v3893
        %v4413 = vunpack.c.l.b16 %v3894
        %v4414 = vunpack.c.l.b16 %v3895
        %v4415 = vunpack.c.l.b16 %v3896
        %v4416 = vunpack.c.l.b16 %v3897
        %v4417 = vunpack.c.l.b16 %v3898
        %v4418 = vunpack.c.l.b16 %v3899
        %v4419 = vunpack.c.l.b16 %v3900
        %v4420 = vunpack.c.l.b16 %v3901
        %v4421 = vunpack.c.l.b16 %v3902
        %v4422 = vunpack.c.l.b16 %v3903
        %v4423 = vunpack.c.l.b16 %v3904
        %v4424 = vunpack.c.l.b16 %v3905
        %v4425 = vunpack.c.l.b16 %v3906
        %v4426 = vunpack.c.l.b16 %v3907
        %v4427 = vunpack.c.l.b16 %v3908
        %v4428 = vunpack.c.l.b16 %v3909
        %v4429 = vunpack.c.l.b16 %v3910
        %v4430 = vunpack.c.l.b16 %v3911
        %v4431 = vunpack.c.l.b16 %v3912
        %v4432 = vunpack.c.l.b16 %v3913
        %v4433 = vunpack.c.l.b16 %v3914
        %v4434 = vunpack.c.l.b16 %v3915
        %v4435 = vunpack.c.l.b16 %v3916
        %v4436 = vunpack.c.l.b16 %v3917
        %v4437 = vunpack.c.l.b16 %v3918
        %v4438 = vunpack.c.l.b16 %v3919
        %v4439 = vunpack.c.l.b16 %v3920
        %v4440 = vunpack.c.l.b16 %v3921
        %v4441 = vunpack.c.l.b16 %v3922
        %v4442 = vunpack.c.l.b16 %v3923
        %v4443 = vunpack.c.l.b16 %v3924
        %v4444 = vunpack.c.l.b16 %v3925
        %v4445 = vunpack.c.l.b16 %v3926
        %v4446 = vunpack.c.l.b16 %v3927
        %v4447 = vunpack.c.l.b16 %v3928
        %v4448 = vunpack.c.l.b16 %v3929
        %v4449 = vunpack.c.l.b16 %v3930
        %v4450 = vunpack.c.l.b16 %v3931
        %v4451 = vunpack.c.l.b16 %v3932
        %v4452 = vunpack.c.l.b16 %v3933
        %v4453 = vunpack.c.l.b16 %v3934
        %v4454 = vunpack.c.l.b16 %v3935
        %v4455 = vunpack.c.l.b16 %v3936
        %v4456 = vunpack.c.l.b16 %v3937
        %v4457 = vunpack.c.l.b16 %v3938
        %v4458 = vunpack.c.l.b16 %v3939
        %v4459 = vunpack.c.l.b16 %v3940
        %v4460 = vunpack.c.l.b16 %v3941
        %v4461 = vunpack.c.l.b16 %v3942
        %v4462 = vunpack.c.l.b16 %v3943
        %v4463 = vunpack.c.l.b16 %v3944
        %v4464 = vunpack.c.l.b16 %v3945
        %v4465 = vunpack.c.l.b16 %v3946
        %v4466 = vunpack.c.l.b16 %v3947
        %v4467 = vunpack.c.l.b16 %v3948
        %v4468 = vunpack.c.l.b16 %v3949
        %v4469 = vunpack.c.l.b16 %v3950
        %v4470 = vunpack.c.l.b16 %v3951
        %v4471 = vunpack.c.l.b16 %v3952
        %v4472 = vunpack.c.l.b16 %v3953
        %v4473 = vunpack.c.l.b16 %v3954
        %v4474 = vunpack.c.l.b16 %v3955
        %v4475 = vunpack.c.l.b16 %v3956
        %v4476 = vunpack.c.l.b16 %v3957
        %v4477 = vunpack.c.l.b16 %v3958
        %v4478 = vunpack.c.l.b16 %v3959
        %v4479 = vunpack.c.l.b16 %v3960
        %v4480 = vunpack.c.l.b16 %v3961
        %v4481 = vunpack.c.l.b16 %v3962
        %v4482 = vunpack.c.l.b16 %v3963
        %v4483 = vunpack.c.l.b16 %v3964
        %v4484 = vunpack.c.l.b16 %v3965
        %v4485 = vunpack.c.l.b16 %v3966
        %v4486 = vunpack.c.l.b16 %v3967
        %v4487 = vunpack.c.l.b16 %v3968
        %v4488 = vunpack.c.l.b16 %v3969
        %v4489 = vunpack.c.l.b16 %v3970
        %v4490 = vunpack.c.l.b16 %v3971
        %v4491 = vunpack.c.l.b16 %v3972
        %v4492 = vunpack.c.l.b16 %v3973
        %v4493 = vunpack.c.l.b16 %v3974
        %v4494 = vunpack.c.l.b16 %v3975
        %v4495 = vunpack.c.l.b16 %v3976
        %v4496 = vunpack.c.l.b16 %v3977
        %v4497 = vunpack.c.l.b16 %v3978
        %v4498 = vunpack.c.l.b16 %v3979
        %v4499 = vunpack.c.l.b16 %v3980
        %v4500 = vunpack.c.l.b16 %v3981
        %v4501 = vunpack.c.l.b16 %v3982
        %v4502 = vunpack.c.l.b16 %v3983
        %v4503 = vunpack.c.l.b16 %v3984
        %v4504 = vunpack.c.l.b16 %v3985
        %v4505 = vunpack.c.l.b16 %v3986
        %v4506 = vunpack.c.l.b16 %v3987
        %v4507 = vunpack.c.l.b16 %v3988
        %v4508 = vunpack.c.l.b16 %v3989
        %v4509 = vunpack.c.l.b16 %v3990
        %v4510 = vunpack.c.l.b16 %v3991
        %v4511 = vunpack.c.l.b16 %v3992
        %v4512 = vunpack.c.l.b16 %v3993
        %v4513 = vunpack.c.l.b16 %v3994
        %v4514 = vunpack.c.l.b16 %v3995
        %v4515 = vunpack.c.l.b16 %v3996
        %v4516 = vunpack.c.l.b16 %v3997
        %v4517 = vunpack.c.l.b16 %v3998
        %v4518 = vunpack.c.l.b16 %v3999
        %v4519 = vunpack.c.l.b16 %v4000
        %v4520 = vunpack.c.l.b16 %v4001
        %v4521 = vunpack.c.l.b16 %v4002
        %v4522 = vunpack.c.l.b16 %v4003
        %v4523 = vunpack.c.l.b16 %v4004
        %v4524 = vunpack.c.l.b16 %v4005
        %v4525 = vunpack.c.l.b16 %v4006
        %v4526 = vunpack.c.l.b16 %v4007
        %v4527 = vunpack.c.l.b16 %v4008
        %v4528 = vunpack.c.l.b16 %v4009
        %v4529 = vunpack.c.l.b16 %v4010
        %v4530 = vunpack.c.l.b16 %v4011
        %v4531 = vunpack.c.l.b16 %v4012
        %v4532 = vunpack.c.l.b16 %v4013
        %v4533 = vunpack.c.l.b16 %v4014
        %v4534 = vunpack.c.l.b16 %v4015
        %v4535 = vunpack.c.l.b16 %v4016
        %v4536 = vunpack.c.l.b16 %v4017
        %v4537 = vunpack.c.l.b16 %v4018
        %v4538 = vunpack.c.l.b16 %v4019
        %v4539 = vunpack.c.l.b16 %v4020
        %v4540 = vunpack.c.l.b16 %v4021
        %v4541 = vunpack.c.l.b16 %v4022
        %v4542 = vunpack.c.l.b16 %v4023
        %v4543 = vunpack.c.l.b16 %v4024
        %v4544 = vunpack.c.l.b16 %v4025
        %v4545 = vunpack.c.l.b16 %v4026
        %v4546 = vunpack.c.l.b16 %v4027
        %v4547 = vunpack.c.l.b16 %v4028
        %v4548 = vunpack.c.l.b16 %v4029
        %v4549 = vunpack.c.l.b16 %v4030
        %v4550 = vpack.c.b16 %v4295, %v4294
        %v4551 = vpack.c.b16 %v4297, %v4296
        %v4552 = vpack.c.b16 %v4299, %v4298
        %v4553 = vpack.c.b16 %v4301, %v4300
        %v4554 = vpack.c.b16 %v4303, %v4302
        %v4555 = vpack.c.b16 %v4305, %v4304
        %v4556 = vpack.c.b16 %v4307, %v4306
        %v4557 = vpack.c.b16 %v4309, %v4308
        %v4558 = vpack.c.b16 %v4311, %v4310
        %v4559 = vpack.c.b16 %v4313, %v4312
        %v4560 = vpack.c.b16 %v4315, %v4314
        %v4561 = vpack.c.b16 %v4317, %v4316
        %v4562 = vpack.c.b16 %v4319, %v4318
        %v4563 = vpack.c.b16 %v4321, %v4320
        %v4564 = vpack.c.b16 %v4323, %v4322
        %v4565 = vpack.c.b16 %v4325, %v4324
        %v4566 = vpack.c.b16 %v4327, %v4326
        %v4567 = vpack.c.b16 %v4329, %v4328
        %v4568 = vpack.c.b16 %v4331, %v4330
        %v4569 = vpack.c.b16 %v4333, %v4332
        %v4570 = vpack.c.b16 %v4335, %v4334
        %v4571 = vpack.c.b16 %v4337, %v4336
        %v4572 = vpack.c.b16 %v4339, %v4338
        %v4573 = vpack.c.b16 %v4341, %v4340
        %v4574 = vpack.c.b16 %v4343, %v4342
        %v4575 = vpack.c.b16 %v4345, %v4344
        %v4576 = vpack.c.b16 %v4347, %v4346
        %v4577 = vpack.c.b16 %v4349, %v4348
        %v4578 = vpack.c.b16 %v4351, %v4350
        %v4579 = vpack.c.b16 %v4353, %v4352
        %v4580 = vpack.c.b16 %v4355, %v4354
        %v4581 = vpack.c.b16 %v4357, %v4356
        %v4582 = vpack.c.b16 %v4359, %v4358
        %v4583 = vpack.c.b16 %v4361, %v4360
        %v4584 = vpack.c.b16 %v4363, %v4362
        %v4585 = vpack.c.b16 %v4365, %v4364
        %v4586 = vpack.c.b16 %v4367, %v4366
        %v4587 = vpack.c.b16 %v4369, %v4368
        %v4588 = vpack.c.b16 %v4371, %v4370
        %v4589 = vpack.c.b16 %v4373, %v4372
        %v4590 = vpack.c.b16 %v4375, %v4374
        %v4591 = vpack.c.b16 %v4377, %v4376
        %v4592 = vpack.c.b16 %v4379, %v4378
        %v4593 = vpack.c.b16 %v4381, %v4380
        %v4594 = vpack.c.b16 %v4383, %v4382
        %v4595 = vpack.c.b16 %v4385, %v4384
        %v4596 = vpack.c.b16 %v4387, %v4386
        %v4597 = vpack.c.b16 %v4389, %v4388
        %v4598 = vpack.c.b16 %v4391, %v4390
        %v4599 = vpack.c.b16 %v4393, %v4392
        %v4600 = vpack.c.b16 %v4395, %v4394
        %v4601 = vpack.c.b16 %v4397, %v4396
        %v4602 = vpack.c.b16 %v4399, %v4398
        %v4603 = vpack.c.b16 %v4401, %v4400
        %v4604 = vpack.c.b16 %v4403, %v4402
        %v4605 = vpack.c.b16 %v4405, %v4404
        %v4606 = vpack.c.b16 %v4407, %v4406
        %v4607 = vpack.c.b16 %v4409, %v4408
        %v4608 = vpack.c.b16 %v4411, %v4410
        %v4609 = vpack.c.b16 %v4413, %v4412
        %v4610 = vpack.c.b16 %v4415, %v4414
        %v4611 = vpack.c.b16 %v4417, %v4416
        %v4612 = vpack.c.b16 %v4419, %v4418
        %v4613 = vpack.c.b16 %v4421, %v4420
        %v4614 = vpack.c.b16 %v4423, %v4422
        %v4615 = vpack.c.b16 %v4425, %v4424
        %v4616 = vpack.c.b16 %v4427, %v4426
        %v4617 = vpack.c.b16 %v4429, %v4428
        %v4618 = vpack.c.b16 %v4431, %v4430
        %v4619 = vpack.c.b16 %v4433, %v4432
        %v4620 = vpack.c.b16 %v4435, %v4434
        %v4621 = vpack.c.b16 %v4437, %v4436
        %v4622 = vpack.c.b16 %v4439, %v4438
        %v4623 = vpack.c.b16 %v4441, %v4440
        %v4624 = vpack.c.b16 %v4443, %v4442
        %v4625 = vpack.c.b16 %v4445, %v4444
        %v4626 = vpack.c.b16 %v4447, %v4446
        %v4627 = vpack.c.b16 %v4449, %v4448
        %v4628 = vpack.c.b16 %v4451, %v4450
        %v4629 = vpack.c.b16 %v4453, %v4452
        %v4630 = vpack.c.b16 %v4455, %v4454
        %v4631 = vpack.c.b16 %v4457, %v4456
        %v4632 = vpack.c.b16 %v4459, %v4458
        %v4633 = vpack.c.b16 %v4461, %v4460
        %v4634 = vpack.c.b16 %v4463, %v4462
        %v4635 = vpack.c.b16 %v4465, %v4464
        %v4636 = vpack.c.b16 %v4467, %v4466
        %v4637 = vpack.c.b16 %v4469, %v4468
        %v4638 = vpack.c.b16 %v4471, %v4470
        %v4639 = vpack.c.b16 %v4473, %v4472
        %v4640 = vpack.c.b16 %v4475, %v4474
        %v4641 = vpack.c.b16 %v4477, %v4476
        %v4642 = vpack.c.b16 %v4479, %v4478
        %v4643 = vpack.c.b16 %v4481, %v4480
        %v4644 = vpack.c.b16 %v4483, %v4482
        %v4645 = vpack.c.b16 %v4485, %v4484
        %v4646 = vpack.c.b16 %v4487, %v4486
        %v4647 = vpack.c.b16 %v4489, %v4488
        %v4648 = vpack.c.b16 %v4491, %v4490
        %v4649 = vpack.c.b16 %v4493, %v4492
        %v4650 = vpack.c.b16 %v4495, %v4494
        %v4651 = vpack.c.b16 %v4497, %v4496
        %v4652 = vpack.c.b16 %v4499, %v4498
        %v4653 = vpack.c.b16 %v4501, %v4500
        %v4654 = vpack.c.b16 %v4503, %v4502
        %v4655 = vpack.c.b16 %v4505, %v4504
        %v4656 = vpack.c.b16 %v4507, %v4506
        %v4657 = vpack.c.b16 %v4509, %v4508
        %v4658 = vpack.c.b16 %v4511, %v4510
        %v4659 = vpack.c.b16 %v4513, %v4512
        %v4660 = vpack.c.b16 %v4515, %v4514
        %v4661 = vpack.c.b16 %v4517, %v4516
        %v4662 = vpack.c.b16 %v4519, %v4518
        %v4663 = vpack.c.b16 %v4521, %v4520
        %v4664 = vpack.c.b16 %v4523, %v4522
        %v4665 = vpack.c.b16 %v4525, %v4524
        %v4666 = vpack.c.b16 %v4527, %v4526
        %v4667 = vpack.c.b16 %v4529, %v4528
        %v4668 = vpack.c.b16 %v4531, %v4530
        %v4669 = vpack.c.b16 %v4533, %v4532
        %v4670 = vpack.c.b16 %v4535, %v4534
        %v4671 = vpack.c.b16 %v4537, %v4536
        %v4672 = vpack.c.b16 %v4539, %v4538
        %v4673 = vpack.c.b16 %v4541, %v4540
        %v4674 = vpack.c.b16 %v4543, %v4542
        %v4675 = vpack.c.b16 %v4545, %v4544
        %v4676 = vpack.c.b16 %v4547, %v4546
        %v4677 = vpack.c.b16 %v4549, %v4548
        %4806 = vmatprep.subr.bf16.mxu0 0
        %4807 = vmatpush1.bf16.msra.mxu0 %v4550
        %4808 = vmatprep.subr.bf16.mxu0 0
        %4809 = vmatpush1.bf16.msra.mxu0 %v4551
        %4810 = vmatprep.subr.bf16.mxu0 0
        %4811 = vmatpush1.bf16.msra.mxu0 %v4552
        %4812 = vmatprep.subr.bf16.mxu0 0
        %4813 = vmatpush1.bf16.msra.mxu0 %v4553
        %4814 = vmatprep.subr.bf16.mxu0 0
        %4815 = vmatpush1.bf16.msra.mxu0 %v4554
        %4816 = vmatprep.subr.bf16.mxu0 0
        %4817 = vmatpush1.bf16.msra.mxu0 %v4555
        %4818 = vmatprep.subr.bf16.mxu0 0
        %4819 = vmatpush1.bf16.msra.mxu0 %v4556
        %4820 = vmatprep.subr.bf16.mxu0 0
        %4821 = vmatpush1.bf16.msra.mxu0 %v4557
        %4822 = vmatprep.subr.bf16.mxu0 0
        %4823 = vmatpush1.bf16.msra.mxu0 %v4558
        %4824 = vmatprep.subr.bf16.mxu0 0
        %4825 = vmatpush1.bf16.msra.mxu0 %v4559
        %4826 = vmatprep.subr.bf16.mxu0 0
        %4827 = vmatpush1.bf16.msra.mxu0 %v4560
        %4828 = vmatprep.subr.bf16.mxu0 0
        %4829 = vmatpush1.bf16.msra.mxu0 %v4561
        %4830 = vmatprep.subr.bf16.mxu0 0
        %4831 = vmatpush1.bf16.msra.mxu0 %v4562
        %4832 = vmatprep.subr.bf16.mxu0 0
        %4833 = vmatpush1.bf16.msra.mxu0 %v4563
        %4834 = vmatprep.subr.bf16.mxu0 0
        %4835 = vmatpush1.bf16.msra.mxu0 %v4564
        %4836 = vmatprep.subr.bf16.mxu0 0
        %4837 = vmatpush1.bf16.msra.mxu0 %v4565
        %4838 = vmatprep.mubr.bf16.mxu0 %v3760
        %4839 = vmatmul.mubr.bf16.gmra.mrb[0].mxu0 %v3759
        %v4840 = vpop.f32.mrb[0].mxu0
        %v4841 = vadd.f32 %v4036, %v4840
        %v4842 = vpop.f32.mrb[0].mxu0
        %v4843 = vpop.f32.mrb[0].mxu0
        %v4844 = vpop.f32.mrb[0].mxu0
        %4845 = vdwg.mxu0
        %4846 = vmatprep.subr.bf16.mxu0 0
        %4847 = vmatpush1.bf16.msra.mxu0 %v4566
        %4848 = vmatprep.subr.bf16.mxu0 0
        %4849 = vmatpush1.bf16.msra.mxu0 %v4567
        %4850 = vmatprep.subr.bf16.mxu0 0
        %4851 = vmatpush1.bf16.msra.mxu0 %v4568
        %4852 = vmatprep.subr.bf16.mxu0 0
        %4853 = vmatpush1.bf16.msra.mxu0 %v4569
        %4854 = vmatprep.subr.bf16.mxu0 0
        %4855 = vmatpush1.bf16.msra.mxu0 %v4570
        %4856 = vmatprep.subr.bf16.mxu0 0
        %4857 = vmatpush1.bf16.msra.mxu0 %v4571
        %4858 = vmatprep.subr.bf16.mxu0 0
        %4859 = vmatpush1.bf16.msra.mxu0 %v4572
        %4860 = vmatprep.subr.bf16.mxu0 0
        %4861 = vmatpush1.bf16.msra.mxu0 %v4573
        %4862 = vmatprep.subr.bf16.mxu0 0
        %4863 = vmatpush1.bf16.msra.mxu0 %v4574
        %4864 = vmatprep.subr.bf16.mxu0 0
        %4865 = vmatpush1.bf16.msra.mxu0 %v4575
        %4866 = vmatprep.subr.bf16.mxu0 0
        %4867 = vmatpush1.bf16.msra.mxu0 %v4576
        %4868 = vmatprep.subr.bf16.mxu0 0
        %4869 = vmatpush1.bf16.msra.mxu0 %v4577
        %4870 = vmatprep.subr.bf16.mxu0 0
        %4871 = vmatpush1.bf16.msra.mxu0 %v4578
        %4872 = vmatprep.subr.bf16.mxu0 0
        %4873 = vmatpush1.bf16.msra.mxu0 %v4579
        %4874 = vmatprep.subr.bf16.mxu0 0
        %4875 = vmatpush1.bf16.msra.mxu0 %v4580
        %4876 = vmatprep.subr.bf16.mxu0 0
        %4877 = vmatpush1.bf16.msra.mxu0 %v4581
        %4878 = vmatprep.mubr.bf16.mxu0 %v3762
        %4879 = vmatmul.mubr.bf16.gmra.mrb[0].mxu0 %v3761
        %v4880 = vpop.f32.mrb[0].mxu0
        %v4881 = vadd.f32 %v4841, %v4880
        %v4882 = vpop.f32.mrb[0].mxu0
        %v4883 = vpop.f32.mrb[0].mxu0
        %v4884 = vpop.f32.mrb[0].mxu0
        %4885 = vdwg.mxu0
        %4886 = vmatprep.subr.bf16.mxu0 0
        %4887 = vmatpush1.bf16.msra.mxu0 %v4582
        %4888 = vmatprep.subr.bf16.mxu0 0
        %4889 = vmatpush1.bf16.msra.mxu0 %v4583
        %4890 = vmatprep.subr.bf16.mxu0 0
        %4891 = vmatpush1.bf16.msra.mxu0 %v4584
        %4892 = vmatprep.subr.bf16.mxu0 0
        %4893 = vmatpush1.bf16.msra.mxu0 %v4585
        %4894 = vmatprep.subr.bf16.mxu0 0
        %4895 = vmatpush1.bf16.msra.mxu0 %v4586
        %4896 = vmatprep.subr.bf16.mxu0 0
        %4897 = vmatpush1.bf16.msra.mxu0 %v4587
        %4898 = vmatprep.subr.bf16.mxu0 0
        %4899 = vmatpush1.bf16.msra.mxu0 %v4588
        %4900 = vmatprep.subr.bf16.mxu0 0
        %4901 = vmatpush1.bf16.msra.mxu0 %v4589
        %4902 = vmatprep.subr.bf16.mxu0 0
        %4903 = vmatpush1.bf16.msra.mxu0 %v4590
        %4904 = vmatprep.subr.bf16.mxu0 0
        %4905 = vmatpush1.bf16.msra.mxu0 %v4591
        %4906 = vmatprep.subr.bf16.mxu0 0
        %4907 = vmatpush1.bf16.msra.mxu0 %v4592
        %4908 = vmatprep.subr.bf16.mxu0 0
        %4909 = vmatpush1.bf16.msra.mxu0 %v4593
        %4910 = vmatprep.subr.bf16.mxu0 0
        %4911 = vmatpush1.bf16.msra.mxu0 %v4594
        %4912 = vmatprep.subr.bf16.mxu0 0
        %4913 = vmatpush1.bf16.msra.mxu0 %v4595
        %4914 = vmatprep.subr.bf16.mxu0 0
        %4915 = vmatpush1.bf16.msra.mxu0 %v4596
        %4916 = vmatprep.subr.bf16.mxu0 0
        %4917 = vmatpush1.bf16.msra.mxu0 %v4597
        %4918 = vmatprep.mubr.bf16.mxu0 %v3764
        %4919 = vmatmul.mubr.bf16.gmra.mrb[0].mxu0 %v3763
        %v4920 = vpop.f32.mrb[0].mxu0
        %v4921 = vadd.f32 %v4881, %v4920
        %v4922 = vpop.f32.mrb[0].mxu0
        %v4923 = vpop.f32.mrb[0].mxu0
        %v4924 = vpop.f32.mrb[0].mxu0
        %4925 = vdwg.mxu0
        %4926 = vmatprep.subr.bf16.mxu0 0
        %4927 = vmatpush1.bf16.msra.mxu0 %v4598
        %4928 = vmatprep.subr.bf16.mxu0 0
        %4929 = vmatpush1.bf16.msra.mxu0 %v4599
        %4930 = vmatprep.subr.bf16.mxu0 0
        %4931 = vmatpush1.bf16.msra.mxu0 %v4600
        %4932 = vmatprep.subr.bf16.mxu0 0
        %4933 = vmatpush1.bf16.msra.mxu0 %v4601
        %4934 = vmatprep.subr.bf16.mxu0 0
        %4935 = vmatpush1.bf16.msra.mxu0 %v4602
        %4936 = vmatprep.subr.bf16.mxu0 0
        %4937 = vmatpush1.bf16.msra.mxu0 %v4603
        %4938 = vmatprep.subr.bf16.mxu0 0
        %4939 = vmatpush1.bf16.msra.mxu0 %v4604
        %4940 = vmatprep.subr.bf16.mxu0 0
        %4941 = vmatpush1.bf16.msra.mxu0 %v4605
        %4942 = vmatprep.subr.bf16.mxu0 0
        %4943 = vmatpush1.bf16.msra.mxu0 %v4606
        %4944 = vmatprep.subr.bf16.mxu0 0
        %4945 = vmatpush1.bf16.msra.mxu0 %v4607
        %4946 = vmatprep.subr.bf16.mxu0 0
        %4947 = vmatpush1.bf16.msra.mxu0 %v4608
        %4948 = vmatprep.subr.bf16.mxu0 0
        %4949 = vmatpush1.bf16.msra.mxu0 %v4609
        %4950 = vmatprep.subr.bf16.mxu0 0
        %4951 = vmatpush1.bf16.msra.mxu0 %v4610
        %4952 = vmatprep.subr.bf16.mxu0 0
        %4953 = vmatpush1.bf16.msra.mxu0 %v4611
        %4954 = vmatprep.subr.bf16.mxu0 0
        %4955 = vmatpush1.bf16.msra.mxu0 %v4612
        %4956 = vmatprep.subr.bf16.mxu0 0
        %4957 = vmatpush1.bf16.msra.mxu0 %v4613
        %4958 = vmatprep.mubr.bf16.mxu0 %v3766
        %4959 = vmatmul.mubr.bf16.gmra.mrb[0].mxu0 %v3765
        %v4960 = vpop.f32.mrb[0].mxu0
        %v4961 = vadd.f32 %v4921, %v4960
        %v4962 = vpop.f32.mrb[0].mxu0
        %v4963 = vpop.f32.mrb[0].mxu0
        %v4964 = vpop.f32.mrb[0].mxu0
        %4965 = vdwg.mxu0
        %4966 = vmatprep.subr.bf16.mxu0 0
        %4967 = vmatpush1.bf16.msra.mxu0 %v4614
        %4968 = vmatprep.subr.bf16.mxu0 0
        %4969 = vmatpush1.bf16.msra.mxu0 %v4615
        %4970 = vmatprep.subr.bf16.mxu0 0
        %4971 = vmatpush1.bf16.msra.mxu0 %v4616
        %4972 = vmatprep.subr.bf16.mxu0 0
        %4973 = vmatpush1.bf16.msra.mxu0 %v4617
        %4974 = vmatprep.subr.bf16.mxu0 0
        %4975 = vmatpush1.bf16.msra.mxu0 %v4618
        %4976 = vmatprep.subr.bf16.mxu0 0
        %4977 = vmatpush1.bf16.msra.mxu0 %v4619
        %4978 = vmatprep.subr.bf16.mxu0 0
        %4979 = vmatpush1.bf16.msra.mxu0 %v4620
        %4980 = vmatprep.subr.bf16.mxu0 0
        %4981 = vmatpush1.bf16.msra.mxu0 %v4621
        %4982 = vmatprep.subr.bf16.mxu0 0
        %4983 = vmatpush1.bf16.msra.mxu0 %v4622
        %4984 = vmatprep.subr.bf16.mxu0 0
        %4985 = vmatpush1.bf16.msra.mxu0 %v4623
        %4986 = vmatprep.subr.bf16.mxu0 0
        %4987 = vmatpush1.bf16.msra.mxu0 %v4624
        %4988 = vmatprep.subr.bf16.mxu0 0
        %4989 = vmatpush1.bf16.msra.mxu0 %v4625
        %4990 = vmatprep.subr.bf16.mxu0 0
        %4991 = vmatpush1.bf16.msra.mxu0 %v4626
        %4992 = vmatprep.subr.bf16.mxu0 0
        %4993 = vmatpush1.bf16.msra.mxu0 %v4627
        %4994 = vmatprep.subr.bf16.mxu0 0
        %4995 = vmatpush1.bf16.msra.mxu0 %v4628
        %4996 = vmatprep.subr.bf16.mxu0 0
        %4997 = vmatpush1.bf16.msra.mxu0 %v4629
        %4998 = vmatprep.mubr.bf16.mxu0 %v3768
        %4999 = vmatmul.mubr.bf16.gmra.mrb[0].mxu0 %v3767
        %v5000 = vpop.f32.mrb[0].mxu0
        %v5001 = vadd.f32 %v4961, %v5000
        %v5002 = vpop.f32.mrb[0].mxu0
        %v5003 = vpop.f32.mrb[0].mxu0
        %v5004 = vpop.f32.mrb[0].mxu0
        %5005 = vdwg.mxu0
        %5006 = vmatprep.subr.bf16.mxu0 0
        %5007 = vmatpush1.bf16.msra.mxu0 %v4630
        %5008 = vmatprep.subr.bf16.mxu0 0
        %5009 = vmatpush1.bf16.msra.mxu0 %v4631
        %5010 = vmatprep.subr.bf16.mxu0 0
        %5011 = vmatpush1.bf16.msra.mxu0 %v4632
        %5012 = vmatprep.subr.bf16.mxu0 0
        %5013 = vmatpush1.bf16.msra.mxu0 %v4633
        %5014 = vmatprep.subr.bf16.mxu0 0
        %5015 = vmatpush1.bf16.msra.mxu0 %v4634
        %5016 = vmatprep.subr.bf16.mxu0 0
        %5017 = vmatpush1.bf16.msra.mxu0 %v4635
        %5018 = vmatprep.subr.bf16.mxu0 0
        %5019 = vmatpush1.bf16.msra.mxu0 %v4636
        %5020 = vmatprep.subr.bf16.mxu0 0
        %5021 = vmatpush1.bf16.msra.mxu0 %v4637
        %5022 = vmatprep.subr.bf16.mxu0 0
        %5023 = vmatpush1.bf16.msra.mxu0 %v4638
        %5024 = vmatprep.subr.bf16.mxu0 0
        %5025 = vmatpush1.bf16.msra.mxu0 %v4639
        %5026 = vmatprep.subr.bf16.mxu0 0
        %5027 = vmatpush1.bf16.msra.mxu0 %v4640
        %5028 = vmatprep.subr.bf16.mxu0 0
        %5029 = vmatpush1.bf16.msra.mxu0 %v4641
        %5030 = vmatprep.subr.bf16.mxu0 0
        %5031 = vmatpush1.bf16.msra.mxu0 %v4642
        %5032 = vmatprep.subr.bf16.mxu0 0
        %5033 = vmatpush1.bf16.msra.mxu0 %v4643
        %5034 = vmatprep.subr.bf16.mxu0 0
        %5035 = vmatpush1.bf16.msra.mxu0 %v4644
        %5036 = vmatprep.subr.bf16.mxu0 0
        %5037 = vmatpush1.bf16.msra.mxu0 %v4645
        %5038 = vmatprep.mubr.bf16.mxu0 %v3770
        %5039 = vmatmul.mubr.bf16.gmra.mrb[0].mxu0 %v3769
        %v5040 = vpop.f32.mrb[0].mxu0
        %v5041 = vadd.f32 %v5001, %v5040
        %v5042 = vpop.f32.mrb[0].mxu0
        %v5043 = vpop.f32.mrb[0].mxu0
        %v5044 = vpop.f32.mrb[0].mxu0
        %5045 = vdwg.mxu0
        %5046 = vmatprep.subr.bf16.mxu0 0
        %5047 = vmatpush1.bf16.msra.mxu0 %v4646
        %5048 = vmatprep.subr.bf16.mxu0 0
        %5049 = vmatpush1.bf16.msra.mxu0 %v4647
        %5050 = vmatprep.subr.bf16.mxu0 0
        %5051 = vmatpush1.bf16.msra.mxu0 %v4648
        %5052 = vmatprep.subr.bf16.mxu0 0
        %5053 = vmatpush1.bf16.msra.mxu0 %v4649
        %5054 = vmatprep.subr.bf16.mxu0 0
        %5055 = vmatpush1.bf16.msra.mxu0 %v4650
        %5056 = vmatprep.subr.bf16.mxu0 0
        %5057 = vmatpush1.bf16.msra.mxu0 %v4651
        %5058 = vmatprep.subr.bf16.mxu0 0
        %5059 = vmatpush1.bf16.msra.mxu0 %v4652
        %5060 = vmatprep.subr.bf16.mxu0 0
        %5061 = vmatpush1.bf16.msra.mxu0 %v4653
        %5062 = vmatprep.subr.bf16.mxu0 0
        %5063 = vmatpush1.bf16.msra.mxu0 %v4654
        %5064 = vmatprep.subr.bf16.mxu0 0
        %5065 = vmatpush1.bf16.msra.mxu0 %v4655
        %5066 = vmatprep.subr.bf16.mxu0 0
        %5067 = vmatpush1.bf16.msra.mxu0 %v4656
        %5068 = vmatprep.subr.bf16.mxu0 0
        %5069 = vmatpush1.bf16.msra.mxu0 %v4657
        %5070 = vmatprep.subr.bf16.mxu0 0
        %5071 = vmatpush1.bf16.msra.mxu0 %v4658
        %5072 = vmatprep.subr.bf16.mxu0 0
        %5073 = vmatpush1.bf16.msra.mxu0 %v4659
        %5074 = vmatprep.subr.bf16.mxu0 0
        %5075 = vmatpush1.bf16.msra.mxu0 %v4660
        %5076 = vmatprep.subr.bf16.mxu0 0
        %5077 = vmatpush1.bf16.msra.mxu0 %v4661
        %5078 = vmatprep.mubr.bf16.mxu0 %v3772
        %5079 = vmatmul.mubr.bf16.gmra.mrb[0].mxu0 %v3771
        %v5080 = vpop.f32.mrb[0].mxu0
        %v5081 = vadd.f32 %v5041, %v5080
        %v5082 = vpop.f32.mrb[0].mxu0
        %v5083 = vpop.f32.mrb[0].mxu0
        %v5084 = vpop.f32.mrb[0].mxu0
        %5085 = vdwg.mxu0
        %5086 = vmatprep.subr.bf16.mxu0 0
        %5087 = vmatpush1.bf16.msra.mxu0 %v4662
        %5088 = vmatprep.subr.bf16.mxu0 0
        %5089 = vmatpush1.bf16.msra.mxu0 %v4663
        %5090 = vmatprep.subr.bf16.mxu0 0
        %5091 = vmatpush1.bf16.msra.mxu0 %v4664
        %5092 = vmatprep.subr.bf16.mxu0 0
        %5093 = vmatpush1.bf16.msra.mxu0 %v4665
        %5094 = vmatprep.subr.bf16.mxu0 0
        %5095 = vmatpush1.bf16.msra.mxu0 %v4666
        %5096 = vmatprep.subr.bf16.mxu0 0
        %5097 = vmatpush1.bf16.msra.mxu0 %v4667
        %5098 = vmatprep.subr.bf16.mxu0 0
        %5099 = vmatpush1.bf16.msra.mxu0 %v4668
        %5100 = vmatprep.subr.bf16.mxu0 0
        %5101 = vmatpush1.bf16.msra.mxu0 %v4669
        %5102 = vmatprep.subr.bf16.mxu0 0
        %5103 = vmatpush1.bf16.msra.mxu0 %v4670
        %5104 = vmatprep.subr.bf16.mxu0 0
        %5105 = vmatpush1.bf16.msra.mxu0 %v4671
        %5106 = vmatprep.subr.bf16.mxu0 0
        %5107 = vmatpush1.bf16.msra.mxu0 %v4672
        %5108 = vmatprep.subr.bf16.mxu0 0
        %5109 = vmatpush1.bf16.msra.mxu0 %v4673
        %5110 = vmatprep.subr.bf16.mxu0 0
        %5111 = vmatpush1.bf16.msra.mxu0 %v4674
        %5112 = vmatprep.subr.bf16.mxu0 0
        %5113 = vmatpush1.bf16.msra.mxu0 %v4675
        %5114 = vmatprep.subr.bf16.mxu0 0
        %5115 = vmatpush1.bf16.msra.mxu0 %v4676
        %5116 = vmatprep.subr.bf16.mxu0 0
        %5117 = vmatpush1.bf16.msra.mxu0 %v4677
        %5118 = vmatprep.mubr.bf16.mxu0 %v3774
        %5119 = vmatmul.mubr.bf16.gmra.mrb[0].mxu0 %v3773
        %v5120 = vpop.f32.mrb[0].mxu0
        %v5121 = vadd.f32 %v5081, %v5120
        %v5122 = vpop.f32.mrb[0].mxu0
        %v5123 = vpop.f32.mrb[0].mxu0
        %v5124 = vpop.f32.mrb[0].mxu0
        %5125 = vdwg.mxu0
        %v5126 = vadd.f32 %v3098, %v5121
        %5127 = vst.msk [vmem:[%s404] sm:$0xff] %vm413, %v5126
        %s5128 = sand.u32 %s291, 1
        %s5129 = scalar_lea.sflag [#allocation3], %s5128
        %s5130 = sand.u32 %s291, 1
        %s5131 = smul.addr %s5130, 8
        %s5132 = scalar_lea.vmem [#allocation2], %s5131
        // Predicated region
        $region69: #{tpu_custom_call.1} parent=67 // pred_check
          %p5133 = pneg %p301
        $region70: #{tpu_custom_call.1} parent=67 // pred_check_branch
          %5135 = sbr.rel (%p5133) target = $region72
        $region71: #{tpu_custom_call.1} parent=67 // pred_region
          %s5137 = ssub.s32 128, 128
          %5138 = vsyncadd %s5129, %s5137
          %s5139 = smul.addr %s26, 128
          %s5140 = scalar_lea.hbm %s12, %s5139
          %s5142 = sshll.u32 %s5132, 4
          %s5143 = int_to_ptr.vmem [resolvable:$true] %s5142
          %5145 = dma.vmem_to_hbm [thread:$0]  %s5143, 128, %s5140, %s5129
        $region72: #{tpu_custom_call.1} parent=67 // pred_fallthru
          _
      $region68: #{tpu_custom_call.1} parent=5 // pred_fallthru
        _
      %p5146 = scmp.le.s32.totalorder 2, %s21
      // Predicated region
      $region73: #{tpu_custom_call.1} parent=5 // pred_check
        %p5147 = pneg %p5146
      $region74: #{tpu_custom_call.1} parent=5 // pred_check_branch
        %5149 = sbr.rel (%p5147) target = $region76
      $region75: #{tpu_custom_call.1} parent=5 // pred_region
        %s5150 = ssub.s32 %s21, 2
        // Predicated region
        $region77: #{tpu_custom_call.1} parent=75 // pred_check
          %p5151 = pneg %p307
        $region78: #{tpu_custom_call.1} parent=75 // pred_check_branch
          %5153 = sbr.rel (%p5151) target = $region80
        $region79: #{tpu_custom_call.1} parent=75 // pred_region
          %s5154 = sand.u32 %s292, 1
          %s5155 = scalar_lea.sflag [#allocation3], %s5154
          %s5156 = sand.u32 %s292, 1
          %s5157 = smul.addr %s5156, 8
          %s5158 = scalar_lea.vmem [#allocation2], %s5157
          %5159 = dma.done %s5155, 128
        $region80: #{tpu_custom_call.1} parent=75 // pred_fallthru
          _
      $region76: #{tpu_custom_call.1} parent=5 // pred_fallthru
        _
    $region6: #{tpu_custom_call.1} parent=1 // loop_footer
      %s25 = sadd.s32 1, %s21
    $region7: #{tpu_custom_call.1} parent=1 // loop_footer_branch
      %20 = sbr.rel target = $region3
    $region8: #{tpu_custom_call.1} parent=1 // loop_exit
      _
    %5160 = vsyncpa [#allocation3], 1
    %s5161 = scalar_lea.sflag [#allocation3], 1
    %5162 = vsyncpa %s5161, 1

</llo_original>
